<compile_context>
chip_gen: v6e
topology: v6e:2x2x1
jax: 0.10.0
libtpu: 0.0.40
codegen_flags: <defaults>
</compile_context>

<pallas_src>
import functools

import jax
import jax.numpy as jnp
from jax.experimental import pallas as pl
from jax.experimental.pallas import tpu as pltpu


_L1_FOLD = 8  # output pixels folded per GEMM row for the lane-dense l1 store


# ------------------------------ Pallas kernels ------------------------------ #
def _gemm_bias_act_kernel(x_ref, w_ref, b_ref, o_ref, *, relu):
    """(tm, K) x (K, tn) GEMM block, bias (+ optional ReLU) fused."""
    acc = jnp.dot(x_ref[...], w_ref[...], preferred_element_type=jnp.float32)
    acc = acc + b_ref[...]
    if relu:
        acc = jnp.maximum(acc, 0.0)
    o_ref[...] = acc.astype(o_ref.dtype)


def _gemm_bias_bn_lrelu_kernel(x_ref, w_ref, b_ref, g_ref, bt_ref, o_ref, *,
                               eps, slope):
    """GEMM + bias + BatchNorm2d (training-mode batch stats, biased variance,
    affine gamma/beta) + LeakyReLU(slope), all fused in the epilogue.

    The caller guarantees tm == full M (every output pixel of the layer lives
    in this one block), so the per-channel statistics over axis 0 are exact.
    Only the channel axis may be split across the grid (stats are per-channel).
    """
    acc = jnp.dot(x_ref[...], w_ref[...], preferred_element_type=jnp.float32)
    acc = acc + b_ref[...]
    mean = jnp.mean(acc, axis=0, keepdims=True)
    var = jnp.mean((acc - mean) ** 2, axis=0, keepdims=True)
    acc = (acc - mean) * jax.lax.rsqrt(var + eps) * g_ref[...] + bt_ref[...]
    acc = jnp.where(acc >= 0, acc, slope * acc)
    o_ref[...] = acc.astype(o_ref.dtype)


def gemm_fused(x, w, b, *, epilogue, gamma=None, beta=None,
               out_dtype=jnp.float32, eps=1e-5, slope=0.01, num_cores=1):
    """x:(M,K) bf16, w:(K,N) bf16, b/gamma/beta:(1,N) f32 -> (M,N) out_dtype.

    Operands are bf16 (MXU-native on v5e/v6e/v7x); accumulation and all
    epilogue math stay in f32.  On single-TC chips (v5e/v6e) the grid is a
    single block (no per-step overhead); on dual-TC v7x a 2-way "parallel"
    split is used: rows for stat-free epilogues, output channels for BN.
    """
    M, K = x.shape
    K2, N = w.shape
    assert K == K2 and b.shape == (1, N)

    if epilogue == "bn_lrelu":
        tm = M                                   # BN stats need all rows resident
        tn = N // 2 if (num_cores > 1 and N % 256 == 0) else N
    else:
        tn = N
        tm = M // 2 if (num_cores > 1 and M % 16 == 0 and M >= 16) else M
    # Keep the BN invariant explicit: never row-split a BN layer.
    assert epilogue != "bn_lrelu" or tm == M

    x_spec = pl.BlockSpec((tm, K), lambda i, j: (i, 0))
    w_spec = pl.BlockSpec((K, tn), lambda i, j: (0, j))
    v_spec = pl.BlockSpec((1, tn), lambda i, j: (0, j))
    out_spec = pl.BlockSpec((tm, tn), lambda i, j: (i, j))

    if epilogue == "bn_lrelu":
        kernel = functools.partial(_gemm_bias_bn_lrelu_kernel, eps=eps, slope=slope)
        in_specs = [x_spec, w_spec, v_spec, v_spec, v_spec]
        operands = (x, w, b, gamma, beta)
    else:
        kernel = functools.partial(_gemm_bias_act_kernel, relu=(epilogue == "relu"))
        in_specs = [x_spec, w_spec, v_spec]
        operands = (x, w, b)

    return pl.pallas_call(
        kernel,
        out_shape=jax.ShapeDtypeStruct((M, N), out_dtype),
        grid=(M // tm, N // tn),
        in_specs=in_specs,
        out_specs=out_spec,
        compiler_params=pltpu.CompilerParams(
            dimension_semantics=("parallel", "parallel"),
            # Live set is <3 MiB even double-buffered; 32 MiB leaves plenty of
            # headroom on v7x's 64 MiB physical VMEM and is fine on v5e/v6e.
            vmem_limit_bytes=32 * 1024 * 1024,
        ),
    )(*operands)


# ------------------------------- XLA glue ----------------------------------- #
def extract_patches_nhwc(x, ksize, stride, pad):
    """x: (N, H, W, C) NHWC -> (N*OH*OW, ksize*ksize*C) patch matrix
    (tap-major, channel-minor), plus OH, OW.  Pure data reshuffling, kept in
    XLA and done in bf16 so the patch matrix costs half the HBM bytes."""
    N, H, W, C = x.shape
    xp = jnp.pad(x, ((0, 0), (pad, pad), (pad, pad), (0, 0)))
    OH = (H + 2 * pad - ksize) // stride + 1
    OW = (W + 2 * pad - ksize) // stride + 1
    taps = [
        xp[:, i:i + stride * OH:stride, j:j + stride * OW:stride, :]
        for i in range(ksize) for j in range(ksize)
    ]
    cols = jnp.stack(taps, axis=3)                  # (N, OH, OW, k*k, C)
    return cols.reshape(N * OH * OW, ksize * ksize * C), OH, OW


def conv_w_to_gemm(w):
    """PyTorch conv weight (OC, IC, KH, KW) -> (KH*KW*IC, OC), matching the
    tap-major / channel-minor ordering of extract_patches_nhwc."""
    OC = w.shape[0]
    return jnp.transpose(w, (2, 3, 1, 0)).reshape(-1, OC)


def detect_num_tensorcores():
    """Best effort: v7x has 2 TensorCores per chip (grid 'parallel' axes shard
    across them); v5e/v6e have 1, where any split is just a serial loop."""
    try:
        kind = jax.devices()[0].device_kind.lower()
    except Exception:
        return 1
    return 2 if "v7" in kind else 1


def init_params(key, latent_dim, channels, img_size):
    keys = jax.random.split(key, 12)
    fc_out = channels * img_size ** 2
    return {
        # nn.Linear(latent_dim, channels*img_size**2), stored as (in, out)
        "fc_w": jax.random.normal(keys[0], (latent_dim, fc_out), jnp.float32) * 0.05,
        "fc_b": jax.random.normal(keys[1], (fc_out,), jnp.float32) * 0.05,
        # nn.Conv2d(channels*2, 64, 3, 1, 1)
        "l1_w": jax.random.normal(keys[2], (64, channels * 2, 3, 3), jnp.float32) * 0.05,
        "l1_b": jax.random.normal(keys[3], (64,), jnp.float32) * 0.05,
        # ResidualBlock conv1: nn.Conv2d(64, 256, 3, 2, 0) + BatchNorm2d(256)
        "rb_w1": jax.random.normal(keys[4], (256, 64, 3, 3), jnp.float32) * 0.02,
        "rb_b1": jax.random.normal(keys[5], (256,), jnp.float32) * 0.02,
        "rb_g1": 1.0 + 0.1 * jax.random.normal(keys[6], (256,), jnp.float32),
        "rb_be1": 0.1 * jax.random.normal(keys[7], (256,), jnp.float32),
        # ResidualBlock conv2: nn.Conv2d(256, 512, 3, 2, 1) + BatchNorm2d(512)
        "rb_w2": jax.random.normal(keys[8], (512, 256, 3, 3), jnp.float32) * 0.01,
        "rb_b2": jax.random.normal(keys[9], (512,), jnp.float32) * 0.01,
        "rb_g2": 1.0 + 0.1 * jax.random.normal(keys[10], (512,), jnp.float32),
        "rb_be2": 0.1 * jax.random.normal(keys[11], (512,), jnp.float32),
    }


def prepare_params(raw, l1_fold=_L1_FOLD):
    """One-time (outside the hot path) conversion of PyTorch-layout params to
    GEMM-ready form: bf16 (K,N) weights, f32 (1,N) biases / gamma / beta, and
    the block-diagonal l1 weight that gives the lane-dense l1 output tile."""
    w_l1 = conv_w_to_gemm(raw["l1_w"]).astype(jnp.float32)      # (9*2C, 64)
    KL, OC = w_l1.shape
    w_l1_bd = jnp.zeros((l1_fold * KL, l1_fold * OC), jnp.float32)
    for t in range(l1_fold):
        w_l1_bd = w_l1_bd.at[t * KL:(t + 1) * KL, t * OC:(t + 1) * OC].set(w_l1)
    return {
        "fc_w": raw["fc_w"].astype(jnp.bfloat16),
        "fc_b": raw["fc_b"].astype(jnp.float32).reshape(1, -1),
        "l1_w": w_l1_bd.astype(jnp.bfloat16),                   # (fold*9*2C, fold*64)
        "l1_b": jnp.tile(raw["l1_b"].astype(jnp.float32), l1_fold).reshape(1, -1),
        "rb_w1": conv_w_to_gemm(raw["rb_w1"]).astype(jnp.bfloat16),
        "rb_b1": raw["rb_b1"].astype(jnp.float32).reshape(1, -1),
        "rb_g1": raw["rb_g1"].astype(jnp.float32).reshape(1, -1),
        "rb_be1": raw["rb_be1"].astype(jnp.float32).reshape(1, -1),
        "rb_w2": conv_w_to_gemm(raw["rb_w2"]).astype(jnp.bfloat16),
        "rb_b2": raw["rb_b2"].astype(jnp.float32).reshape(1, -1),
        "rb_g2": raw["rb_g2"].astype(jnp.float32).reshape(1, -1),
        "rb_be2": raw["rb_be2"].astype(jnp.float32).reshape(1, -1),
    }


def target_encode_generator_forward(gp, img, z, *, num_cores=1):
    Nb, C, H, W = img.shape

    # fc: tiny (batch x latent) @ (latent x C*H*W) — plain XLA dot, bf16
    # operands / f32 accumulation; not worth a pallas launch.
    fc = jnp.dot(z.astype(jnp.bfloat16), gp["fc_w"],
                 preferred_element_type=jnp.float32) + gp["fc_b"]
    fc_img = fc.reshape(Nb, C, H, W)                 # PyTorch .view semantics

    # gen_input = cat([img, fc(z).view(img.shape)], 1), kept NHWC + bf16.
    gen_input = jnp.concatenate(
        [img.transpose(0, 2, 3, 1), fc_img.transpose(0, 2, 3, 1)], axis=-1
    ).astype(jnp.bfloat16)

    # l1: Conv2d(2C, 64, 3, 1, 1) + ReLU (bias + ReLU fused into the GEMM).
    # Lane-dense store: fold groups of 8 output pixels into one GEMM row
    # against the block-diagonal weight, so the kernel's output tile is
    # (M/8, 512) (unmasked vst) instead of (M, 64) (masked).  The reshapes
    # below are wrapper-side layout plumbing only.
    cols, OH, OW = extract_patches_nhwc(gen_input, 3, 1, 1)
    M, K = cols.shape
    assert M % _L1_FOLD == 0
    cols_f = cols.reshape(M // _L1_FOLD, _L1_FOLD * K)
    y = gemm_fused(cols_f, gp["l1_w"], gp["l1_b"], epilogue="relu",
                   out_dtype=jnp.float32, num_cores=num_cores)
    out_nhwc = y.reshape(Nb, OH, OW, 64)             # module output `out` (f32)

    # resblock conv1: Conv2d(64, 256, 3, 2, 0) + BN + LeakyReLU (all fused).
    # Output is a pure intermediate -> emit bf16 straight from the kernel.
    cols, OH1, OW1 = extract_patches_nhwc(out_nhwc.astype(jnp.bfloat16), 3, 2, 0)
    h = gemm_fused(cols, gp["rb_w1"], gp["rb_b1"], epilogue="bn_lrelu",
                   gamma=gp["rb_g1"], beta=gp["rb_be1"],
                   out_dtype=jnp.bfloat16, num_cores=num_cores)
    h_nhwc = h.reshape(Nb, OH1, OW1, 256)

    # resblock conv2: Conv2d(256, 512, 3, 2, 1) + BN + LeakyReLU (all fused).
    cols, OH2, OW2 = extract_patches_nhwc(h_nhwc, 3, 2, 1)
    enc = gemm_fused(cols, gp["rb_w2"], gp["rb_b2"], epilogue="bn_lrelu",
                     gamma=gp["rb_g2"], beta=gp["rb_be2"],
                     out_dtype=jnp.float32, num_cores=num_cores)
    enc_nhwc = enc.reshape(Nb, OH2, OW2, 512)

    # Module boundary stays NCHW like the PyTorch module.  (If the caller
    # accepted NHWC these two transposes could be dropped.)
    return out_nhwc.transpose(0, 3, 1, 2), enc_nhwc.transpose(0, 3, 1, 2)


# ----------------------- pure-JAX reference (for check) --------------------- #
def reference_forward(params, img, z):
    """lax.conv reference using the same bf16-operand / f32-accum policy."""
    def conv(x, w, b, stride, pad):
        y = jax.lax.conv_general_dilated(
            x.astype(jnp.bfloat16), w.astype(jnp.bfloat16),
            window_strides=(stride, stride),
            padding=[(pad, pad), (pad, pad)],
            dimension_numbers=("NCHW", "OIHW", "NCHW"),
            preferred_element_type=jnp.float32)
        return y + b.reshape(1, -1, 1, 1)

    def bn_lrelu(x, g, bt, eps=1e-5, slope=0.01):
        mean = jnp.mean(x, axis=(0, 2, 3), keepdims=True)
        var = jnp.mean((x - mean) ** 2, axis=(0, 2, 3), keepdims=True)
        xn = (x - mean) * jax.lax.rsqrt(var + eps)
        xn = xn * g.reshape(1, -1, 1, 1) + bt.reshape(1, -1, 1, 1)
        return jnp.where(xn >= 0, xn, slope * xn)

    N, C, H, W = img.shape
    fc = jnp.dot(z.astype(jnp.bfloat16), params["fc_w"].astype(jnp.bfloat16),
                 preferred_element_type=jnp.float32) + params["fc_b"]
    gen_input = jnp.concatenate([img, fc.reshape(N, C, H, W)], axis=1)
    out = jnp.maximum(conv(gen_input, params["l1_w"], params["l1_b"], 1, 1), 0.0)
    h = bn_lrelu(conv(out, params["rb_w1"], params["rb_b1"], 2, 0),
                 params["rb_g1"], params["rb_be1"])
    enc = bn_lrelu(conv(h, params["rb_w2"], params["rb_b2"], 2, 1),
                   params["rb_g2"], params["rb_be2"])
    return out, enc


if __name__ == "__main__":
    LATENT_DIM, CHANNELS, IMG_SIZE, BATCH = 8, 1, 16, 2

    key = jax.random.PRNGKey(0)
    k_img, k_z, k_param = jax.random.split(key, 3)
    img = jax.random.normal(k_img, (BATCH, CHANNELS, IMG_SIZE, IMG_SIZE), jnp.float32)
    z = jax.random.normal(k_z, (BATCH, LATENT_DIM), jnp.float32)

    raw_params = init_params(k_param, LATENT_DIM, CHANNELS, IMG_SIZE)
    gemm_params = prepare_params(raw_params)        # one-time weight prep (hoisted)
    num_cores = detect_num_tensorcores()

    fwd = jax.jit(functools.partial(target_encode_generator_forward, gemm_params,
                                    num_cores=num_cores))
    x, encode_out = fwd(img, z)
    jax.block_until_ready((x, encode_out))

    assert x.shape == (BATCH, 64, IMG_SIZE, IMG_SIZE), x.shape
    assert encode_out.shape == (BATCH, 512, 4, 4), encode_out.shape

    # Numerical check against a pure-JAX reference that uses the same
    # bf16-operand / f32-accumulation policy (isolates Pallas-kernel error).
    x_ref, enc_ref = jax.jit(functools.partial(reference_forward, raw_params))(img, z)
    err_out = float(jnp.max(jnp.abs(x - x_ref)))
    err_enc = float(jnp.max(jnp.abs(encode_out - enc_ref)))
    assert err_out < 5e-2 and err_enc < 5e-2, (err_out, err_enc)

    print("KERNEL_OK")
</pallas_src>

<mosaic_0001>
module attributes {stable_mosaic.version = 11 : i64} {
  func.func @_gemm_bias_act_kernel(%arg0: i32, %arg1: i32, %arg2: memref<64x144xbf16, #tpu.memory_space<vmem>>, %arg3: memref<144x512xbf16, #tpu.memory_space<vmem>>, %arg4: memref<1x512xf32, #tpu.memory_space<vmem>>, %arg5: memref<64x512xf32, #tpu.memory_space<vmem>>) attributes {dimension_semantics = [#tpu.dimension_semantics<parallel>, #tpu.dimension_semantics<parallel>], iteration_bounds = array<i64: 1, 1>, scalar_prefetch = 0 : i64, scratch_operands = 0 : i64, tpu.core_type = #tpu.core_type<tc>, window_params = [{transform_indices = @transform_0, window_bounds = array<i64: 64, 144>}, {transform_indices = @transform_1, window_bounds = array<i64: 144, 512>}, {transform_indices = @transform_2, window_bounds = array<i64: 1, 512>}, {transform_indices = @transform_3, window_bounds = array<i64: 64, 512>}]} {
    %c0 = arith.constant 0 : index
    %c0_0 = arith.constant 0 : index
    %0 = vector.load %arg2[%c0, %c0_0] : memref<64x144xbf16, #tpu.memory_space<vmem>>, vector<64x144xbf16>
    %c0_1 = arith.constant 0 : index
    %c0_2 = arith.constant 0 : index
    %1 = vector.load %arg3[%c0_1, %c0_2] : memref<144x512xbf16, #tpu.memory_space<vmem>>, vector<144x512xbf16>
    %cst = arith.constant dense<0.000000e+00> : vector<64x512xf32>
    %2 = tpu.matmul %0, %1, %cst {dimension_numbers = #tpu.dot_dimension_numbers<[1], [0], [0], [1], [0, 0, 1, 1], [], []>} : vector<64x144xbf16>, vector<144x512xbf16>, vector<64x512xf32> -> vector<64x512xf32>
    %c0_3 = arith.constant 0 : index
    %c0_4 = arith.constant 0 : index
    %3 = vector.load %arg4[%c0_3, %c0_4] : memref<1x512xf32, #tpu.memory_space<vmem>>, vector<1x512xf32>
    %4 = vector.broadcast %3 : vector<1x512xf32> to vector<64x512xf32>
    %5 = arith.addf %2, %4 : vector<64x512xf32>
    %cst_5 = arith.constant 0.000000e+00 : f32
    %6 = vector.broadcast %cst_5 : f32 to vector<64x512xf32>
    %7 = arith.maximumf %5, %6 : vector<64x512xf32>
    %c0_6 = arith.constant 0 : index
    %c0_7 = arith.constant 0 : index
    %8 = vector.load %arg5[%c0_6, %c0_7] : memref<64x512xf32, #tpu.memory_space<vmem>>, vector<64x512xf32>
    tpu.vector_store %arg5[%c0_6, %c0_7], %7 {strides = array<i32>} : memref<64x512xf32, #tpu.memory_space<vmem>>, vector<64x512xf32>,
    return
  }
  func.func @transform_0(%arg0: i32, %arg1: i32) -> (i32, i32) {
    %c0_i32 = arith.constant 0 : i32
    %c0_i32_0 = arith.constant 0 : i32
    return %arg0, %c0_i32 : i32, i32
  }
  func.func @transform_1(%arg0: i32, %arg1: i32) -> (i32, i32) {
    %c0_i32 = arith.constant 0 : i32
    %c0_i32_0 = arith.constant 0 : i32
    return %c0_i32, %arg1 : i32, i32
  }
  func.func @transform_2(%arg0: i32, %arg1: i32) -> (i32, i32) {
    %c0_i32 = arith.constant 0 : i32
    %c0_i32_0 = arith.constant 0 : i32
    return %c0_i32, %arg1 : i32, i32
  }
  func.func @transform_3(%arg0: i32, %arg1: i32) -> (i32, i32) {
    %c0_i32 = arith.constant 0 : i32
    return %arg0, %arg1 : i32, i32
  }
}

module attributes {stable_mosaic.version = 11 : i64} {
  func.func @_gemm_bias_bn_lrelu_kernel(%arg0: i32, %arg1: i32, %arg2: memref<98x576xbf16, #tpu.memory_space<vmem>>, %arg3: memref<576x256xbf16, #tpu.memory_space<vmem>>, %arg4: memref<1x256xf32, #tpu.memory_space<vmem>>, %arg5: memref<1x256xf32, #tpu.memory_space<vmem>>, %arg6: memref<1x256xf32, #tpu.memory_space<vmem>>, %arg7: memref<98x256xbf16, #tpu.memory_space<vmem>>) attributes {dimension_semantics = [#tpu.dimension_semantics<parallel>, #tpu.dimension_semantics<parallel>], iteration_bounds = array<i64: 1, 1>, scalar_prefetch = 0 : i64, scratch_operands = 0 : i64, tpu.core_type = #tpu.core_type<tc>, window_params = [{transform_indices = @transform_0, window_bounds = array<i64: 98, 576>}, {transform_indices = @transform_1, window_bounds = array<i64: 576, 256>}, {transform_indices = @transform_2, window_bounds = array<i64: 1, 256>}, {transform_indices = @transform_3, window_bounds = array<i64: 1, 256>}, {transform_indices = @transform_4, window_bounds = array<i64: 1, 256>}, {transform_indices = @transform_5, window_bounds = array<i64: 98, 256>}]} {
    %c0 = arith.constant 0 : index
    %c0_0 = arith.constant 0 : index
    %0 = vector.load %arg2[%c0, %c0_0] : memref<98x576xbf16, #tpu.memory_space<vmem>>, vector<98x576xbf16>
    %c0_1 = arith.constant 0 : index
    %c0_2 = arith.constant 0 : index
    %1 = vector.load %arg3[%c0_1, %c0_2] : memref<576x256xbf16, #tpu.memory_space<vmem>>, vector<576x256xbf16>
    %cst = arith.constant dense<0.000000e+00> : vector<98x256xf32>
    %2 = tpu.matmul %0, %1, %cst {dimension_numbers = #tpu.dot_dimension_numbers<[1], [0], [0], [1], [0, 0, 1, 1], [], []>} : vector<98x576xbf16>, vector<576x256xbf16>, vector<98x256xf32> -> vector<98x256xf32>
    %c0_3 = arith.constant 0 : index
    %c0_4 = arith.constant 0 : index
    %3 = vector.load %arg4[%c0_3, %c0_4] : memref<1x256xf32, #tpu.memory_space<vmem>>, vector<1x256xf32>
    %4 = vector.broadcast %3 : vector<1x256xf32> to vector<98x256xf32>
    %5 = arith.addf %2, %4 : vector<98x256xf32>
    %cst_5 = arith.constant dense<0.000000e+00> : vector<256xf32>
    %6 = vector.multi_reduction <add>, %5, %cst_5 [0] : vector<98x256xf32> to vector<256xf32>
    %7 = vector.shape_cast %6 : vector<256xf32> to vector<1x256xf32>
    %cst_6 = arith.constant 9.800000e+01 : f32
    %8 = vector.broadcast %cst_6 : f32 to vector<1x256xf32>
    %9 = arith.divf %7, %8 : vector<1x256xf32>
    %10 = vector.broadcast %9 : vector<1x256xf32> to vector<98x256xf32>
    %11 = arith.subf %5, %10 : vector<98x256xf32>
    %12 = arith.mulf %11, %11 : vector<98x256xf32>
    %cst_7 = arith.constant dense<0.000000e+00> : vector<256xf32>
    %13 = vector.multi_reduction <add>, %12, %cst_7 [0] : vector<98x256xf32> to vector<256xf32>
    %14 = vector.shape_cast %13 : vector<256xf32> to vector<1x256xf32>
    %cst_8 = arith.constant 9.800000e+01 : f32
    %15 = vector.broadcast %cst_8 : f32 to vector<1x256xf32>
    %16 = arith.divf %14, %15 : vector<1x256xf32>
    %17 = vector.broadcast %9 : vector<1x256xf32> to vector<98x256xf32>
    %18 = arith.subf %5, %17 : vector<98x256xf32>
    %cst_9 = arith.constant 9.99999974E-6 : f32
    %19 = vector.broadcast %cst_9 : f32 to vector<1x256xf32>
    %20 = arith.addf %16, %19 : vector<1x256xf32>
    %21 = math.rsqrt %20 : vector<1x256xf32>
    %22 = vector.broadcast %21 : vector<1x256xf32> to vector<98x256xf32>
    %23 = arith.mulf %18, %22 : vector<98x256xf32>
    %c0_10 = arith.constant 0 : index
    %c0_11 = arith.constant 0 : index
    %24 = vector.load %arg5[%c0_10, %c0_11] : memref<1x256xf32, #tpu.memory_space<vmem>>, vector<1x256xf32>
    %25 = vector.broadcast %24 : vector<1x256xf32> to vector<98x256xf32>
    %26 = arith.mulf %23, %25 : vector<98x256xf32>
    %c0_12 = arith.constant 0 : index
    %c0_13 = arith.constant 0 : index
    %27 = vector.load %arg6[%c0_12, %c0_13] : memref<1x256xf32, #tpu.memory_space<vmem>>, vector<1x256xf32>
    %28 = vector.broadcast %27 : vector<1x256xf32> to vector<98x256xf32>
    %29 = arith.addf %26, %28 : vector<98x256xf32>
    %cst_14 = arith.constant 0.000000e+00 : f32
    %30 = vector.broadcast %cst_14 : f32 to vector<98x256xf32>
    %31 = arith.cmpf oge, %29, %30 : vector<98x256xf32>
    %cst_15 = arith.constant 0.00999999977 : f32
    %32 = vector.broadcast %cst_15 : f32 to vector<98x256xf32>
    %33 = arith.mulf %32, %29 : vector<98x256xf32>
    %34 = arith.select %31, %29, %33 : vector<98x256xi1>, vector<98x256xf32>
    %35 = arith.truncf %34 : vector<98x256xf32> to vector<98x256xbf16>
    %c0_16 = arith.constant 0 : index
    %c0_17 = arith.constant 0 : index
    %36 = vector.load %arg7[%c0_16, %c0_17] : memref<98x256xbf16, #tpu.memory_space<vmem>>, vector<98x256xbf16>
    tpu.vector_store %arg7[%c0_16, %c0_17], %35 {strides = array<i32>} : memref<98x256xbf16, #tpu.memory_space<vmem>>, vector<98x256xbf16>,
    return
  }
  func.func @transform_0(%arg0: i32, %arg1: i32) -> (i32, i32) {
    %c0_i32 = arith.constant 0 : i32
    %c0_i32_0 = arith.constant 0 : i32
    return %arg0, %c0_i32 : i32, i32
  }
  func.func @transform_1(%arg0: i32, %arg1: i32) -> (i32, i32) {
    %c0_i32 = arith.constant 0 : i32
    %c0_i32_0 = arith.constant 0 : i32
    return %c0_i32, %arg1 : i32, i32
  }
  func.func @transform_2(%arg0: i32, %arg1: i32) -> (i32, i32) {
    %c0_i32 = arith.constant 0 : i32
    %c0_i32_0 = arith.constant 0 : i32
    return %c0_i32, %arg1 : i32, i32
  }
  func.func @transform_3(%arg0: i32, %arg1: i32) -> (i32, i32) {
    %c0_i32 = arith.constant 0 : i32
    %c0_i32_0 = arith.constant 0 : i32
    return %c0_i32, %arg1 : i32, i32
  }
  func.func @transform_4(%arg0: i32, %arg1: i32) -> (i32, i32) {
    %c0_i32 = arith.constant 0 : i32
    %c0_i32_0 = arith.constant 0 : i32
    return %c0_i32, %arg1 : i32, i32
  }
  func.func @transform_5(%arg0: i32, %arg1: i32) -> (i32, i32) {
    %c0_i32 = arith.constant 0 : i32
    return %arg0, %arg1 : i32, i32
  }
}

module attributes {stable_mosaic.version = 11 : i64} {
  func.func @_gemm_bias_bn_lrelu_kernel(%arg0: i32, %arg1: i32, %arg2: memref<32x2304xbf16, #tpu.memory_space<vmem>>, %arg3: memref<2304x512xbf16, #tpu.memory_space<vmem>>, %arg4: memref<1x512xf32, #tpu.memory_space<vmem>>, %arg5: memref<1x512xf32, #tpu.memory_space<vmem>>, %arg6: memref<1x512xf32, #tpu.memory_space<vmem>>, %arg7: memref<32x512xf32, #tpu.memory_space<vmem>>) attributes {dimension_semantics = [#tpu.dimension_semantics<parallel>, #tpu.dimension_semantics<parallel>], iteration_bounds = array<i64: 1, 1>, scalar_prefetch = 0 : i64, scratch_operands = 0 : i64, tpu.core_type = #tpu.core_type<tc>, window_params = [{transform_indices = @transform_0, window_bounds = array<i64: 32, 2304>}, {transform_indices = @transform_1, window_bounds = array<i64: 2304, 512>}, {transform_indices = @transform_2, window_bounds = array<i64: 1, 512>}, {transform_indices = @transform_3, window_bounds = array<i64: 1, 512>}, {transform_indices = @transform_4, window_bounds = array<i64: 1, 512>}, {transform_indices = @transform_5, window_bounds = array<i64: 32, 512>}]} {
    %c0 = arith.constant 0 : index
    %c0_0 = arith.constant 0 : index
    %0 = vector.load %arg2[%c0, %c0_0] : memref<32x2304xbf16, #tpu.memory_space<vmem>>, vector<32x2304xbf16>
    %c0_1 = arith.constant 0 : index
    %c0_2 = arith.constant 0 : index
    %1 = vector.load %arg3[%c0_1, %c0_2] : memref<2304x512xbf16, #tpu.memory_space<vmem>>, vector<2304x512xbf16>
    %cst = arith.constant dense<0.000000e+00> : vector<32x512xf32>
    %2 = tpu.matmul %0, %1, %cst {dimension_numbers = #tpu.dot_dimension_numbers<[1], [0], [0], [1], [0, 0, 1, 1], [], []>} : vector<32x2304xbf16>, vector<2304x512xbf16>, vector<32x512xf32> -> vector<32x512xf32>
    %c0_3 = arith.constant 0 : index
    %c0_4 = arith.constant 0 : index
    %3 = vector.load %arg4[%c0_3, %c0_4] : memref<1x512xf32, #tpu.memory_space<vmem>>, vector<1x512xf32>
    %4 = vector.broadcast %3 : vector<1x512xf32> to vector<32x512xf32>
    %5 = arith.addf %2, %4 : vector<32x512xf32>
    %cst_5 = arith.constant dense<0.000000e+00> : vector<512xf32>
    %6 = vector.multi_reduction <add>, %5, %cst_5 [0] : vector<32x512xf32> to vector<512xf32>
    %7 = vector.shape_cast %6 : vector<512xf32> to vector<1x512xf32>
    %cst_6 = arith.constant 3.200000e+01 : f32
    %8 = vector.broadcast %cst_6 : f32 to vector<1x512xf32>
    %9 = arith.divf %7, %8 : vector<1x512xf32>
    %10 = vector.broadcast %9 : vector<1x512xf32> to vector<32x512xf32>
    %11 = arith.subf %5, %10 : vector<32x512xf32>
    %12 = arith.mulf %11, %11 : vector<32x512xf32>
    %cst_7 = arith.constant dense<0.000000e+00> : vector<512xf32>
    %13 = vector.multi_reduction <add>, %12, %cst_7 [0] : vector<32x512xf32> to vector<512xf32>
    %14 = vector.shape_cast %13 : vector<512xf32> to vector<1x512xf32>
    %cst_8 = arith.constant 3.200000e+01 : f32
    %15 = vector.broadcast %cst_8 : f32 to vector<1x512xf32>
    %16 = arith.divf %14, %15 : vector<1x512xf32>
    %17 = vector.broadcast %9 : vector<1x512xf32> to vector<32x512xf32>
    %18 = arith.subf %5, %17 : vector<32x512xf32>
    %cst_9 = arith.constant 9.99999974E-6 : f32
    %19 = vector.broadcast %cst_9 : f32 to vector<1x512xf32>
    %20 = arith.addf %16, %19 : vector<1x512xf32>
    %21 = math.rsqrt %20 : vector<1x512xf32>
    %22 = vector.broadcast %21 : vector<1x512xf32> to vector<32x512xf32>
    %23 = arith.mulf %18, %22 : vector<32x512xf32>
    %c0_10 = arith.constant 0 : index
    %c0_11 = arith.constant 0 : index
    %24 = vector.load %arg5[%c0_10, %c0_11] : memref<1x512xf32, #tpu.memory_space<vmem>>, vector<1x512xf32>
    %25 = vector.broadcast %24 : vector<1x512xf32> to vector<32x512xf32>
    %26 = arith.mulf %23, %25 : vector<32x512xf32>
    %c0_12 = arith.constant 0 : index
    %c0_13 = arith.constant 0 : index
    %27 = vector.load %arg6[%c0_12, %c0_13] : memref<1x512xf32, #tpu.memory_space<vmem>>, vector<1x512xf32>
    %28 = vector.broadcast %27 : vector<1x512xf32> to vector<32x512xf32>
    %29 = arith.addf %26, %28 : vector<32x512xf32>
    %cst_14 = arith.constant 0.000000e+00 : f32
    %30 = vector.broadcast %cst_14 : f32 to vector<32x512xf32>
    %31 = arith.cmpf oge, %29, %30 : vector<32x512xf32>
    %cst_15 = arith.constant 0.00999999977 : f32
    %32 = vector.broadcast %cst_15 : f32 to vector<32x512xf32>
    %33 = arith.mulf %32, %29 : vector<32x512xf32>
    %34 = arith.select %31, %29, %33 : vector<32x512xi1>, vector<32x512xf32>
    %c0_16 = arith.constant 0 : index
    %c0_17 = arith.constant 0 : index
    %35 = vector.load %arg7[%c0_16, %c0_17] : memref<32x512xf32, #tpu.memory_space<vmem>>, vector<32x512xf32>
    tpu.vector_store %arg7[%c0_16, %c0_17], %34 {strides = array<i32>} : memref<32x512xf32, #tpu.memory_space<vmem>>, vector<32x512xf32>,
    return
  }
  func.func @transform_0(%arg0: i32, %arg1: i32) -> (i32, i32) {
    %c0_i32 = arith.constant 0 : i32
    %c0_i32_0 = arith.constant 0 : i32
    return %arg0, %c0_i32 : i32, i32
  }
  func.func @transform_1(%arg0: i32, %arg1: i32) -> (i32, i32) {
    %c0_i32 = arith.constant 0 : i32
    %c0_i32_0 = arith.constant 0 : i32
    return %c0_i32, %arg1 : i32, i32
  }
  func.func @transform_2(%arg0: i32, %arg1: i32) -> (i32, i32) {
    %c0_i32 = arith.constant 0 : i32
    %c0_i32_0 = arith.constant 0 : i32
    return %c0_i32, %arg1 : i32, i32
  }
  func.func @transform_3(%arg0: i32, %arg1: i32) -> (i32, i32) {
    %c0_i32 = arith.constant 0 : i32
    %c0_i32_0 = arith.constant 0 : i32
    return %c0_i32, %arg1 : i32, i32
  }
  func.func @transform_4(%arg0: i32, %arg1: i32) -> (i32, i32) {
    %c0_i32 = arith.constant 0 : i32
    %c0_i32_0 = arith.constant 0 : i32
    return %c0_i32, %arg1 : i32, i32
  }
  func.func @transform_5(%arg0: i32, %arg1: i32) -> (i32, i32) {
    %c0_i32 = arith.constant 0 : i32
    return %arg0, %arg1 : i32, i32
  }
}

</mosaic_0001>

<llo_original>
// kernel: target_encode_generator_forward.3
$region0: #{target_encode_generator_forward.3}
  #allocation0 [shape = 'u32[]', space=smem, size = 0x4, offset = 0x4, fixed_abs, tag = 'smem constant byte address 0x4 - core index']
  #allocation1 [shape = 'u32[144,128]{1,0:T(1,128)}', space=vmem, size = 0x12000, scoped, tag = 'internal scratch']
  %s0 = inlined_call_operand.vmem [shape: bf16[64,144], index: 0, kind: input, shape index: {}]
  %s1 = inlined_call_operand.vmem [shape: bf16[144,512], index: 1, kind: input, shape index: {}]
  %s2 = inlined_call_operand.vmem [shape: f32[1,512], index: 2, kind: input, shape index: {}]
  %s3 = inlined_call_operand.vmem [shape: f32[64,512], index: 3, kind: output, shape index: {}]
  %s4 = sld [smem:[#allocation0]]
  $region22: #{target_encode_generator_forward.3} parent=0
    _
  %s6 = ssub.s32 1, %s4
  %s7 = scalar_select 0, %s6, %s4
  // Predicated region
  $region2: #{target_encode_generator_forward.3} parent=0 // pred_check
    _
  $region3: #{target_encode_generator_forward.3} parent=0 // pred_check_branch
    %9 = sbr.rel (0) target = $region5
  $region4: #{target_encode_generator_forward.3} parent=0 // pred_region
    _
  $region5: #{target_encode_generator_forward.3} parent=0 // pred_fallthru
    _
  // Predicated region
  $region6: #{target_encode_generator_forward.3} parent=0 // pred_check
    _
  $region7: #{target_encode_generator_forward.3} parent=0 // pred_check_branch
    %11 = sbr.rel (0) target = $region9
  $region8: #{target_encode_generator_forward.3} parent=0 // pred_region
    _
  $region9: #{target_encode_generator_forward.3} parent=0 // pred_fallthru
    _
  // Predicated region
  $region10: #{target_encode_generator_forward.3} parent=0 // pred_check
    _
  $region11: #{target_encode_generator_forward.3} parent=0 // pred_check_branch
    %13 = sbr.rel (0) target = $region13
  $region12: #{target_encode_generator_forward.3} parent=0 // pred_region
    _
  $region13: #{target_encode_generator_forward.3} parent=0 // pred_fallthru
    _
  %v15 = vld [vmem:[%s0] sm:$0xff]
  %v16 = vld [vmem:[%s0 + $0x8] sm:$0xff]
  %v17 = vld [vmem:[%s0 + $0x10] sm:$0xff]
  %v18 = vld [vmem:[%s0 + $0x18] sm:$0xff]
  %v19 = vld [vmem:[%s0 + $0x20] sm:$0xff]
  %v20 = vld [vmem:[%s0 + $0x28] sm:$0xff]
  %v21 = vld [vmem:[%s0 + $0x30] sm:$0xff]
  %v22 = vld [vmem:[%s0 + $0x38] sm:$0xff]
  %v23 = vld [vmem:[%s1] sm:$0xff]
  %v24 = vld [vmem:[%s1 + $0x8] sm:$0xff]
  %v25 = vld [vmem:[%s1 + $0x10] sm:$0xff]
  %v26 = vld [vmem:[%s1 + $0x18] sm:$0xff]
  %v27 = vld [vmem:[%s1 + $0x20] sm:$0xff]
  %v28 = vld [vmem:[%s1 + $0x28] sm:$0xff]
  %v29 = vld [vmem:[%s1 + $0x30] sm:$0xff]
  %v30 = vld [vmem:[%s1 + $0x38] sm:$0xff]
  %v31 = vld [vmem:[%s1 + $0x40] sm:$0xff]
  %v32 = vld [vmem:[%s1 + $0x48] sm:$0xff]
  %v33 = vld [vmem:[%s1 + $0x50] sm:$0xff]
  %v34 = vld [vmem:[%s1 + $0x58] sm:$0xff]
  %v35 = vld [vmem:[%s1 + $0x60] sm:$0xff]
  %v36 = vld [vmem:[%s1 + $0x68] sm:$0xff]
  %v37 = vld [vmem:[%s1 + $0x70] sm:$0xff]
  %v38 = vld [vmem:[%s1 + $0x78] sm:$0xff]
  %v39 = vld [vmem:[%s1 + $0x80] sm:$0xff]
  %v40 = vld [vmem:[%s1 + $0x88] sm:$0xff]
  %v41 = vld [vmem:[%s1 + $0x90] sm:$0xff]
  %v42 = vld [vmem:[%s1 + $0x98] sm:$0xff]
  %v43 = vld [vmem:[%s1 + $0xa0] sm:$0xff]
  %v44 = vld [vmem:[%s1 + $0xa8] sm:$0xff]
  %v45 = vld [vmem:[%s1 + $0xb0] sm:$0xff]
  %v46 = vld [vmem:[%s1 + $0xb8] sm:$0xff]
  %v47 = vld [vmem:[%s1 + $0xc0] sm:$0xff]
  %v48 = vld [vmem:[%s1 + $0xc8] sm:$0xff]
  %v49 = vld [vmem:[%s1 + $0xd0] sm:$0xff]
  %v50 = vld [vmem:[%s1 + $0xd8] sm:$0xff]
  %v51 = vld [vmem:[%s1 + $0xe0] sm:$0xff]
  %v52 = vld [vmem:[%s1 + $0xe8] sm:$0xff]
  %v53 = vld [vmem:[%s1 + $0xf0] sm:$0xff]
  %v54 = vld [vmem:[%s1 + $0xf8] sm:$0xff]
  %v55 = vld [vmem:[%s1 + $0x100] sm:$0xff]
  %v56 = vld [vmem:[%s1 + $0x108] sm:$0xff]
  %v57 = vld [vmem:[%s1 + $0x110] sm:$0xff]
  %v58 = vld [vmem:[%s1 + $0x118] sm:$0xff]
  %v59 = vld [vmem:[%s2] sm:$0xf]
  %v61 = vlaneseq
  %v62 = vshrl.u32 %v61, 7
  %v63 = vsub.s32 0, %v62
  %v64 = vrot.slane %v59, %v63
  %v65 = vlaneseq
  %v66 = vshrl.u32 %v65, 7
  %v67 = vsub.s32 1, %v66
  %v68 = vrot.slane %v59, %v67
  %v69 = vlaneseq
  %v70 = vshrl.u32 %v69, 7
  %v71 = vsub.s32 2, %v70
  %v72 = vrot.slane %v59, %v71
  %v73 = vlaneseq
  %v74 = vshrl.u32 %v73, 7
  %v75 = vsub.s32 3, %v74
  %v76 = vrot.slane %v59, %v75
  %v89 = vunpack.c.l.b16 %v15
  %v90 = vunpack.c.h.b16 %v15
  %v91 = vunpack.c.l.b16 %v16
  %v92 = vunpack.c.h.b16 %v16
  %v93 = vunpack.c.l.b16 %v17
  %v94 = vunpack.c.h.b16 %v17
  %v95 = vunpack.c.l.b16 %v18
  %v96 = vunpack.c.h.b16 %v18
  %v97 = vunpack.c.l.b16 %v19
  %v98 = vunpack.c.h.b16 %v19
  %v99 = vunpack.c.l.b16 %v20
  %v100 = vunpack.c.h.b16 %v20
  %v101 = vunpack.c.l.b16 %v21
  %v102 = vunpack.c.h.b16 %v21
  %v103 = vunpack.c.l.b16 %v22
  %v104 = vunpack.c.h.b16 %v22
  %v105 = vpack.c.b16 %v91, %v89
  %v106 = vpack.c.b16 %v92, %v90
  %v107 = vpack.c.b16 %v95, %v93
  %v108 = vpack.c.b16 %v96, %v94
  %v109 = vpack.c.b16 %v99, %v97
  %v110 = vpack.c.b16 %v100, %v98
  %v111 = vpack.c.b16 %v103, %v101
  %v112 = vpack.c.b16 %v104, %v102
  %v153 = vunpack.c.l.b16 %v23
  %v154 = vunpack.c.h.b16 %v23
  %v155 = vunpack.c.l.b16 %v24
  %v156 = vunpack.c.h.b16 %v24
  %v157 = vunpack.c.l.b16 %v25
  %v158 = vunpack.c.h.b16 %v25
  %v159 = vunpack.c.l.b16 %v26
  %v160 = vunpack.c.h.b16 %v26
  %v161 = vunpack.c.l.b16 %v27
  %v162 = vunpack.c.h.b16 %v27
  %v163 = vunpack.c.l.b16 %v28
  %v164 = vunpack.c.h.b16 %v28
  %v165 = vunpack.c.l.b16 %v29
  %v166 = vunpack.c.h.b16 %v29
  %v167 = vunpack.c.l.b16 %v30
  %v168 = vunpack.c.h.b16 %v30
  %v169 = vunpack.c.l.b16 %v31
  %v170 = vunpack.c.h.b16 %v31
  %v171 = vunpack.c.l.b16 %v32
  %v172 = vunpack.c.h.b16 %v32
  %v173 = vunpack.c.l.b16 %v33
  %v174 = vunpack.c.h.b16 %v33
  %v175 = vunpack.c.l.b16 %v34
  %v176 = vunpack.c.h.b16 %v34
  %v177 = vunpack.c.l.b16 %v35
  %v178 = vunpack.c.h.b16 %v35
  %v179 = vunpack.c.l.b16 %v36
  %v180 = vunpack.c.h.b16 %v36
  %v181 = vunpack.c.l.b16 %v37
  %v182 = vunpack.c.h.b16 %v37
  %v183 = vunpack.c.l.b16 %v38
  %v184 = vunpack.c.h.b16 %v38
  %v185 = vunpack.c.l.b16 %v39
  %v186 = vunpack.c.h.b16 %v39
  %v187 = vunpack.c.l.b16 %v40
  %v188 = vunpack.c.h.b16 %v40
  %v189 = vunpack.c.l.b16 %v41
  %v190 = vunpack.c.h.b16 %v41
  %v191 = vunpack.c.l.b16 %v42
  %v192 = vunpack.c.h.b16 %v42
  %v193 = vunpack.c.l.b16 %v43
  %v194 = vunpack.c.h.b16 %v43
  %v195 = vunpack.c.l.b16 %v44
  %v196 = vunpack.c.h.b16 %v44
  %v197 = vunpack.c.l.b16 %v45
  %v198 = vunpack.c.h.b16 %v45
  %v199 = vunpack.c.l.b16 %v46
  %v200 = vunpack.c.h.b16 %v46
  %v201 = vunpack.c.l.b16 %v47
  %v202 = vunpack.c.h.b16 %v47
  %v203 = vunpack.c.l.b16 %v48
  %v204 = vunpack.c.h.b16 %v48
  %v205 = vunpack.c.l.b16 %v49
  %v206 = vunpack.c.h.b16 %v49
  %v207 = vunpack.c.l.b16 %v50
  %v208 = vunpack.c.h.b16 %v50
  %v209 = vunpack.c.l.b16 %v51
  %v210 = vunpack.c.h.b16 %v51
  %v211 = vunpack.c.l.b16 %v52
  %v212 = vunpack.c.h.b16 %v52
  %v213 = vunpack.c.l.b16 %v53
  %v214 = vunpack.c.h.b16 %v53
  %v215 = vunpack.c.l.b16 %v54
  %v216 = vunpack.c.h.b16 %v54
  %v217 = vunpack.c.l.b16 %v55
  %v218 = vunpack.c.h.b16 %v55
  %v219 = vunpack.c.l.b16 %v56
  %v220 = vunpack.c.h.b16 %v56
  %v221 = vunpack.c.l.b16 %v57
  %v222 = vunpack.c.h.b16 %v57
  %v223 = vunpack.c.l.b16 %v58
  %v224 = vunpack.c.h.b16 %v58
  %v225 = vpack.c.b16 %v157, %v153
  %v226 = vpack.c.b16 %v158, %v154
  %v227 = vpack.c.b16 %v159, %v155
  %v228 = vpack.c.b16 %v160, %v156
  %v229 = vpack.c.b16 %v165, %v161
  %v230 = vpack.c.b16 %v166, %v162
  %v231 = vpack.c.b16 %v167, %v163
  %v232 = vpack.c.b16 %v168, %v164
  %v233 = vpack.c.b16 %v173, %v169
  %v234 = vpack.c.b16 %v174, %v170
  %v235 = vpack.c.b16 %v175, %v171
  %v236 = vpack.c.b16 %v176, %v172
  %v237 = vpack.c.b16 %v181, %v177
  %v238 = vpack.c.b16 %v182, %v178
  %v239 = vpack.c.b16 %v183, %v179
  %v240 = vpack.c.b16 %v184, %v180
  %v241 = vpack.c.b16 %v189, %v185
  %v242 = vpack.c.b16 %v190, %v186
  %v243 = vpack.c.b16 %v191, %v187
  %v244 = vpack.c.b16 %v192, %v188
  %v245 = vpack.c.b16 %v197, %v193
  %v246 = vpack.c.b16 %v198, %v194
  %v247 = vpack.c.b16 %v199, %v195
  %v248 = vpack.c.b16 %v200, %v196
  %v249 = vpack.c.b16 %v205, %v201
  %v250 = vpack.c.b16 %v206, %v202
  %v251 = vpack.c.b16 %v207, %v203
  %v252 = vpack.c.b16 %v208, %v204
  %v253 = vpack.c.b16 %v213, %v209
  %v254 = vpack.c.b16 %v214, %v210
  %v255 = vpack.c.b16 %v215, %v211
  %v256 = vpack.c.b16 %v216, %v212
  %v257 = vpack.c.b16 %v221, %v217
  %v258 = vpack.c.b16 %v222, %v218
  %v259 = vpack.c.b16 %v223, %v219
  %v260 = vpack.c.b16 %v224, %v220
  %vm297 = vcmask 130048
  %v299 = vsel %vm297, %v106, 0
  %v302 = vsel %vm297, %v108, 0
  %v305 = vsel %vm297, %v110, 0
  %v308 = vsel %vm297, %v112, 0
  %310 = vmatprep.subr.bf16.mxu0 %v254
  %311 = vmatpush1.bf16.msra.mxu0 %v253
  %312 = vmatprep.subr.bf16.mxu0 %v250
  %313 = vmatpush1.bf16.msra.mxu0 %v249
  %314 = vmatprep.subr.bf16.mxu0 %v246
  %315 = vmatpush1.bf16.msra.mxu0 %v245
  %316 = vmatprep.subr.bf16.mxu0 %v242
  %317 = vmatpush1.bf16.msra.mxu0 %v241
  %318 = vmatprep.subr.bf16.mxu0 %v238
  %319 = vmatpush1.bf16.msra.mxu0 %v237
  %320 = vmatprep.subr.bf16.mxu0 %v234
  %321 = vmatpush1.bf16.msra.mxu0 %v233
  %322 = vmatprep.subr.bf16.mxu0 %v230
  %323 = vmatpush1.bf16.msra.mxu0 %v229
  %324 = vmatprep.subr.bf16.mxu0 %v226
  %325 = vmatpush1.bf16.msra.mxu0 %v225
  %326 = vmatprep.subr.bf16.mxu0 0
  %327 = vmatpush2.bf16.msra.mxu0 0
  %328 = vmatprep.subr.bf16.mxu0 0
  %329 = vmatpush2.bf16.msra.mxu0 0
  %330 = vmatprep.subr.bf16.mxu0 0
  %331 = vmatpush2.bf16.msra.mxu0 0
  %332 = vmatprep.subr.bf16.mxu0 0
  %333 = vmatpush2.bf16.msra.mxu0 0
  %334 = vmatprep.subr.bf16.mxu0 0
  %335 = vmatpush2.bf16.msra.mxu0 0
  %336 = vmatprep.subr.bf16.mxu0 0
  %337 = vmatpush2.bf16.msra.mxu0 0
  %338 = vmatprep.subr.bf16.mxu0 0
  %339 = vmatpush2.bf16.msra.mxu0 0
  %340 = vmatprep.subr.bf16.mxu0 %v258
  %341 = vmatpush2.bf16.msra.mxu0 %v257
  %342 = vmatprep.mubr.bf16.mxu0 %v299
  %343 = vmatmul.mubr.bf16.gmra.mxu0 %v105
  %v344 = vpop.f32.mrf.mxu0
  %v345 = vadd.f32 %v64, %v344
  %v346 = vpop.f32.mrf.mxu0
  %v347 = vadd.f32 %v68, %v346
  %v348 = vpop.f32.mrf.mxu0
  %v349 = vadd.f32 %v64, %v348
  %v350 = vpop.f32.mrf.mxu0
  %v351 = vadd.f32 %v68, %v350
  %352 = vmatprep.mubr.bf16.mxu0 %v302
  %353 = vmatmul.mubr.bf16.gmra.mxu0 %v107
  %v354 = vpop.f32.mrf.mxu0
  %v355 = vadd.f32 %v64, %v354
  %v356 = vpop.f32.mrf.mxu0
  %v357 = vadd.f32 %v68, %v356
  %v358 = vpop.f32.mrf.mxu0
  %v359 = vadd.f32 %v64, %v358
  %v360 = vpop.f32.mrf.mxu0
  %v361 = vadd.f32 %v68, %v360
  %362 = vmatprep.mubr.bf16.mxu0 %v305
  %363 = vmatmul.mubr.bf16.gmra.mxu0 %v109
  %v364 = vpop.f32.mrf.mxu0
  %v365 = vadd.f32 %v64, %v364
  %v366 = vpop.f32.mrf.mxu0
  %v367 = vadd.f32 %v68, %v366
  %v368 = vpop.f32.mrf.mxu0
  %v369 = vadd.f32 %v64, %v368
  %v370 = vpop.f32.mrf.mxu0
  %v371 = vadd.f32 %v68, %v370
  %372 = vmatprep.mubr.bf16.mxu0 %v308
  %373 = vmatmul.mubr.bf16.gmra.mxu0 %v111
  %v374 = vpop.f32.mrf.mxu0
  %v375 = vadd.f32 %v64, %v374
  %v376 = vpop.f32.mrf.mxu0
  %v377 = vadd.f32 %v68, %v376
  %v378 = vpop.f32.mrf.mxu0
  %v379 = vadd.f32 %v64, %v378
  %v380 = vpop.f32.mrf.mxu0
  %v381 = vadd.f32 %v68, %v380
  %382 = vdwg.mxu0
  %383 = vmatprep.subr.bf16.mxu0 %v256
  %384 = vmatpush1.bf16.msra.mxu0 %v255
  %385 = vmatprep.subr.bf16.mxu0 %v252
  %386 = vmatpush1.bf16.msra.mxu0 %v251
  %387 = vmatprep.subr.bf16.mxu0 %v248
  %388 = vmatpush1.bf16.msra.mxu0 %v247
  %389 = vmatprep.subr.bf16.mxu0 %v244
  %390 = vmatpush1.bf16.msra.mxu0 %v243
  %391 = vmatprep.subr.bf16.mxu0 %v240
  %392 = vmatpush1.bf16.msra.mxu0 %v239
  %393 = vmatprep.subr.bf16.mxu0 %v236
  %394 = vmatpush1.bf16.msra.mxu0 %v235
  %395 = vmatprep.subr.bf16.mxu0 %v232
  %396 = vmatpush1.bf16.msra.mxu0 %v231
  %397 = vmatprep.subr.bf16.mxu0 %v228
  %398 = vmatpush1.bf16.msra.mxu0 %v227
  %399 = vmatprep.subr.bf16.mxu0 0
  %400 = vmatpush2.bf16.msra.mxu0 0
  %401 = vmatprep.subr.bf16.mxu0 0
  %402 = vmatpush2.bf16.msra.mxu0 0
  %403 = vmatprep.subr.bf16.mxu0 0
  %404 = vmatpush2.bf16.msra.mxu0 0
  %405 = vmatprep.subr.bf16.mxu0 0
  %406 = vmatpush2.bf16.msra.mxu0 0
  %407 = vmatprep.subr.bf16.mxu0 0
  %408 = vmatpush2.bf16.msra.mxu0 0
  %409 = vmatprep.subr.bf16.mxu0 0
  %410 = vmatpush2.bf16.msra.mxu0 0
  %411 = vmatprep.subr.bf16.mxu0 0
  %412 = vmatpush2.bf16.msra.mxu0 0
  %413 = vmatprep.subr.bf16.mxu0 %v260
  %414 = vmatpush2.bf16.msra.mxu0 %v259
  %415 = vmatprep.mubr.bf16.mxu0 %v299
  %416 = vmatmul.mubr.bf16.gmra.mxu0 %v105
  %v417 = vpop.f32.mrf.mxu0
  %v418 = vadd.f32 %v72, %v417
  %v419 = vpop.f32.mrf.mxu0
  %v420 = vadd.f32 %v76, %v419
  %v421 = vpop.f32.mrf.mxu0
  %v422 = vadd.f32 %v72, %v421
  %v423 = vpop.f32.mrf.mxu0
  %v424 = vadd.f32 %v76, %v423
  %425 = vmatprep.mubr.bf16.mxu0 %v302
  %426 = vmatmul.mubr.bf16.gmra.mxu0 %v107
  %v427 = vpop.f32.mrf.mxu0
  %v428 = vadd.f32 %v72, %v427
  %v429 = vpop.f32.mrf.mxu0
  %v430 = vadd.f32 %v76, %v429
  %v431 = vpop.f32.mrf.mxu0
  %v432 = vadd.f32 %v72, %v431
  %v433 = vpop.f32.mrf.mxu0
  %v434 = vadd.f32 %v76, %v433
  %435 = vmatprep.mubr.bf16.mxu0 %v305
  %436 = vmatmul.mubr.bf16.gmra.mxu0 %v109
  %v437 = vpop.f32.mrf.mxu0
  %v438 = vadd.f32 %v72, %v437
  %v439 = vpop.f32.mrf.mxu0
  %v440 = vadd.f32 %v76, %v439
  %v441 = vpop.f32.mrf.mxu0
  %v442 = vadd.f32 %v72, %v441
  %v443 = vpop.f32.mrf.mxu0
  %v444 = vadd.f32 %v76, %v443
  %445 = vmatprep.mubr.bf16.mxu0 %v308
  %446 = vmatmul.mubr.bf16.gmra.mxu0 %v111
  %v447 = vpop.f32.mrf.mxu0
  %v448 = vadd.f32 %v72, %v447
  %v449 = vpop.f32.mrf.mxu0
  %v450 = vadd.f32 %v76, %v449
  %v451 = vpop.f32.mrf.mxu0
  %v452 = vadd.f32 %v72, %v451
  %v453 = vpop.f32.mrf.mxu0
  %v454 = vadd.f32 %v76, %v453
  %455 = vdwg.mxu0
  %v456 = vmax.f32 %v345, 0.0
  %v457 = vmax.f32 %v347, 0.0
  %v458 = vmax.f32 %v418, 0.0
  %v459 = vmax.f32 %v420, 0.0
  %v460 = vmax.f32 %v349, 0.0
  %v461 = vmax.f32 %v351, 0.0
  %v462 = vmax.f32 %v422, 0.0
  %v463 = vmax.f32 %v424, 0.0
  %v464 = vmax.f32 %v355, 0.0
  %v465 = vmax.f32 %v357, 0.0
  %v466 = vmax.f32 %v428, 0.0
  %v467 = vmax.f32 %v430, 0.0
  %v468 = vmax.f32 %v359, 0.0
  %v469 = vmax.f32 %v361, 0.0
  %v470 = vmax.f32 %v432, 0.0
  %v471 = vmax.f32 %v434, 0.0
  %v472 = vmax.f32 %v365, 0.0
  %v473 = vmax.f32 %v367, 0.0
  %v474 = vmax.f32 %v438, 0.0
  %v475 = vmax.f32 %v440, 0.0
  %v476 = vmax.f32 %v369, 0.0
  %v477 = vmax.f32 %v371, 0.0
  %v478 = vmax.f32 %v442, 0.0
  %v479 = vmax.f32 %v444, 0.0
  %v480 = vmax.f32 %v375, 0.0
  %v481 = vmax.f32 %v377, 0.0
  %v482 = vmax.f32 %v448, 0.0
  %v483 = vmax.f32 %v450, 0.0
  %v484 = vmax.f32 %v379, 0.0
  %v485 = vmax.f32 %v381, 0.0
  %v486 = vmax.f32 %v452, 0.0
  %v487 = vmax.f32 %v454, 0.0
  %488 = vst [vmem:[%s3] sm:$0xff] %v456
  %489 = vst [vmem:[%s3 + $0x8] sm:$0xff] %v457
  %490 = vst [vmem:[%s3 + $0x10] sm:$0xff] %v458
  %491 = vst [vmem:[%s3 + $0x18] sm:$0xff] %v459
  %492 = vst [vmem:[%s3 + $0x20] sm:$0xff] %v460
  %493 = vst [vmem:[%s3 + $0x28] sm:$0xff] %v461
  %494 = vst [vmem:[%s3 + $0x30] sm:$0xff] %v462
  %495 = vst [vmem:[%s3 + $0x38] sm:$0xff] %v463
  %496 = vst [vmem:[%s3 + $0x40] sm:$0xff] %v464
  %497 = vst [vmem:[%s3 + $0x48] sm:$0xff] %v465
  %498 = vst [vmem:[%s3 + $0x50] sm:$0xff] %v466
  %499 = vst [vmem:[%s3 + $0x58] sm:$0xff] %v467
  %500 = vst [vmem:[%s3 + $0x60] sm:$0xff] %v468
  %501 = vst [vmem:[%s3 + $0x68] sm:$0xff] %v469
  %502 = vst [vmem:[%s3 + $0x70] sm:$0xff] %v470
  %503 = vst [vmem:[%s3 + $0x78] sm:$0xff] %v471
  %504 = vst [vmem:[%s3 + $0x80] sm:$0xff] %v472
  %505 = vst [vmem:[%s3 + $0x88] sm:$0xff] %v473
  %506 = vst [vmem:[%s3 + $0x90] sm:$0xff] %v474
  %507 = vst [vmem:[%s3 + $0x98] sm:$0xff] %v475
  %508 = vst [vmem:[%s3 + $0xa0] sm:$0xff] %v476
  %509 = vst [vmem:[%s3 + $0xa8] sm:$0xff] %v477
  %510 = vst [vmem:[%s3 + $0xb0] sm:$0xff] %v478
  %511 = vst [vmem:[%s3 + $0xb8] sm:$0xff] %v479
  %512 = vst [vmem:[%s3 + $0xc0] sm:$0xff] %v480
  %513 = vst [vmem:[%s3 + $0xc8] sm:$0xff] %v481
  %514 = vst [vmem:[%s3 + $0xd0] sm:$0xff] %v482
  %515 = vst [vmem:[%s3 + $0xd8] sm:$0xff] %v483
  %516 = vst [vmem:[%s3 + $0xe0] sm:$0xff] %v484
  %517 = vst [vmem:[%s3 + $0xe8] sm:$0xff] %v485
  %518 = vst [vmem:[%s3 + $0xf0] sm:$0xff] %v486
  %519 = vst [vmem:[%s3 + $0xf8] sm:$0xff] %v487
  // Predicated region
  $region14: #{target_encode_generator_forward.3} parent=0 // pred_check
    _
  $region15: #{target_encode_generator_forward.3} parent=0 // pred_check_branch
    %521 = sbr.rel (0) target = $region17
  $region16: #{target_encode_generator_forward.3} parent=0 // pred_region
    _
  $region17: #{target_encode_generator_forward.3} parent=0 // pred_fallthru
    _
  // Predicated region
  $region18: #{target_encode_generator_forward.3} parent=0 // pred_check
    _
  $region19: #{target_encode_generator_forward.3} parent=0 // pred_check_branch
    %523 = sbr.rel (0) target = $region21
  $region20: #{target_encode_generator_forward.3} parent=0 // pred_region
    _
  $region21: #{target_encode_generator_forward.3} parent=0 // pred_fallthru
    _

// kernel: target_encode_generator_forward.4
$region0: #{target_encode_generator_forward.4}
  #allocation0 [shape = 'u32[]', space=smem, size = 0x4, offset = 0x4, fixed_abs, tag = 'smem constant byte address 0x4 - core index']
  #allocation1 [shape = 'u32[144,128]{1,0:T(1,128)}', space=vmem, size = 0x12000, scoped, tag = 'internal scratch']
  %s0 = inlined_call_operand.vmem [shape: bf16[98,576], index: 0, kind: input, shape index: {}]
  %s1 = inlined_call_operand.vmem [shape: bf16[576,256], index: 1, kind: input, shape index: {}]
  %s2 = inlined_call_operand.vmem [shape: f32[1,256], index: 2, kind: input, shape index: {}]
  %s3 = inlined_call_operand.vmem [shape: f32[1,256], index: 3, kind: input, shape index: {}]
  %s4 = inlined_call_operand.vmem [shape: f32[1,256], index: 4, kind: input, shape index: {}]
  %s5 = inlined_call_operand.vmem [shape: bf16[98,256], index: 5, kind: output, shape index: {}]
  %s6 = sld [smem:[#allocation0]]
  $region30: #{target_encode_generator_forward.4} parent=0
    _
  %s8 = ssub.s32 1, %s6
  %s9 = scalar_select 0, %s8, %s6
  // Predicated region
  $region2: #{target_encode_generator_forward.4} parent=0 // pred_check
    _
  $region3: #{target_encode_generator_forward.4} parent=0 // pred_check_branch
    %11 = sbr.rel (0) target = $region5
  $region4: #{target_encode_generator_forward.4} parent=0 // pred_region
    _
  $region5: #{target_encode_generator_forward.4} parent=0 // pred_fallthru
    _
  // Predicated region
  $region6: #{target_encode_generator_forward.4} parent=0 // pred_check
    _
  $region7: #{target_encode_generator_forward.4} parent=0 // pred_check_branch
    %13 = sbr.rel (0) target = $region9
  $region8: #{target_encode_generator_forward.4} parent=0 // pred_region
    _
  $region9: #{target_encode_generator_forward.4} parent=0 // pred_fallthru
    _
  // Predicated region
  $region10: #{target_encode_generator_forward.4} parent=0 // pred_check
    _
  $region11: #{target_encode_generator_forward.4} parent=0 // pred_check_branch
    %15 = sbr.rel (0) target = $region13
  $region12: #{target_encode_generator_forward.4} parent=0 // pred_region
    _
  $region13: #{target_encode_generator_forward.4} parent=0 // pred_fallthru
    _
  // Predicated region
  $region14: #{target_encode_generator_forward.4} parent=0 // pred_check
    _
  $region15: #{target_encode_generator_forward.4} parent=0 // pred_check_branch
    %17 = sbr.rel (0) target = $region17
  $region16: #{target_encode_generator_forward.4} parent=0 // pred_region
    _
  $region17: #{target_encode_generator_forward.4} parent=0 // pred_fallthru
    _
  // Predicated region
  $region18: #{target_encode_generator_forward.4} parent=0 // pred_check
    _
  $region19: #{target_encode_generator_forward.4} parent=0 // pred_check_branch
    %19 = sbr.rel (0) target = $region21
  $region20: #{target_encode_generator_forward.4} parent=0 // pred_region
    _
  $region21: #{target_encode_generator_forward.4} parent=0 // pred_fallthru
    _
  %v21 = vld [vmem:[%s0] sm:$0xff]
  %v22 = vld [vmem:[%s0 + $0x8] sm:$0xff]
  %v23 = vld [vmem:[%s0 + $0x10] sm:$0xf]
  %v24 = vld [vmem:[%s0 + $0x14] sm:$0xff]
  %v25 = vld [vmem:[%s0 + $0x1c] sm:$0xff]
  %v26 = vld [vmem:[%s0 + $0x24] sm:$0xf]
  %v27 = vld [vmem:[%s0 + $0x28] sm:$0xff]
  %v28 = vld [vmem:[%s0 + $0x30] sm:$0xff]
  %v29 = vld [vmem:[%s0 + $0x38] sm:$0xf]
  %v30 = vld [vmem:[%s0 + $0x3c] sm:$0xff]
  %v31 = vld [vmem:[%s0 + $0x44] sm:$0xff]
  %v32 = vld [vmem:[%s0 + $0x4c] sm:$0xf]
  %v33 = vld [vmem:[%s0 + $0x50] sm:$0xff]
  %v34 = vld [vmem:[%s0 + $0x58] sm:$0xff]
  %v35 = vld [vmem:[%s0 + $0x60] sm:$0xf]
  %v36 = vld [vmem:[%s0 + $0x64] sm:$0xff]
  %v37 = vld [vmem:[%s0 + $0x6c] sm:$0xff]
  %v38 = vld [vmem:[%s0 + $0x74] sm:$0xf]
  %v39 = vld [vmem:[%s0 + $0x78] sm:$0xff]
  %v40 = vld [vmem:[%s0 + $0x80] sm:$0xff]
  %v41 = vld [vmem:[%s0 + $0x88] sm:$0xf]
  %v42 = vld [vmem:[%s0 + $0x8c] sm:$0xff]
  %v43 = vld [vmem:[%s0 + $0x94] sm:$0xff]
  %v44 = vld [vmem:[%s0 + $0x9c] sm:$0xf]
  %v45 = vld [vmem:[%s0 + $0xa0] sm:$0xff]
  %v46 = vld [vmem:[%s0 + $0xa8] sm:$0xff]
  %v47 = vld [vmem:[%s0 + $0xb0] sm:$0xf]
  %v48 = vld [vmem:[%s0 + $0xb4] sm:$0xff]
  %v49 = vld [vmem:[%s0 + $0xbc] sm:$0xff]
  %v50 = vld [vmem:[%s0 + $0xc4] sm:$0xf]
  %v51 = vld [vmem:[%s0 + $0xc8] sm:$0xff]
  %v52 = vld [vmem:[%s0 + $0xd0] sm:$0xff]
  %v53 = vld [vmem:[%s0 + $0xd8] sm:$0xf]
  %v54 = vld [vmem:[%s0 + $0xdc] sm:$0xff]
  %v55 = vld [vmem:[%s0 + $0xe4] sm:$0xff]
  %v56 = vld [vmem:[%s0 + $0xec] sm:$0xf]
  %v57 = vld [vmem:[%s0 + $0xf0] sm:$0x11]
  %v58 = vld [vmem:[%s0 + $0xf8] sm:$0x11]
  %v59 = vld [vmem:[%s0 + $0x100] sm:$0x1]
  %v60 = vld [vmem:[%s1] sm:$0xff]
  %v61 = vld [vmem:[%s1 + $0x8] sm:$0xff]
  %v62 = vld [vmem:[%s1 + $0x10] sm:$0xff]
  %v63 = vld [vmem:[%s1 + $0x18] sm:$0xff]
  %v64 = vld [vmem:[%s1 + $0x20] sm:$0xff]
  %v65 = vld [vmem:[%s1 + $0x28] sm:$0xff]
  %v66 = vld [vmem:[%s1 + $0x30] sm:$0xff]
  %v67 = vld [vmem:[%s1 + $0x38] sm:$0xff]
  %v68 = vld [vmem:[%s1 + $0x40] sm:$0xff]
  %v69 = vld [vmem:[%s1 + $0x48] sm:$0xff]
  %v70 = vld [vmem:[%s1 + $0x50] sm:$0xff]
  %v71 = vld [vmem:[%s1 + $0x58] sm:$0xff]
  %v72 = vld [vmem:[%s1 + $0x60] sm:$0xff]
  %v73 = vld [vmem:[%s1 + $0x68] sm:$0xff]
  %v74 = vld [vmem:[%s1 + $0x70] sm:$0xff]
  %v75 = vld [vmem:[%s1 + $0x78] sm:$0xff]
  %v76 = vld [vmem:[%s1 + $0x80] sm:$0xff]
  %v77 = vld [vmem:[%s1 + $0x88] sm:$0xff]
  %v78 = vld [vmem:[%s1 + $0x90] sm:$0xff]
  %v79 = vld [vmem:[%s1 + $0x98] sm:$0xff]
  %v80 = vld [vmem:[%s1 + $0xa0] sm:$0xff]
  %v81 = vld [vmem:[%s1 + $0xa8] sm:$0xff]
  %v82 = vld [vmem:[%s1 + $0xb0] sm:$0xff]
  %v83 = vld [vmem:[%s1 + $0xb8] sm:$0xff]
  %v84 = vld [vmem:[%s1 + $0xc0] sm:$0xff]
  %v85 = vld [vmem:[%s1 + $0xc8] sm:$0xff]
  %v86 = vld [vmem:[%s1 + $0xd0] sm:$0xff]
  %v87 = vld [vmem:[%s1 + $0xd8] sm:$0xff]
  %v88 = vld [vmem:[%s1 + $0xe0] sm:$0xff]
  %v89 = vld [vmem:[%s1 + $0xe8] sm:$0xff]
  %v90 = vld [vmem:[%s1 + $0xf0] sm:$0xff]
  %v91 = vld [vmem:[%s1 + $0xf8] sm:$0xff]
  %v92 = vld [vmem:[%s1 + $0x100] sm:$0xff]
  %v93 = vld [vmem:[%s1 + $0x108] sm:$0xff]
  %v94 = vld [vmem:[%s1 + $0x110] sm:$0xff]
  %v95 = vld [vmem:[%s1 + $0x118] sm:$0xff]
  %v96 = vld [vmem:[%s1 + $0x120] sm:$0xff]
  %v97 = vld [vmem:[%s1 + $0x128] sm:$0xff]
  %v98 = vld [vmem:[%s1 + $0x130] sm:$0xff]
  %v99 = vld [vmem:[%s1 + $0x138] sm:$0xff]
  %v100 = vld [vmem:[%s1 + $0x140] sm:$0xff]
  %v101 = vld [vmem:[%s1 + $0x148] sm:$0xff]
  %v102 = vld [vmem:[%s1 + $0x150] sm:$0xff]
  %v103 = vld [vmem:[%s1 + $0x158] sm:$0xff]
  %v104 = vld [vmem:[%s1 + $0x160] sm:$0xff]
  %v105 = vld [vmem:[%s1 + $0x168] sm:$0xff]
  %v106 = vld [vmem:[%s1 + $0x170] sm:$0xff]
  %v107 = vld [vmem:[%s1 + $0x178] sm:$0xff]
  %v108 = vld [vmem:[%s1 + $0x180] sm:$0xff]
  %v109 = vld [vmem:[%s1 + $0x188] sm:$0xff]
  %v110 = vld [vmem:[%s1 + $0x190] sm:$0xff]
  %v111 = vld [vmem:[%s1 + $0x198] sm:$0xff]
  %v112 = vld [vmem:[%s1 + $0x1a0] sm:$0xff]
  %v113 = vld [vmem:[%s1 + $0x1a8] sm:$0xff]
  %v114 = vld [vmem:[%s1 + $0x1b0] sm:$0xff]
  %v115 = vld [vmem:[%s1 + $0x1b8] sm:$0xff]
  %v116 = vld [vmem:[%s1 + $0x1c0] sm:$0xff]
  %v117 = vld [vmem:[%s1 + $0x1c8] sm:$0xff]
  %v118 = vld [vmem:[%s1 + $0x1d0] sm:$0xff]
  %v119 = vld [vmem:[%s1 + $0x1d8] sm:$0xff]
  %v120 = vld [vmem:[%s1 + $0x1e0] sm:$0xff]
  %v121 = vld [vmem:[%s1 + $0x1e8] sm:$0xff]
  %v122 = vld [vmem:[%s1 + $0x1f0] sm:$0xff]
  %v123 = vld [vmem:[%s1 + $0x1f8] sm:$0xff]
  %v124 = vld [vmem:[%s1 + $0x200] sm:$0xff]
  %v125 = vld [vmem:[%s1 + $0x208] sm:$0xff]
  %v126 = vld [vmem:[%s1 + $0x210] sm:$0xff]
  %v127 = vld [vmem:[%s1 + $0x218] sm:$0xff]
  %v128 = vld [vmem:[%s1 + $0x220] sm:$0xff]
  %v129 = vld [vmem:[%s1 + $0x228] sm:$0xff]
  %v130 = vld [vmem:[%s1 + $0x230] sm:$0xff]
  %v131 = vld [vmem:[%s1 + $0x238] sm:$0xff]
  %v132 = vld [vmem:[%s2] sm:$0x3]
  %v134 = vlaneseq
  %v135 = vshrl.u32 %v134, 7
  %v136 = vsub.s32 0, %v135
  %v137 = vrot.slane %v132, %v136
  %v138 = vlaneseq
  %v139 = vshrl.u32 %v138, 7
  %v140 = vsub.s32 1, %v139
  %v141 = vrot.slane %v132, %v140
  %v183 = vunpack.c.l.b16 %v21
  %v184 = vunpack.c.h.b16 %v21
  %v185 = vunpack.c.l.b16 %v22
  %v186 = vunpack.c.h.b16 %v22
  %v187 = vunpack.c.l.b16 %v23
  %v188 = vunpack.c.l.b16 %v24
  %v189 = vunpack.c.h.b16 %v24
  %v190 = vunpack.c.l.b16 %v25
  %v191 = vunpack.c.h.b16 %v25
  %v192 = vunpack.c.l.b16 %v26
  %v193 = vunpack.c.l.b16 %v27
  %v194 = vunpack.c.h.b16 %v27
  %v195 = vunpack.c.l.b16 %v28
  %v196 = vunpack.c.h.b16 %v28
  %v197 = vunpack.c.l.b16 %v29
  %v198 = vunpack.c.l.b16 %v30
  %v199 = vunpack.c.h.b16 %v30
  %v200 = vunpack.c.l.b16 %v31
  %v201 = vunpack.c.h.b16 %v31
  %v202 = vunpack.c.l.b16 %v32
  %v203 = vunpack.c.l.b16 %v33
  %v204 = vunpack.c.h.b16 %v33
  %v205 = vunpack.c.l.b16 %v34
  %v206 = vunpack.c.h.b16 %v34
  %v207 = vunpack.c.l.b16 %v35
  %v208 = vunpack.c.l.b16 %v36
  %v209 = vunpack.c.h.b16 %v36
  %v210 = vunpack.c.l.b16 %v37
  %v211 = vunpack.c.h.b16 %v37
  %v212 = vunpack.c.l.b16 %v38
  %v213 = vunpack.c.l.b16 %v39
  %v214 = vunpack.c.h.b16 %v39
  %v215 = vunpack.c.l.b16 %v40
  %v216 = vunpack.c.h.b16 %v40
  %v217 = vunpack.c.l.b16 %v41
  %v218 = vunpack.c.l.b16 %v42
  %v219 = vunpack.c.h.b16 %v42
  %v220 = vunpack.c.l.b16 %v43
  %v221 = vunpack.c.h.b16 %v43
  %v222 = vunpack.c.l.b16 %v44
  %v223 = vunpack.c.l.b16 %v45
  %v224 = vunpack.c.h.b16 %v45
  %v225 = vunpack.c.l.b16 %v46
  %v226 = vunpack.c.h.b16 %v46
  %v227 = vunpack.c.l.b16 %v47
  %v228 = vunpack.c.l.b16 %v48
  %v229 = vunpack.c.h.b16 %v48
  %v230 = vunpack.c.l.b16 %v49
  %v231 = vunpack.c.h.b16 %v49
  %v232 = vunpack.c.l.b16 %v50
  %v233 = vunpack.c.l.b16 %v51
  %v234 = vunpack.c.h.b16 %v51
  %v235 = vunpack.c.l.b16 %v52
  %v236 = vunpack.c.h.b16 %v52
  %v237 = vunpack.c.l.b16 %v53
  %v238 = vunpack.c.l.b16 %v54
  %v239 = vunpack.c.h.b16 %v54
  %v240 = vunpack.c.l.b16 %v55
  %v241 = vunpack.c.h.b16 %v55
  %v242 = vunpack.c.l.b16 %v56
  %v243 = vunpack.c.l.b16 %v57
  %v244 = vunpack.c.h.b16 %v57
  %v245 = vunpack.c.l.b16 %v58
  %v246 = vunpack.c.h.b16 %v58
  %v247 = vunpack.c.l.b16 %v59
  %v248 = vpack.c.b16 %v188, %v183
  %v249 = vpack.c.b16 %v189, %v184
  %v250 = vpack.c.b16 %v190, %v185
  %v251 = vpack.c.b16 %v191, %v186
  %v252 = vpack.c.b16 %v192, %v187
  %v253 = vpack.c.b16 %v198, %v193
  %v254 = vpack.c.b16 %v199, %v194
  %v255 = vpack.c.b16 %v200, %v195
  %v256 = vpack.c.b16 %v201, %v196
  %v257 = vpack.c.b16 %v202, %v197
  %v258 = vpack.c.b16 %v208, %v203
  %v259 = vpack.c.b16 %v209, %v204
  %v260 = vpack.c.b16 %v210, %v205
  %v261 = vpack.c.b16 %v211, %v206
  %v262 = vpack.c.b16 %v212, %v207
  %v263 = vpack.c.b16 %v218, %v213
  %v264 = vpack.c.b16 %v219, %v214
  %v265 = vpack.c.b16 %v220, %v215
  %v266 = vpack.c.b16 %v221, %v216
  %v267 = vpack.c.b16 %v222, %v217
  %v268 = vpack.c.b16 %v228, %v223
  %v269 = vpack.c.b16 %v229, %v224
  %v270 = vpack.c.b16 %v230, %v225
  %v271 = vpack.c.b16 %v231, %v226
  %v272 = vpack.c.b16 %v232, %v227
  %v273 = vpack.c.b16 %v238, %v233
  %v274 = vpack.c.b16 %v239, %v234
  %v275 = vpack.c.b16 %v240, %v235
  %v276 = vpack.c.b16 %v241, %v236
  %v277 = vpack.c.b16 %v242, %v237
  %v278 = vpack.c.b16 %v243, %v243
  %v279 = vpack.c.b16 %v244, %v244
  %v280 = vpack.c.b16 %v245, %v245
  %v281 = vpack.c.b16 %v246, %v246
  %v282 = vpack.c.b16 %v247, %v247
  %v383 = vunpack.c.l.b16 %v60
  %v384 = vunpack.c.h.b16 %v60
  %v385 = vunpack.c.l.b16 %v61
  %v386 = vunpack.c.h.b16 %v61
  %v387 = vunpack.c.l.b16 %v62
  %v388 = vunpack.c.h.b16 %v62
  %v389 = vunpack.c.l.b16 %v63
  %v390 = vunpack.c.h.b16 %v63
  %v391 = vunpack.c.l.b16 %v64
  %v392 = vunpack.c.h.b16 %v64
  %v393 = vunpack.c.l.b16 %v65
  %v394 = vunpack.c.h.b16 %v65
  %v395 = vunpack.c.l.b16 %v66
  %v396 = vunpack.c.h.b16 %v66
  %v397 = vunpack.c.l.b16 %v67
  %v398 = vunpack.c.h.b16 %v67
  %v399 = vunpack.c.l.b16 %v68
  %v400 = vunpack.c.h.b16 %v68
  %v401 = vunpack.c.l.b16 %v69
  %v402 = vunpack.c.h.b16 %v69
  %v403 = vunpack.c.l.b16 %v70
  %v404 = vunpack.c.h.b16 %v70
  %v405 = vunpack.c.l.b16 %v71
  %v406 = vunpack.c.h.b16 %v71
  %v407 = vunpack.c.l.b16 %v72
  %v408 = vunpack.c.h.b16 %v72
  %v409 = vunpack.c.l.b16 %v73
  %v410 = vunpack.c.h.b16 %v73
  %v411 = vunpack.c.l.b16 %v74
  %v412 = vunpack.c.h.b16 %v74
  %v413 = vunpack.c.l.b16 %v75
  %v414 = vunpack.c.h.b16 %v75
  %v415 = vunpack.c.l.b16 %v76
  %v416 = vunpack.c.h.b16 %v76
  %v417 = vunpack.c.l.b16 %v77
  %v418 = vunpack.c.h.b16 %v77
  %v419 = vunpack.c.l.b16 %v78
  %v420 = vunpack.c.h.b16 %v78
  %v421 = vunpack.c.l.b16 %v79
  %v422 = vunpack.c.h.b16 %v79
  %v423 = vunpack.c.l.b16 %v80
  %v424 = vunpack.c.h.b16 %v80
  %v425 = vunpack.c.l.b16 %v81
  %v426 = vunpack.c.h.b16 %v81
  %v427 = vunpack.c.l.b16 %v82
  %v428 = vunpack.c.h.b16 %v82
  %v429 = vunpack.c.l.b16 %v83
  %v430 = vunpack.c.h.b16 %v83
  %v431 = vunpack.c.l.b16 %v84
  %v432 = vunpack.c.h.b16 %v84
  %v433 = vunpack.c.l.b16 %v85
  %v434 = vunpack.c.h.b16 %v85
  %v435 = vunpack.c.l.b16 %v86
  %v436 = vunpack.c.h.b16 %v86
  %v437 = vunpack.c.l.b16 %v87
  %v438 = vunpack.c.h.b16 %v87
  %v439 = vunpack.c.l.b16 %v88
  %v440 = vunpack.c.h.b16 %v88
  %v441 = vunpack.c.l.b16 %v89
  %v442 = vunpack.c.h.b16 %v89
  %v443 = vunpack.c.l.b16 %v90
  %v444 = vunpack.c.h.b16 %v90
  %v445 = vunpack.c.l.b16 %v91
  %v446 = vunpack.c.h.b16 %v91
  %v447 = vunpack.c.l.b16 %v92
  %v448 = vunpack.c.h.b16 %v92
  %v449 = vunpack.c.l.b16 %v93
  %v450 = vunpack.c.h.b16 %v93
  %v451 = vunpack.c.l.b16 %v94
  %v452 = vunpack.c.h.b16 %v94
  %v453 = vunpack.c.l.b16 %v95
  %v454 = vunpack.c.h.b16 %v95
  %v455 = vunpack.c.l.b16 %v96
  %v456 = vunpack.c.h.b16 %v96
  %v457 = vunpack.c.l.b16 %v97
  %v458 = vunpack.c.h.b16 %v97
  %v459 = vunpack.c.l.b16 %v98
  %v460 = vunpack.c.h.b16 %v98
  %v461 = vunpack.c.l.b16 %v99
  %v462 = vunpack.c.h.b16 %v99
  %v463 = vunpack.c.l.b16 %v100
  %v464 = vunpack.c.h.b16 %v100
  %v465 = vunpack.c.l.b16 %v101
  %v466 = vunpack.c.h.b16 %v101
  %v467 = vunpack.c.l.b16 %v102
  %v468 = vunpack.c.h.b16 %v102
  %v469 = vunpack.c.l.b16 %v103
  %v470 = vunpack.c.h.b16 %v103
  %v471 = vunpack.c.l.b16 %v104
  %v472 = vunpack.c.h.b16 %v104
  %v473 = vunpack.c.l.b16 %v105
  %v474 = vunpack.c.h.b16 %v105
  %v475 = vunpack.c.l.b16 %v106
  %v476 = vunpack.c.h.b16 %v106
  %v477 = vunpack.c.l.b16 %v107
  %v478 = vunpack.c.h.b16 %v107
  %v479 = vunpack.c.l.b16 %v108
  %v480 = vunpack.c.h.b16 %v108
  %v481 = vunpack.c.l.b16 %v109
  %v482 = vunpack.c.h.b16 %v109
  %v483 = vunpack.c.l.b16 %v110
  %v484 = vunpack.c.h.b16 %v110
  %v485 = vunpack.c.l.b16 %v111
  %v486 = vunpack.c.h.b16 %v111
  %v487 = vunpack.c.l.b16 %v112
  %v488 = vunpack.c.h.b16 %v112
  %v489 = vunpack.c.l.b16 %v113
  %v490 = vunpack.c.h.b16 %v113
  %v491 = vunpack.c.l.b16 %v114
  %v492 = vunpack.c.h.b16 %v114
  %v493 = vunpack.c.l.b16 %v115
  %v494 = vunpack.c.h.b16 %v115
  %v495 = vunpack.c.l.b16 %v116
  %v496 = vunpack.c.h.b16 %v116
  %v497 = vunpack.c.l.b16 %v117
  %v498 = vunpack.c.h.b16 %v117
  %v499 = vunpack.c.l.b16 %v118
  %v500 = vunpack.c.h.b16 %v118
  %v501 = vunpack.c.l.b16 %v119
  %v502 = vunpack.c.h.b16 %v119
  %v503 = vunpack.c.l.b16 %v120
  %v504 = vunpack.c.h.b16 %v120
  %v505 = vunpack.c.l.b16 %v121
  %v506 = vunpack.c.h.b16 %v121
  %v507 = vunpack.c.l.b16 %v122
  %v508 = vunpack.c.h.b16 %v122
  %v509 = vunpack.c.l.b16 %v123
  %v510 = vunpack.c.h.b16 %v123
  %v511 = vunpack.c.l.b16 %v124
  %v512 = vunpack.c.h.b16 %v124
  %v513 = vunpack.c.l.b16 %v125
  %v514 = vunpack.c.h.b16 %v125
  %v515 = vunpack.c.l.b16 %v126
  %v516 = vunpack.c.h.b16 %v126
  %v517 = vunpack.c.l.b16 %v127
  %v518 = vunpack.c.h.b16 %v127
  %v519 = vunpack.c.l.b16 %v128
  %v520 = vunpack.c.h.b16 %v128
  %v521 = vunpack.c.l.b16 %v129
  %v522 = vunpack.c.h.b16 %v129
  %v523 = vunpack.c.l.b16 %v130
  %v524 = vunpack.c.h.b16 %v130
  %v525 = vunpack.c.l.b16 %v131
  %v526 = vunpack.c.h.b16 %v131
  %v527 = vpack.c.b16 %v385, %v383
  %v528 = vpack.c.b16 %v386, %v384
  %v529 = vpack.c.b16 %v389, %v387
  %v530 = vpack.c.b16 %v390, %v388
  %v531 = vpack.c.b16 %v393, %v391
  %v532 = vpack.c.b16 %v394, %v392
  %v533 = vpack.c.b16 %v397, %v395
  %v534 = vpack.c.b16 %v398, %v396
  %v535 = vpack.c.b16 %v401, %v399
  %v536 = vpack.c.b16 %v402, %v400
  %v537 = vpack.c.b16 %v405, %v403
  %v538 = vpack.c.b16 %v406, %v404
  %v539 = vpack.c.b16 %v409, %v407
  %v540 = vpack.c.b16 %v410, %v408
  %v541 = vpack.c.b16 %v413, %v411
  %v542 = vpack.c.b16 %v414, %v412
  %v543 = vpack.c.b16 %v417, %v415
  %v544 = vpack.c.b16 %v418, %v416
  %v545 = vpack.c.b16 %v421, %v419
  %v546 = vpack.c.b16 %v422, %v420
  %v547 = vpack.c.b16 %v425, %v423
  %v548 = vpack.c.b16 %v426, %v424
  %v549 = vpack.c.b16 %v429, %v427
  %v550 = vpack.c.b16 %v430, %v428
  %v551 = vpack.c.b16 %v433, %v431
  %v552 = vpack.c.b16 %v434, %v432
  %v553 = vpack.c.b16 %v437, %v435
  %v554 = vpack.c.b16 %v438, %v436
  %v555 = vpack.c.b16 %v441, %v439
  %v556 = vpack.c.b16 %v442, %v440
  %v557 = vpack.c.b16 %v445, %v443
  %v558 = vpack.c.b16 %v446, %v444
  %v559 = vpack.c.b16 %v449, %v447
  %v560 = vpack.c.b16 %v450, %v448
  %v561 = vpack.c.b16 %v453, %v451
  %v562 = vpack.c.b16 %v454, %v452
  %v563 = vpack.c.b16 %v457, %v455
  %v564 = vpack.c.b16 %v458, %v456
  %v565 = vpack.c.b16 %v461, %v459
  %v566 = vpack.c.b16 %v462, %v460
  %v567 = vpack.c.b16 %v465, %v463
  %v568 = vpack.c.b16 %v466, %v464
  %v569 = vpack.c.b16 %v469, %v467
  %v570 = vpack.c.b16 %v470, %v468
  %v571 = vpack.c.b16 %v473, %v471
  %v572 = vpack.c.b16 %v474, %v472
  %v573 = vpack.c.b16 %v477, %v475
  %v574 = vpack.c.b16 %v478, %v476
  %v575 = vpack.c.b16 %v481, %v479
  %v576 = vpack.c.b16 %v482, %v480
  %v577 = vpack.c.b16 %v485, %v483
  %v578 = vpack.c.b16 %v486, %v484
  %v579 = vpack.c.b16 %v489, %v487
  %v580 = vpack.c.b16 %v490, %v488
  %v581 = vpack.c.b16 %v493, %v491
  %v582 = vpack.c.b16 %v494, %v492
  %v583 = vpack.c.b16 %v497, %v495
  %v584 = vpack.c.b16 %v498, %v496
  %v585 = vpack.c.b16 %v501, %v499
  %v586 = vpack.c.b16 %v502, %v500
  %v587 = vpack.c.b16 %v505, %v503
  %v588 = vpack.c.b16 %v506, %v504
  %v589 = vpack.c.b16 %v509, %v507
  %v590 = vpack.c.b16 %v510, %v508
  %v591 = vpack.c.b16 %v513, %v511
  %v592 = vpack.c.b16 %v514, %v512
  %v593 = vpack.c.b16 %v517, %v515
  %v594 = vpack.c.b16 %v518, %v516
  %v595 = vpack.c.b16 %v521, %v519
  %v596 = vpack.c.b16 %v522, %v520
  %v597 = vpack.c.b16 %v525, %v523
  %v598 = vpack.c.b16 %v526, %v524
  %vm671 = vcmask 523264
  %v673 = vsel %vm671, %v252, 0
  %v676 = vsel %vm671, %v257, 0
  %v679 = vsel %vm671, %v262, 0
  %v682 = vsel %vm671, %v267, 0
  %v685 = vsel %vm671, %v272, 0
  %v688 = vsel %vm671, %v277, 0
  %v691 = vsel %vm671, %v282, 0
  %693 = vmatprep.subr.bf16.mxu0 %v542
  %694 = vmatpush1.bf16.msra.mxu0 %v541
  %695 = vmatprep.subr.bf16.mxu0 %v540
  %696 = vmatpush1.bf16.msra.mxu0 %v539
  %697 = vmatprep.subr.bf16.mxu0 %v538
  %698 = vmatpush1.bf16.msra.mxu0 %v537
  %699 = vmatprep.subr.bf16.mxu0 %v536
  %700 = vmatpush1.bf16.msra.mxu0 %v535
  %701 = vmatprep.subr.bf16.mxu0 %v534
  %702 = vmatpush1.bf16.msra.mxu0 %v533
  %703 = vmatprep.subr.bf16.mxu0 %v532
  %704 = vmatpush1.bf16.msra.mxu0 %v531
  %705 = vmatprep.subr.bf16.mxu0 %v530
  %706 = vmatpush1.bf16.msra.mxu0 %v529
  %707 = vmatprep.subr.bf16.mxu0 %v528
  %708 = vmatpush1.bf16.msra.mxu0 %v527
  %709 = vmatprep.subr.bf16.mxu0 %v558
  %710 = vmatpush2.bf16.msra.mxu0 %v557
  %711 = vmatprep.subr.bf16.mxu0 %v556
  %712 = vmatpush2.bf16.msra.mxu0 %v555
  %713 = vmatprep.subr.bf16.mxu0 %v554
  %714 = vmatpush2.bf16.msra.mxu0 %v553
  %715 = vmatprep.subr.bf16.mxu0 %v552
  %716 = vmatpush2.bf16.msra.mxu0 %v551
  %717 = vmatprep.subr.bf16.mxu0 %v550
  %718 = vmatpush2.bf16.msra.mxu0 %v549
  %719 = vmatprep.subr.bf16.mxu0 %v548
  %720 = vmatpush2.bf16.msra.mxu0 %v547
  %721 = vmatprep.subr.bf16.mxu0 %v546
  %722 = vmatpush2.bf16.msra.mxu0 %v545
  %723 = vmatprep.subr.bf16.mxu0 %v544
  %724 = vmatpush2.bf16.msra.mxu0 %v543
  %725 = vmatprep.mubr.bf16.mxu0 %v249
  %726 = vmatmul.mubr.bf16.gmra.mxu0 %v248
  %v727 = vpop.f32.mrf.mxu0
  %v728 = vadd.f32 %v137, %v727
  %v729 = vpop.f32.mrf.mxu0
  %v730 = vadd.f32 %v141, %v729
  %v731 = vpop.f32.mrf.mxu0
  %v732 = vadd.f32 %v137, %v731
  %v733 = vpop.f32.mrf.mxu0
  %v734 = vadd.f32 %v141, %v733
  %735 = vmatprep.mubr.bf16.mxu0 %v254
  %736 = vmatmul.mubr.bf16.gmra.mxu0 %v253
  %v737 = vpop.f32.mrf.mxu0
  %v738 = vadd.f32 %v137, %v737
  %v739 = vpop.f32.mrf.mxu0
  %v740 = vadd.f32 %v141, %v739
  %v741 = vpop.f32.mrf.mxu0
  %v742 = vadd.f32 %v137, %v741
  %v743 = vpop.f32.mrf.mxu0
  %v744 = vadd.f32 %v141, %v743
  %745 = vmatprep.mubr.bf16.mxu0 %v259
  %746 = vmatmul.mubr.bf16.gmra.mxu0 %v258
  %v747 = vpop.f32.mrf.mxu0
  %v748 = vadd.f32 %v137, %v747
  %v749 = vpop.f32.mrf.mxu0
  %v750 = vadd.f32 %v141, %v749
  %v751 = vpop.f32.mrf.mxu0
  %v752 = vadd.f32 %v137, %v751
  %v753 = vpop.f32.mrf.mxu0
  %v754 = vadd.f32 %v141, %v753
  %755 = vmatprep.mubr.bf16.mxu0 %v264
  %756 = vmatmul.mubr.bf16.gmra.mxu0 %v263
  %v757 = vpop.f32.mrf.mxu0
  %v758 = vadd.f32 %v137, %v757
  %v759 = vpop.f32.mrf.mxu0
  %v760 = vadd.f32 %v141, %v759
  %v761 = vpop.f32.mrf.mxu0
  %v762 = vadd.f32 %v137, %v761
  %v763 = vpop.f32.mrf.mxu0
  %v764 = vadd.f32 %v141, %v763
  %765 = vmatprep.mubr.bf16.mxu0 %v269
  %766 = vmatmul.mubr.bf16.gmra.mxu0 %v268
  %v767 = vpop.f32.mrf.mxu0
  %v768 = vadd.f32 %v137, %v767
  %v769 = vpop.f32.mrf.mxu0
  %v770 = vadd.f32 %v141, %v769
  %v771 = vpop.f32.mrf.mxu0
  %v772 = vadd.f32 %v137, %v771
  %v773 = vpop.f32.mrf.mxu0
  %v774 = vadd.f32 %v141, %v773
  %775 = vmatprep.mubr.bf16.mxu0 %v274
  %776 = vmatmul.mubr.bf16.gmra.mxu0 %v273
  %v777 = vpop.f32.mrf.mxu0
  %v778 = vadd.f32 %v137, %v777
  %v779 = vpop.f32.mrf.mxu0
  %v780 = vadd.f32 %v141, %v779
  %v781 = vpop.f32.mrf.mxu0
  %v782 = vadd.f32 %v137, %v781
  %v783 = vpop.f32.mrf.mxu0
  %v784 = vadd.f32 %v141, %v783
  %785 = vmatprep.mubr.bf16.mxu0 %v279
  %786 = vmatmul.mubr.bf16.gmra.mxu0 %v278
  %v787 = vpop.f32.mrf.mxu0
  %v788 = vadd.f32 %v137, %v787
  %v789 = vpop.f32.mrf.mxu0
  %v790 = vadd.f32 %v141, %v789
  %v791 = vpop.f32.mrf.mxu0
  %v792 = vpop.f32.mrf.mxu0
  %793 = vdwg.mxu0
  %794 = vmatprep.subr.bf16.mxu0 %v574
  %795 = vmatpush1.bf16.msra.mxu0 %v573
  %796 = vmatprep.subr.bf16.mxu0 %v572
  %797 = vmatpush1.bf16.msra.mxu0 %v571
  %798 = vmatprep.subr.bf16.mxu0 %v570
  %799 = vmatpush1.bf16.msra.mxu0 %v569
  %800 = vmatprep.subr.bf16.mxu0 %v568
  %801 = vmatpush1.bf16.msra.mxu0 %v567
  %802 = vmatprep.subr.bf16.mxu0 %v566
  %803 = vmatpush1.bf16.msra.mxu0 %v565
  %804 = vmatprep.subr.bf16.mxu0 %v564
  %805 = vmatpush1.bf16.msra.mxu0 %v563
  %806 = vmatprep.subr.bf16.mxu0 %v562
  %807 = vmatpush1.bf16.msra.mxu0 %v561
  %808 = vmatprep.subr.bf16.mxu0 %v560
  %809 = vmatpush1.bf16.msra.mxu0 %v559
  %810 = vmatprep.subr.bf16.mxu0 %v590
  %811 = vmatpush2.bf16.msra.mxu0 %v589
  %812 = vmatprep.subr.bf16.mxu0 %v588
  %813 = vmatpush2.bf16.msra.mxu0 %v587
  %814 = vmatprep.subr.bf16.mxu0 %v586
  %815 = vmatpush2.bf16.msra.mxu0 %v585
  %816 = vmatprep.subr.bf16.mxu0 %v584
  %817 = vmatpush2.bf16.msra.mxu0 %v583
  %818 = vmatprep.subr.bf16.mxu0 %v582
  %819 = vmatpush2.bf16.msra.mxu0 %v581
  %820 = vmatprep.subr.bf16.mxu0 %v580
  %821 = vmatpush2.bf16.msra.mxu0 %v579
  %822 = vmatprep.subr.bf16.mxu0 %v578
  %823 = vmatpush2.bf16.msra.mxu0 %v577
  %824 = vmatprep.subr.bf16.mxu0 %v576
  %825 = vmatpush2.bf16.msra.mxu0 %v575
  %826 = vmatprep.mubr.bf16.mxu0 %v251
  %827 = vmatmul.mubr.bf16.gmra.mxu0 %v250
  %v828 = vpop.f32.mrf.mxu0
  %v829 = vadd.f32 %v728, %v828
  %v830 = vpop.f32.mrf.mxu0
  %v831 = vadd.f32 %v730, %v830
  %v832 = vpop.f32.mrf.mxu0
  %v833 = vadd.f32 %v732, %v832
  %v834 = vpop.f32.mrf.mxu0
  %v835 = vadd.f32 %v734, %v834
  %836 = vmatprep.mubr.bf16.mxu0 %v256
  %837 = vmatmul.mubr.bf16.gmra.mxu0 %v255
  %v838 = vpop.f32.mrf.mxu0
  %v839 = vadd.f32 %v738, %v838
  %v840 = vpop.f32.mrf.mxu0
  %v841 = vadd.f32 %v740, %v840
  %v842 = vpop.f32.mrf.mxu0
  %v843 = vadd.f32 %v742, %v842
  %v844 = vpop.f32.mrf.mxu0
  %v845 = vadd.f32 %v744, %v844
  %846 = vmatprep.mubr.bf16.mxu0 %v261
  %847 = vmatmul.mubr.bf16.gmra.mxu0 %v260
  %v848 = vpop.f32.mrf.mxu0
  %v849 = vadd.f32 %v748, %v848
  %v850 = vpop.f32.mrf.mxu0
  %v851 = vadd.f32 %v750, %v850
  %v852 = vpop.f32.mrf.mxu0
  %v853 = vadd.f32 %v752, %v852
  %v854 = vpop.f32.mrf.mxu0
  %v855 = vadd.f32 %v754, %v854
  %856 = vmatprep.mubr.bf16.mxu0 %v266
  %857 = vmatmul.mubr.bf16.gmra.mxu0 %v265
  %v858 = vpop.f32.mrf.mxu0
  %v859 = vadd.f32 %v758, %v858
  %v860 = vpop.f32.mrf.mxu0
  %v861 = vadd.f32 %v760, %v860
  %v862 = vpop.f32.mrf.mxu0
  %v863 = vadd.f32 %v762, %v862
  %v864 = vpop.f32.mrf.mxu0
  %v865 = vadd.f32 %v764, %v864
  %866 = vmatprep.mubr.bf16.mxu0 %v271
  %867 = vmatmul.mubr.bf16.gmra.mxu0 %v270
  %v868 = vpop.f32.mrf.mxu0
  %v869 = vadd.f32 %v768, %v868
  %v870 = vpop.f32.mrf.mxu0
  %v871 = vadd.f32 %v770, %v870
  %v872 = vpop.f32.mrf.mxu0
  %v873 = vadd.f32 %v772, %v872
  %v874 = vpop.f32.mrf.mxu0
  %v875 = vadd.f32 %v774, %v874
  %876 = vmatprep.mubr.bf16.mxu0 %v276
  %877 = vmatmul.mubr.bf16.gmra.mxu0 %v275
  %v878 = vpop.f32.mrf.mxu0
  %v879 = vadd.f32 %v778, %v878
  %v880 = vpop.f32.mrf.mxu0
  %v881 = vadd.f32 %v780, %v880
  %v882 = vpop.f32.mrf.mxu0
  %v883 = vadd.f32 %v782, %v882
  %v884 = vpop.f32.mrf.mxu0
  %v885 = vadd.f32 %v784, %v884
  %886 = vmatprep.mubr.bf16.mxu0 %v281
  %887 = vmatmul.mubr.bf16.gmra.mxu0 %v280
  %v888 = vpop.f32.mrf.mxu0
  %v889 = vadd.f32 %v788, %v888
  %v890 = vpop.f32.mrf.mxu0
  %v891 = vadd.f32 %v790, %v890
  %v892 = vpop.f32.mrf.mxu0
  %v893 = vpop.f32.mrf.mxu0
  %894 = vdwg.mxu0
  %895 = vmatprep.subr.bf16.mxu0 0
  %896 = vmatpush1.bf16.msra.mxu0 0
  %897 = vmatprep.subr.bf16.mxu0 0
  %898 = vmatpush1.bf16.msra.mxu0 0
  %899 = vmatprep.subr.bf16.mxu0 0
  %900 = vmatpush1.bf16.msra.mxu0 0
  %901 = vmatprep.subr.bf16.mxu0 0
  %902 = vmatpush1.bf16.msra.mxu0 0
  %903 = vmatprep.subr.bf16.mxu0 %v598
  %904 = vmatpush1.bf16.msra.mxu0 %v597
  %905 = vmatprep.subr.bf16.mxu0 %v596
  %906 = vmatpush1.bf16.msra.mxu0 %v595
  %907 = vmatprep.subr.bf16.mxu0 %v594
  %908 = vmatpush1.bf16.msra.mxu0 %v593
  %909 = vmatprep.subr.bf16.mxu0 %v592
  %910 = vmatpush1.bf16.msra.mxu0 %v591
  %911 = vmatprep.subr.bf16.mxu0 0
  %912 = vmatpush2.bf16.msra.mxu0 0
  %913 = vmatprep.subr.bf16.mxu0 0
  %914 = vmatpush2.bf16.msra.mxu0 0
  %915 = vmatprep.subr.bf16.mxu0 0
  %916 = vmatpush2.bf16.msra.mxu0 0
  %917 = vmatprep.subr.bf16.mxu0 0
  %918 = vmatpush2.bf16.msra.mxu0 0
  %919 = vmatprep.subr.bf16.mxu0 0
  %920 = vmatpush2.bf16.msra.mxu0 0
  %921 = vmatprep.subr.bf16.mxu0 0
  %922 = vmatpush2.bf16.msra.mxu0 0
  %923 = vmatprep.subr.bf16.mxu0 0
  %924 = vmatpush2.bf16.msra.mxu0 0
  %925 = vmatprep.subr.bf16.mxu0 0
  %926 = vmatpush2.bf16.msra.mxu0 0
  %927 = vmatprep.mubr.bf16.mxu0 0
  %928 = vmatmul.mubr.bf16.gmra.mxu0 %v673
  %v929 = vpop.f32.mrf.mxu0
  %v930 = vadd.f32 %v829, %v929
  %v931 = vpop.f32.mrf.mxu0
  %v932 = vadd.f32 %v831, %v931
  %v933 = vpop.f32.mrf.mxu0
  %v934 = vadd.f32 %v833, %v933
  %v935 = vpop.f32.mrf.mxu0
  %v936 = vadd.f32 %v835, %v935
  %937 = vmatprep.mubr.bf16.mxu0 0
  %938 = vmatmul.mubr.bf16.gmra.mxu0 %v676
  %v939 = vpop.f32.mrf.mxu0
  %v940 = vadd.f32 %v839, %v939
  %v941 = vpop.f32.mrf.mxu0
  %v942 = vadd.f32 %v841, %v941
  %v943 = vpop.f32.mrf.mxu0
  %v944 = vadd.f32 %v843, %v943
  %v945 = vpop.f32.mrf.mxu0
  %v946 = vadd.f32 %v845, %v945
  %947 = vmatprep.mubr.bf16.mxu0 0
  %948 = vmatmul.mubr.bf16.gmra.mxu0 %v679
  %v949 = vpop.f32.mrf.mxu0
  %v950 = vadd.f32 %v849, %v949
  %v951 = vpop.f32.mrf.mxu0
  %v952 = vadd.f32 %v851, %v951
  %v953 = vpop.f32.mrf.mxu0
  %v954 = vadd.f32 %v853, %v953
  %v955 = vpop.f32.mrf.mxu0
  %v956 = vadd.f32 %v855, %v955
  %957 = vmatprep.mubr.bf16.mxu0 0
  %958 = vmatmul.mubr.bf16.gmra.mxu0 %v682
  %v959 = vpop.f32.mrf.mxu0
  %v960 = vadd.f32 %v859, %v959
  %v961 = vpop.f32.mrf.mxu0
  %v962 = vadd.f32 %v861, %v961
  %v963 = vpop.f32.mrf.mxu0
  %v964 = vadd.f32 %v863, %v963
  %v965 = vpop.f32.mrf.mxu0
  %v966 = vadd.f32 %v865, %v965
  %967 = vmatprep.mubr.bf16.mxu0 0
  %968 = vmatmul.mubr.bf16.gmra.mxu0 %v685
  %v969 = vpop.f32.mrf.mxu0
  %v970 = vadd.f32 %v869, %v969
  %v971 = vpop.f32.mrf.mxu0
  %v972 = vadd.f32 %v871, %v971
  %v973 = vpop.f32.mrf.mxu0
  %v974 = vadd.f32 %v873, %v973
  %v975 = vpop.f32.mrf.mxu0
  %v976 = vadd.f32 %v875, %v975
  %977 = vmatprep.mubr.bf16.mxu0 0
  %978 = vmatmul.mubr.bf16.gmra.mxu0 %v688
  %v979 = vpop.f32.mrf.mxu0
  %v980 = vadd.f32 %v879, %v979
  %v981 = vpop.f32.mrf.mxu0
  %v982 = vadd.f32 %v881, %v981
  %v983 = vpop.f32.mrf.mxu0
  %v984 = vadd.f32 %v883, %v983
  %v985 = vpop.f32.mrf.mxu0
  %v986 = vadd.f32 %v885, %v985
  %987 = vmatprep.mubr.bf16.mxu0 0
  %988 = vmatmul.mubr.bf16.gmra.mxu0 %v691
  %v989 = vpop.f32.mrf.mxu0
  %v990 = vadd.f32 %v889, %v989
  %v991 = vpop.f32.mrf.mxu0
  %v992 = vadd.f32 %v891, %v991
  %v993 = vpop.f32.mrf.mxu0
  %v994 = vpop.f32.mrf.mxu0
  %995 = vdwg.mxu0
  %v996 = vadd.f32 %v930, %v934
  %v997 = vadd.f32 %v996, %v940
  %v998 = vadd.f32 %v997, %v944
  %v999 = vadd.f32 %v998, %v950
  %v1000 = vadd.f32 %v999, %v954
  %v1001 = vadd.f32 %v1000, %v960
  %v1002 = vadd.f32 %v1001, %v964
  %v1003 = vadd.f32 %v1002, %v970
  %v1004 = vadd.f32 %v1003, %v974
  %v1005 = vadd.f32 %v1004, %v980
  %v1006 = vadd.f32 %v1005, %v984
  %vm1007 = vcmask 1041408
  %v1008 = vsel %vm1007, %v990, 0.0
  %v1009 = vadd.f32 %v1006, %v1008
  %v1010 = vrot.slane %v1009, 4
  %v1011 = vadd.f32 %v1009, %v1010
  %v1012 = vrot.slane %v1011, 2
  %v1013 = vadd.f32 %v1011, %v1012
  %v1014 = vrot.slane %v1013, 1
  %v1015 = vadd.f32 %v1013, %v1014
  %v1016 = vadd.f32 %v932, %v936
  %v1017 = vadd.f32 %v1016, %v942
  %v1018 = vadd.f32 %v1017, %v946
  %v1019 = vadd.f32 %v1018, %v952
  %v1020 = vadd.f32 %v1019, %v956
  %v1021 = vadd.f32 %v1020, %v962
  %v1022 = vadd.f32 %v1021, %v966
  %v1023 = vadd.f32 %v1022, %v972
  %v1024 = vadd.f32 %v1023, %v976
  %v1025 = vadd.f32 %v1024, %v982
  %v1026 = vadd.f32 %v1025, %v986
  %v1027 = vsel %vm1007, %v992, 0.0
  %v1028 = vadd.f32 %v1026, %v1027
  %v1029 = vrot.slane %v1028, 4
  %v1030 = vadd.f32 %v1028, %v1029
  %v1031 = vrot.slane %v1030, 2
  %v1032 = vadd.f32 %v1030, %v1031
  %v1033 = vrot.slane %v1032, 1
  %v1034 = vadd.f32 %v1032, %v1033
  %v1035 = vrcp.pop 98.0
  %v1036 = vmul.f32 %v1015, %v1035
  %v1037 = vmul.f32 %v1034, %v1035
  %v1038 = vsub.f32 %v930, %v1036
  %v1039 = vsub.f32 %v932, %v1037
  %v1040 = vsub.f32 %v934, %v1036
  %v1041 = vsub.f32 %v936, %v1037
  %v1042 = vsub.f32 %v940, %v1036
  %v1043 = vsub.f32 %v942, %v1037
  %v1044 = vsub.f32 %v944, %v1036
  %v1045 = vsub.f32 %v946, %v1037
  %v1046 = vsub.f32 %v950, %v1036
  %v1047 = vsub.f32 %v952, %v1037
  %v1048 = vsub.f32 %v954, %v1036
  %v1049 = vsub.f32 %v956, %v1037
  %v1050 = vsub.f32 %v960, %v1036
  %v1051 = vsub.f32 %v962, %v1037
  %v1052 = vsub.f32 %v964, %v1036
  %v1053 = vsub.f32 %v966, %v1037
  %v1054 = vsub.f32 %v970, %v1036
  %v1055 = vsub.f32 %v972, %v1037
  %v1056 = vsub.f32 %v974, %v1036
  %v1057 = vsub.f32 %v976, %v1037
  %v1058 = vsub.f32 %v980, %v1036
  %v1059 = vsub.f32 %v982, %v1037
  %v1060 = vsub.f32 %v984, %v1036
  %v1061 = vsub.f32 %v986, %v1037
  %v1062 = vsub.f32 %v990, %v1036
  %v1063 = vsub.f32 %v992, %v1037
  %v1064 = vmul.f32 %v1038, %v1038
  %v1065 = vmul.f32 %v1039, %v1039
  %v1066 = vmul.f32 %v1040, %v1040
  %v1067 = vmul.f32 %v1041, %v1041
  %v1068 = vmul.f32 %v1042, %v1042
  %v1069 = vmul.f32 %v1043, %v1043
  %v1070 = vmul.f32 %v1044, %v1044
  %v1071 = vmul.f32 %v1045, %v1045
  %v1072 = vmul.f32 %v1046, %v1046
  %v1073 = vmul.f32 %v1047, %v1047
  %v1074 = vmul.f32 %v1048, %v1048
  %v1075 = vmul.f32 %v1049, %v1049
  %v1076 = vmul.f32 %v1050, %v1050
  %v1077 = vmul.f32 %v1051, %v1051
  %v1078 = vmul.f32 %v1052, %v1052
  %v1079 = vmul.f32 %v1053, %v1053
  %v1080 = vmul.f32 %v1054, %v1054
  %v1081 = vmul.f32 %v1055, %v1055
  %v1082 = vmul.f32 %v1056, %v1056
  %v1083 = vmul.f32 %v1057, %v1057
  %v1084 = vmul.f32 %v1058, %v1058
  %v1085 = vmul.f32 %v1059, %v1059
  %v1086 = vmul.f32 %v1060, %v1060
  %v1087 = vmul.f32 %v1061, %v1061
  %v1088 = vmul.f32 %v1062, %v1062
  %v1089 = vmul.f32 %v1063, %v1063
  %v1090 = vadd.f32 %v1064, %v1066
  %v1091 = vadd.f32 %v1090, %v1068
  %v1092 = vadd.f32 %v1091, %v1070
  %v1093 = vadd.f32 %v1092, %v1072
  %v1094 = vadd.f32 %v1093, %v1074
  %v1095 = vadd.f32 %v1094, %v1076
  %v1096 = vadd.f32 %v1095, %v1078
  %v1097 = vadd.f32 %v1096, %v1080
  %v1098 = vadd.f32 %v1097, %v1082
  %v1099 = vadd.f32 %v1098, %v1084
  %v1100 = vadd.f32 %v1099, %v1086
  %v1101 = vsel %vm1007, %v1088, 0.0
  %v1102 = vadd.f32 %v1100, %v1101
  %v1103 = vrot.slane %v1102, 4
  %v1104 = vadd.f32 %v1102, %v1103
  %v1105 = vrot.slane %v1104, 2
  %v1106 = vadd.f32 %v1104, %v1105
  %v1107 = vrot.slane %v1106, 1
  %v1108 = vadd.f32 %v1106, %v1107
  %v1109 = vadd.f32 %v1065, %v1067
  %v1110 = vadd.f32 %v1109, %v1069
  %v1111 = vadd.f32 %v1110, %v1071
  %v1112 = vadd.f32 %v1111, %v1073
  %v1113 = vadd.f32 %v1112, %v1075
  %v1114 = vadd.f32 %v1113, %v1077
  %v1115 = vadd.f32 %v1114, %v1079
  %v1116 = vadd.f32 %v1115, %v1081
  %v1117 = vadd.f32 %v1116, %v1083
  %v1118 = vadd.f32 %v1117, %v1085
  %v1119 = vadd.f32 %v1118, %v1087
  %v1120 = vsel %vm1007, %v1089, 0.0
  %v1121 = vadd.f32 %v1119, %v1120
  %v1122 = vrot.slane %v1121, 4
  %v1123 = vadd.f32 %v1121, %v1122
  %v1124 = vrot.slane %v1123, 2
  %v1125 = vadd.f32 %v1123, %v1124
  %v1126 = vrot.slane %v1125, 1
  %v1127 = vadd.f32 %v1125, %v1126
  %v1128 = vmul.f32 %v1108, %v1035
  %v1129 = vmul.f32 %v1127, %v1035
  %v1130 = vadd.f32 %v1128, 1e-05
  %v1131 = vadd.f32 %v1129, 1e-05
  %v1132 = vrsqrt.pop %v1130
  %v1133 = vrsqrt.pop %v1131
  %v1134 = vmul.f32 %v1038, %v1132
  %v1135 = vmul.f32 %v1039, %v1133
  %v1136 = vmul.f32 %v1040, %v1132
  %v1137 = vmul.f32 %v1041, %v1133
  %v1138 = vmul.f32 %v1042, %v1132
  %v1139 = vmul.f32 %v1043, %v1133
  %v1140 = vmul.f32 %v1044, %v1132
  %v1141 = vmul.f32 %v1045, %v1133
  %v1142 = vmul.f32 %v1046, %v1132
  %v1143 = vmul.f32 %v1047, %v1133
  %v1144 = vmul.f32 %v1048, %v1132
  %v1145 = vmul.f32 %v1049, %v1133
  %v1146 = vmul.f32 %v1050, %v1132
  %v1147 = vmul.f32 %v1051, %v1133
  %v1148 = vmul.f32 %v1052, %v1132
  %v1149 = vmul.f32 %v1053, %v1133
  %v1150 = vmul.f32 %v1054, %v1132
  %v1151 = vmul.f32 %v1055, %v1133
  %v1152 = vmul.f32 %v1056, %v1132
  %v1153 = vmul.f32 %v1057, %v1133
  %v1154 = vmul.f32 %v1058, %v1132
  %v1155 = vmul.f32 %v1059, %v1133
  %v1156 = vmul.f32 %v1060, %v1132
  %v1157 = vmul.f32 %v1061, %v1133
  %v1158 = vmul.f32 %v1062, %v1132
  %v1159 = vmul.f32 %v1063, %v1133
  %v1160 = vld [vmem:[%s3] sm:$0x3]
  %v1162 = vlaneseq
  %v1163 = vshrl.u32 %v1162, 7
  %v1164 = vsub.s32 0, %v1163
  %v1165 = vrot.slane %v1160, %v1164
  %v1166 = vlaneseq
  %v1167 = vshrl.u32 %v1166, 7
  %v1168 = vsub.s32 1, %v1167
  %v1169 = vrot.slane %v1160, %v1168
  %v1172 = vmul.f32 %v1134, %v1165
  %v1173 = vmul.f32 %v1135, %v1169
  %v1174 = vmul.f32 %v1136, %v1165
  %v1175 = vmul.f32 %v1137, %v1169
  %v1176 = vmul.f32 %v1138, %v1165
  %v1177 = vmul.f32 %v1139, %v1169
  %v1178 = vmul.f32 %v1140, %v1165
  %v1179 = vmul.f32 %v1141, %v1169
  %v1180 = vmul.f32 %v1142, %v1165
  %v1181 = vmul.f32 %v1143, %v1169
  %v1182 = vmul.f32 %v1144, %v1165
  %v1183 = vmul.f32 %v1145, %v1169
  %v1184 = vmul.f32 %v1146, %v1165
  %v1185 = vmul.f32 %v1147, %v1169
  %v1186 = vmul.f32 %v1148, %v1165
  %v1187 = vmul.f32 %v1149, %v1169
  %v1188 = vmul.f32 %v1150, %v1165
  %v1189 = vmul.f32 %v1151, %v1169
  %v1190 = vmul.f32 %v1152, %v1165
  %v1191 = vmul.f32 %v1153, %v1169
  %v1192 = vmul.f32 %v1154, %v1165
  %v1193 = vmul.f32 %v1155, %v1169
  %v1194 = vmul.f32 %v1156, %v1165
  %v1195 = vmul.f32 %v1157, %v1169
  %v1196 = vmul.f32 %v1158, %v1165
  %v1197 = vmul.f32 %v1159, %v1169
  %v1198 = vld [vmem:[%s4] sm:$0x3]
  %v1200 = vlaneseq
  %v1201 = vshrl.u32 %v1200, 7
  %v1202 = vsub.s32 0, %v1201
  %v1203 = vrot.slane %v1198, %v1202
  %v1204 = vlaneseq
  %v1205 = vshrl.u32 %v1204, 7
  %v1206 = vsub.s32 1, %v1205
  %v1207 = vrot.slane %v1198, %v1206
  %v1210 = vadd.f32 %v1172, %v1203
  %v1211 = vadd.f32 %v1173, %v1207
  %v1212 = vadd.f32 %v1174, %v1203
  %v1213 = vadd.f32 %v1175, %v1207
  %v1214 = vadd.f32 %v1176, %v1203
  %v1215 = vadd.f32 %v1177, %v1207
  %v1216 = vadd.f32 %v1178, %v1203
  %v1217 = vadd.f32 %v1179, %v1207
  %v1218 = vadd.f32 %v1180, %v1203
  %v1219 = vadd.f32 %v1181, %v1207
  %v1220 = vadd.f32 %v1182, %v1203
  %v1221 = vadd.f32 %v1183, %v1207
  %v1222 = vadd.f32 %v1184, %v1203
  %v1223 = vadd.f32 %v1185, %v1207
  %v1224 = vadd.f32 %v1186, %v1203
  %v1225 = vadd.f32 %v1187, %v1207
  %v1226 = vadd.f32 %v1188, %v1203
  %v1227 = vadd.f32 %v1189, %v1207
  %v1228 = vadd.f32 %v1190, %v1203
  %v1229 = vadd.f32 %v1191, %v1207
  %v1230 = vadd.f32 %v1192, %v1203
  %v1231 = vadd.f32 %v1193, %v1207
  %v1232 = vadd.f32 %v1194, %v1203
  %v1233 = vadd.f32 %v1195, %v1207
  %v1234 = vadd.f32 %v1196, %v1203
  %v1235 = vadd.f32 %v1197, %v1207
  %vm1236 = vcmp.ge.f32.partialorder %v1210, 0.0
  %vm1237 = vcmp.ge.f32.partialorder %v1211, 0.0
  %vm1238 = vcmp.ge.f32.partialorder %v1212, 0.0
  %vm1239 = vcmp.ge.f32.partialorder %v1213, 0.0
  %vm1240 = vcmp.ge.f32.partialorder %v1214, 0.0
  %vm1241 = vcmp.ge.f32.partialorder %v1215, 0.0
  %vm1242 = vcmp.ge.f32.partialorder %v1216, 0.0
  %vm1243 = vcmp.ge.f32.partialorder %v1217, 0.0
  %vm1244 = vcmp.ge.f32.partialorder %v1218, 0.0
  %vm1245 = vcmp.ge.f32.partialorder %v1219, 0.0
  %vm1246 = vcmp.ge.f32.partialorder %v1220, 0.0
  %vm1247 = vcmp.ge.f32.partialorder %v1221, 0.0
  %vm1248 = vcmp.ge.f32.partialorder %v1222, 0.0
  %vm1249 = vcmp.ge.f32.partialorder %v1223, 0.0
  %vm1250 = vcmp.ge.f32.partialorder %v1224, 0.0
  %vm1251 = vcmp.ge.f32.partialorder %v1225, 0.0
  %vm1252 = vcmp.ge.f32.partialorder %v1226, 0.0
  %vm1253 = vcmp.ge.f32.partialorder %v1227, 0.0
  %vm1254 = vcmp.ge.f32.partialorder %v1228, 0.0
  %vm1255 = vcmp.ge.f32.partialorder %v1229, 0.0
  %vm1256 = vcmp.ge.f32.partialorder %v1230, 0.0
  %vm1257 = vcmp.ge.f32.partialorder %v1231, 0.0
  %vm1258 = vcmp.ge.f32.partialorder %v1232, 0.0
  %vm1259 = vcmp.ge.f32.partialorder %v1233, 0.0
  %vm1260 = vcmp.ge.f32.partialorder %v1234, 0.0
  %vm1261 = vcmp.ge.f32.partialorder %v1235, 0.0
  %v1262 = vmul.f32 %v1210, 0.01
  %v1263 = vmul.f32 %v1211, 0.01
  %v1264 = vmul.f32 %v1212, 0.01
  %v1265 = vmul.f32 %v1213, 0.01
  %v1266 = vmul.f32 %v1214, 0.01
  %v1267 = vmul.f32 %v1215, 0.01
  %v1268 = vmul.f32 %v1216, 0.01
  %v1269 = vmul.f32 %v1217, 0.01
  %v1270 = vmul.f32 %v1218, 0.01
  %v1271 = vmul.f32 %v1219, 0.01
  %v1272 = vmul.f32 %v1220, 0.01
  %v1273 = vmul.f32 %v1221, 0.01
  %v1274 = vmul.f32 %v1222, 0.01
  %v1275 = vmul.f32 %v1223, 0.01
  %v1276 = vmul.f32 %v1224, 0.01
  %v1277 = vmul.f32 %v1225, 0.01
  %v1278 = vmul.f32 %v1226, 0.01
  %v1279 = vmul.f32 %v1227, 0.01
  %v1280 = vmul.f32 %v1228, 0.01
  %v1281 = vmul.f32 %v1229, 0.01
  %v1282 = vmul.f32 %v1230, 0.01
  %v1283 = vmul.f32 %v1231, 0.01
  %v1284 = vmul.f32 %v1232, 0.01
  %v1285 = vmul.f32 %v1233, 0.01
  %v1286 = vmul.f32 %v1234, 0.01
  %v1287 = vmul.f32 %v1235, 0.01
  %v1288 = vsel %vm1236, %v1210, %v1262
  %v1289 = vsel %vm1237, %v1211, %v1263
  %v1290 = vsel %vm1238, %v1212, %v1264
  %v1291 = vsel %vm1239, %v1213, %v1265
  %v1292 = vsel %vm1240, %v1214, %v1266
  %v1293 = vsel %vm1241, %v1215, %v1267
  %v1294 = vsel %vm1242, %v1216, %v1268
  %v1295 = vsel %vm1243, %v1217, %v1269
  %v1296 = vsel %vm1244, %v1218, %v1270
  %v1297 = vsel %vm1245, %v1219, %v1271
  %v1298 = vsel %vm1246, %v1220, %v1272
  %v1299 = vsel %vm1247, %v1221, %v1273
  %v1300 = vsel %vm1248, %v1222, %v1274
  %v1301 = vsel %vm1249, %v1223, %v1275
  %v1302 = vsel %vm1250, %v1224, %v1276
  %v1303 = vsel %vm1251, %v1225, %v1277
  %v1304 = vsel %vm1252, %v1226, %v1278
  %v1305 = vsel %vm1253, %v1227, %v1279
  %v1306 = vsel %vm1254, %v1228, %v1280
  %v1307 = vsel %vm1255, %v1229, %v1281
  %v1308 = vsel %vm1256, %v1230, %v1282
  %v1309 = vsel %vm1257, %v1231, %v1283
  %v1310 = vsel %vm1258, %v1232, %v1284
  %v1311 = vsel %vm1259, %v1233, %v1285
  %v1312 = vsel %vm1260, %v1234, %v1286
  %v1313 = vsel %vm1261, %v1235, %v1287
  %v1314 = vpack.c.bf16 %v1290, %v1288
  %v1315 = vpack.c.bf16 %v1291, %v1289
  %v1316 = vpack.c.bf16 %v1294, %v1292
  %v1317 = vpack.c.bf16 %v1295, %v1293
  %v1318 = vpack.c.bf16 %v1298, %v1296
  %v1319 = vpack.c.bf16 %v1299, %v1297
  %v1320 = vpack.c.bf16 %v1302, %v1300
  %v1321 = vpack.c.bf16 %v1303, %v1301
  %v1322 = vpack.c.bf16 %v1306, %v1304
  %v1323 = vpack.c.bf16 %v1307, %v1305
  %v1324 = vpack.c.bf16 %v1310, %v1308
  %v1325 = vpack.c.bf16 %v1311, %v1309
  %v1326 = vpack.c.bf16 %v1312, %v1312
  %v1327 = vpack.c.bf16 %v1313, %v1313
  %v1342 = vunpack.c.l.b16 %v1314
  %v1343 = vunpack.c.l.b16 %v1315
  %v1344 = vunpack.c.h.b16 %v1314
  %v1345 = vunpack.c.h.b16 %v1315
  %v1346 = vunpack.c.l.b16 %v1316
  %v1347 = vunpack.c.l.b16 %v1317
  %v1348 = vunpack.c.h.b16 %v1316
  %v1349 = vunpack.c.h.b16 %v1317
  %v1350 = vunpack.c.l.b16 %v1318
  %v1351 = vunpack.c.l.b16 %v1319
  %v1352 = vunpack.c.h.b16 %v1318
  %v1353 = vunpack.c.h.b16 %v1319
  %v1354 = vunpack.c.l.b16 %v1320
  %v1355 = vunpack.c.l.b16 %v1321
  %v1356 = vunpack.c.h.b16 %v1320
  %v1357 = vunpack.c.h.b16 %v1321
  %v1358 = vunpack.c.l.b16 %v1322
  %v1359 = vunpack.c.l.b16 %v1323
  %v1360 = vunpack.c.h.b16 %v1322
  %v1361 = vunpack.c.h.b16 %v1323
  %v1362 = vunpack.c.l.b16 %v1324
  %v1363 = vunpack.c.l.b16 %v1325
  %v1364 = vunpack.c.h.b16 %v1324
  %v1365 = vunpack.c.h.b16 %v1325
  %v1366 = vunpack.c.l.b16 %v1326
  %v1367 = vunpack.c.l.b16 %v1327
  %v1368 = vpack.c.b16 %v1343, %v1342
  %v1369 = vpack.c.b16 %v1345, %v1344
  %v1370 = vpack.c.b16 %v1347, %v1346
  %v1371 = vpack.c.b16 %v1349, %v1348
  %v1372 = vpack.c.b16 %v1351, %v1350
  %v1373 = vpack.c.b16 %v1353, %v1352
  %v1374 = vpack.c.b16 %v1355, %v1354
  %v1375 = vpack.c.b16 %v1357, %v1356
  %v1376 = vpack.c.b16 %v1359, %v1358
  %v1377 = vpack.c.b16 %v1361, %v1360
  %v1378 = vpack.c.b16 %v1363, %v1362
  %v1379 = vpack.c.b16 %v1365, %v1364
  %v1380 = vpack.c.b16 %v1367, %v1366
  %1394 = vst [vmem:[%s5] sm:$0xff] %v1368
  %1395 = vst [vmem:[%s5 + $0x8] sm:$0xff] %v1369
  %1396 = vst [vmem:[%s5 + $0x10] sm:$0xff] %v1370
  %1397 = vst [vmem:[%s5 + $0x18] sm:$0xff] %v1371
  %1398 = vst [vmem:[%s5 + $0x20] sm:$0xff] %v1372
  %1399 = vst [vmem:[%s5 + $0x28] sm:$0xff] %v1373
  %1400 = vst [vmem:[%s5 + $0x30] sm:$0xff] %v1374
  %1401 = vst [vmem:[%s5 + $0x38] sm:$0xff] %v1375
  %1402 = vst [vmem:[%s5 + $0x40] sm:$0xff] %v1376
  %1403 = vst [vmem:[%s5 + $0x48] sm:$0xff] %v1377
  %1404 = vst [vmem:[%s5 + $0x50] sm:$0xff] %v1378
  %1405 = vst [vmem:[%s5 + $0x58] sm:$0xff] %v1379
  %1406 = vst [vmem:[%s5 + $0x60] sm:$0x11] %v1380
  // Predicated region
  $region22: #{target_encode_generator_forward.4} parent=0 // pred_check
    _
  $region23: #{target_encode_generator_forward.4} parent=0 // pred_check_branch
    %1408 = sbr.rel (0) target = $region25
  $region24: #{target_encode_generator_forward.4} parent=0 // pred_region
    _
  $region25: #{target_encode_generator_forward.4} parent=0 // pred_fallthru
    _
  // Predicated region
  $region26: #{target_encode_generator_forward.4} parent=0 // pred_check
    _
  $region27: #{target_encode_generator_forward.4} parent=0 // pred_check_branch
    %1410 = sbr.rel (0) target = $region29
  $region28: #{target_encode_generator_forward.4} parent=0 // pred_region
    _
  $region29: #{target_encode_generator_forward.4} parent=0 // pred_fallthru
    _

// kernel: target_encode_generator_forward.5
$region0: #{target_encode_generator_forward.5}
  #allocation0 [shape = 'u32[]', space=smem, size = 0x4, offset = 0x4, fixed_abs, tag = 'smem constant byte address 0x4 - core index']
  #allocation1 [shape = 'u32[144,128]{1,0:T(1,128)}', space=vmem, size = 0x12000, scoped, tag = 'internal scratch']
  %s0 = inlined_call_operand.vmem [shape: bf16[32,2304], index: 0, kind: input, shape index: {}]
  %s1 = inlined_call_operand.vmem [shape: bf16[2304,512], index: 1, kind: input, shape index: {}]
  %s2 = inlined_call_operand.vmem [shape: f32[1,512], index: 2, kind: input, shape index: {}]
  %s3 = inlined_call_operand.vmem [shape: f32[1,512], index: 3, kind: input, shape index: {}]
  %s4 = inlined_call_operand.vmem [shape: f32[1,512], index: 4, kind: input, shape index: {}]
  %s5 = inlined_call_operand.vmem [shape: f32[32,512], index: 5, kind: output, shape index: {}]
  %s6 = sld [smem:[#allocation0]]
  $region30: #{target_encode_generator_forward.5} parent=0
    _
  %s8 = ssub.s32 1, %s6
  %s9 = scalar_select 0, %s8, %s6
  // Predicated region
  $region2: #{target_encode_generator_forward.5} parent=0 // pred_check
    _
  $region3: #{target_encode_generator_forward.5} parent=0 // pred_check_branch
    %11 = sbr.rel (0) target = $region5
  $region4: #{target_encode_generator_forward.5} parent=0 // pred_region
    _
  $region5: #{target_encode_generator_forward.5} parent=0 // pred_fallthru
    _
  // Predicated region
  $region6: #{target_encode_generator_forward.5} parent=0 // pred_check
    _
  $region7: #{target_encode_generator_forward.5} parent=0 // pred_check_branch
    %13 = sbr.rel (0) target = $region9
  $region8: #{target_encode_generator_forward.5} parent=0 // pred_region
    _
  $region9: #{target_encode_generator_forward.5} parent=0 // pred_fallthru
    _
  // Predicated region
  $region10: #{target_encode_generator_forward.5} parent=0 // pred_check
    _
  $region11: #{target_encode_generator_forward.5} parent=0 // pred_check_branch
    %15 = sbr.rel (0) target = $region13
  $region12: #{target_encode_generator_forward.5} parent=0 // pred_region
    _
  $region13: #{target_encode_generator_forward.5} parent=0 // pred_fallthru
    _
  // Predicated region
  $region14: #{target_encode_generator_forward.5} parent=0 // pred_check
    _
  $region15: #{target_encode_generator_forward.5} parent=0 // pred_check_branch
    %17 = sbr.rel (0) target = $region17
  $region16: #{target_encode_generator_forward.5} parent=0 // pred_region
    _
  $region17: #{target_encode_generator_forward.5} parent=0 // pred_fallthru
    _
  // Predicated region
  $region18: #{target_encode_generator_forward.5} parent=0 // pred_check
    _
  $region19: #{target_encode_generator_forward.5} parent=0 // pred_check_branch
    %19 = sbr.rel (0) target = $region21
  $region20: #{target_encode_generator_forward.5} parent=0 // pred_region
    _
  $region21: #{target_encode_generator_forward.5} parent=0 // pred_fallthru
    _
  %v20 = vld [vmem:[%s0] sm:$0xff]
  %v21 = vld [vmem:[%s0 + $0x8] sm:$0xff]
  %v22 = vld [vmem:[%s0 + $0x10] sm:$0xff]
  %v23 = vld [vmem:[%s0 + $0x18] sm:$0xff]
  %v24 = vld [vmem:[%s0 + $0x20] sm:$0xff]
  %v25 = vld [vmem:[%s0 + $0x28] sm:$0xff]
  %v26 = vld [vmem:[%s0 + $0x30] sm:$0xff]
  %v27 = vld [vmem:[%s0 + $0x38] sm:$0xff]
  %v28 = vld [vmem:[%s0 + $0x40] sm:$0xff]
  %v29 = vld [vmem:[%s0 + $0x48] sm:$0xff]
  %v30 = vld [vmem:[%s0 + $0x50] sm:$0xff]
  %v31 = vld [vmem:[%s0 + $0x58] sm:$0xff]
  %v32 = vld [vmem:[%s0 + $0x60] sm:$0xff]
  %v33 = vld [vmem:[%s0 + $0x68] sm:$0xff]
  %v34 = vld [vmem:[%s0 + $0x70] sm:$0xff]
  %v35 = vld [vmem:[%s0 + $0x78] sm:$0xff]
  %v36 = vld [vmem:[%s0 + $0x80] sm:$0xff]
  %v37 = vld [vmem:[%s0 + $0x88] sm:$0xff]
  %v38 = vld [vmem:[%s0 + $0x90] sm:$0xff]
  %v39 = vld [vmem:[%s0 + $0x98] sm:$0xff]
  %v40 = vld [vmem:[%s0 + $0xa0] sm:$0xff]
  %v41 = vld [vmem:[%s0 + $0xa8] sm:$0xff]
  %v42 = vld [vmem:[%s0 + $0xb0] sm:$0xff]
  %v43 = vld [vmem:[%s0 + $0xb8] sm:$0xff]
  %v44 = vld [vmem:[%s0 + $0xc0] sm:$0xff]
  %v45 = vld [vmem:[%s0 + $0xc8] sm:$0xff]
  %v46 = vld [vmem:[%s0 + $0xd0] sm:$0xff]
  %v47 = vld [vmem:[%s0 + $0xd8] sm:$0xff]
  %v48 = vld [vmem:[%s0 + $0xe0] sm:$0xff]
  %v49 = vld [vmem:[%s0 + $0xe8] sm:$0xff]
  %v50 = vld [vmem:[%s0 + $0xf0] sm:$0xff]
  %v51 = vld [vmem:[%s0 + $0xf8] sm:$0xff]
  %v52 = vld [vmem:[%s0 + $0x100] sm:$0xff]
  %v53 = vld [vmem:[%s0 + $0x108] sm:$0xff]
  %v54 = vld [vmem:[%s0 + $0x110] sm:$0xff]
  %v55 = vld [vmem:[%s0 + $0x118] sm:$0xff]
  %v56 = vld [vmem:[%s1] sm:$0xff]
  %v57 = vld [vmem:[%s1 + $0x8] sm:$0xff]
  %v58 = vld [vmem:[%s1 + $0x10] sm:$0xff]
  %v59 = vld [vmem:[%s1 + $0x18] sm:$0xff]
  %v60 = vld [vmem:[%s1 + $0x20] sm:$0xff]
  %v61 = vld [vmem:[%s1 + $0x28] sm:$0xff]
  %v62 = vld [vmem:[%s1 + $0x30] sm:$0xff]
  %v63 = vld [vmem:[%s1 + $0x38] sm:$0xff]
  %v64 = vld [vmem:[%s1 + $0x40] sm:$0xff]
  %v65 = vld [vmem:[%s1 + $0x48] sm:$0xff]
  %v66 = vld [vmem:[%s1 + $0x50] sm:$0xff]
  %v67 = vld [vmem:[%s1 + $0x58] sm:$0xff]
  %v68 = vld [vmem:[%s1 + $0x60] sm:$0xff]
  %v69 = vld [vmem:[%s1 + $0x68] sm:$0xff]
  %v70 = vld [vmem:[%s1 + $0x70] sm:$0xff]
  %v71 = vld [vmem:[%s1 + $0x78] sm:$0xff]
  %v72 = vld [vmem:[%s1 + $0x80] sm:$0xff]
  %v73 = vld [vmem:[%s1 + $0x88] sm:$0xff]
  %v74 = vld [vmem:[%s1 + $0x90] sm:$0xff]
  %v75 = vld [vmem:[%s1 + $0x98] sm:$0xff]
  %v76 = vld [vmem:[%s1 + $0xa0] sm:$0xff]
  %v77 = vld [vmem:[%s1 + $0xa8] sm:$0xff]
  %v78 = vld [vmem:[%s1 + $0xb0] sm:$0xff]
  %v79 = vld [vmem:[%s1 + $0xb8] sm:$0xff]
  %v80 = vld [vmem:[%s1 + $0xc0] sm:$0xff]
  %v81 = vld [vmem:[%s1 + $0xc8] sm:$0xff]
  %v82 = vld [vmem:[%s1 + $0xd0] sm:$0xff]
  %v83 = vld [vmem:[%s1 + $0xd8] sm:$0xff]
  %v84 = vld [vmem:[%s1 + $0xe0] sm:$0xff]
  %v85 = vld [vmem:[%s1 + $0xe8] sm:$0xff]
  %v86 = vld [vmem:[%s1 + $0xf0] sm:$0xff]
  %v87 = vld [vmem:[%s1 + $0xf8] sm:$0xff]
  %v88 = vld [vmem:[%s1 + $0x100] sm:$0xff]
  %v89 = vld [vmem:[%s1 + $0x108] sm:$0xff]
  %v90 = vld [vmem:[%s1 + $0x110] sm:$0xff]
  %v91 = vld [vmem:[%s1 + $0x118] sm:$0xff]
  %v92 = vld [vmem:[%s1 + $0x120] sm:$0xff]
  %v93 = vld [vmem:[%s1 + $0x128] sm:$0xff]
  %v94 = vld [vmem:[%s1 + $0x130] sm:$0xff]
  %v95 = vld [vmem:[%s1 + $0x138] sm:$0xff]
  %v96 = vld [vmem:[%s1 + $0x140] sm:$0xff]
  %v97 = vld [vmem:[%s1 + $0x148] sm:$0xff]
  %v98 = vld [vmem:[%s1 + $0x150] sm:$0xff]
  %v99 = vld [vmem:[%s1 + $0x158] sm:$0xff]
  %v100 = vld [vmem:[%s1 + $0x160] sm:$0xff]
  %v101 = vld [vmem:[%s1 + $0x168] sm:$0xff]
  %v102 = vld [vmem:[%s1 + $0x170] sm:$0xff]
  %v103 = vld [vmem:[%s1 + $0x178] sm:$0xff]
  %v104 = vld [vmem:[%s1 + $0x180] sm:$0xff]
  %v105 = vld [vmem:[%s1 + $0x188] sm:$0xff]
  %v106 = vld [vmem:[%s1 + $0x190] sm:$0xff]
  %v107 = vld [vmem:[%s1 + $0x198] sm:$0xff]
  %v108 = vld [vmem:[%s1 + $0x1a0] sm:$0xff]
  %v109 = vld [vmem:[%s1 + $0x1a8] sm:$0xff]
  %v110 = vld [vmem:[%s1 + $0x1b0] sm:$0xff]
  %v111 = vld [vmem:[%s1 + $0x1b8] sm:$0xff]
  %v112 = vld [vmem:[%s1 + $0x1c0] sm:$0xff]
  %v113 = vld [vmem:[%s1 + $0x1c8] sm:$0xff]
  %v114 = vld [vmem:[%s1 + $0x1d0] sm:$0xff]
  %v115 = vld [vmem:[%s1 + $0x1d8] sm:$0xff]
  %v116 = vld [vmem:[%s1 + $0x1e0] sm:$0xff]
  %v117 = vld [vmem:[%s1 + $0x1e8] sm:$0xff]
  %v118 = vld [vmem:[%s1 + $0x1f0] sm:$0xff]
  %v119 = vld [vmem:[%s1 + $0x1f8] sm:$0xff]
  %v120 = vld [vmem:[%s1 + $0x200] sm:$0xff]
  %v121 = vld [vmem:[%s1 + $0x208] sm:$0xff]
  %v122 = vld [vmem:[%s1 + $0x210] sm:$0xff]
  %v123 = vld [vmem:[%s1 + $0x218] sm:$0xff]
  %v124 = vld [vmem:[%s1 + $0x220] sm:$0xff]
  %v125 = vld [vmem:[%s1 + $0x228] sm:$0xff]
  %v126 = vld [vmem:[%s1 + $0x230] sm:$0xff]
  %v127 = vld [vmem:[%s1 + $0x238] sm:$0xff]
  %v128 = vld [vmem:[%s1 + $0x240] sm:$0xff]
  %v129 = vld [vmem:[%s1 + $0x248] sm:$0xff]
  %v130 = vld [vmem:[%s1 + $0x250] sm:$0xff]
  %v131 = vld [vmem:[%s1 + $0x258] sm:$0xff]
  %v132 = vld [vmem:[%s1 + $0x260] sm:$0xff]
  %v133 = vld [vmem:[%s1 + $0x268] sm:$0xff]
  %v134 = vld [vmem:[%s1 + $0x270] sm:$0xff]
  %v135 = vld [vmem:[%s1 + $0x278] sm:$0xff]
  %v136 = vld [vmem:[%s1 + $0x280] sm:$0xff]
  %v137 = vld [vmem:[%s1 + $0x288] sm:$0xff]
  %v138 = vld [vmem:[%s1 + $0x290] sm:$0xff]
  %v139 = vld [vmem:[%s1 + $0x298] sm:$0xff]
  %v140 = vld [vmem:[%s1 + $0x2a0] sm:$0xff]
  %v141 = vld [vmem:[%s1 + $0x2a8] sm:$0xff]
  %v142 = vld [vmem:[%s1 + $0x2b0] sm:$0xff]
  %v143 = vld [vmem:[%s1 + $0x2b8] sm:$0xff]
  %v144 = vld [vmem:[%s1 + $0x2c0] sm:$0xff]
  %v145 = vld [vmem:[%s1 + $0x2c8] sm:$0xff]
  %v146 = vld [vmem:[%s1 + $0x2d0] sm:$0xff]
  %v147 = vld [vmem:[%s1 + $0x2d8] sm:$0xff]
  %v148 = vld [vmem:[%s1 + $0x2e0] sm:$0xff]
  %v149 = vld [vmem:[%s1 + $0x2e8] sm:$0xff]
  %v150 = vld [vmem:[%s1 + $0x2f0] sm:$0xff]
  %v151 = vld [vmem:[%s1 + $0x2f8] sm:$0xff]
  %v152 = vld [vmem:[%s1 + $0x300] sm:$0xff]
  %v153 = vld [vmem:[%s1 + $0x308] sm:$0xff]
  %v154 = vld [vmem:[%s1 + $0x310] sm:$0xff]
  %v155 = vld [vmem:[%s1 + $0x318] sm:$0xff]
  %v156 = vld [vmem:[%s1 + $0x320] sm:$0xff]
  %v157 = vld [vmem:[%s1 + $0x328] sm:$0xff]
  %v158 = vld [vmem:[%s1 + $0x330] sm:$0xff]
  %v159 = vld [vmem:[%s1 + $0x338] sm:$0xff]
  %v160 = vld [vmem:[%s1 + $0x340] sm:$0xff]
  %v161 = vld [vmem:[%s1 + $0x348] sm:$0xff]
  %v162 = vld [vmem:[%s1 + $0x350] sm:$0xff]
  %v163 = vld [vmem:[%s1 + $0x358] sm:$0xff]
  %v164 = vld [vmem:[%s1 + $0x360] sm:$0xff]
  %v165 = vld [vmem:[%s1 + $0x368] sm:$0xff]
  %v166 = vld [vmem:[%s1 + $0x370] sm:$0xff]
  %v167 = vld [vmem:[%s1 + $0x378] sm:$0xff]
  %v168 = vld [vmem:[%s1 + $0x380] sm:$0xff]
  %v169 = vld [vmem:[%s1 + $0x388] sm:$0xff]
  %v170 = vld [vmem:[%s1 + $0x390] sm:$0xff]
  %v171 = vld [vmem:[%s1 + $0x398] sm:$0xff]
  %v172 = vld [vmem:[%s1 + $0x3a0] sm:$0xff]
  %v173 = vld [vmem:[%s1 + $0x3a8] sm:$0xff]
  %v174 = vld [vmem:[%s1 + $0x3b0] sm:$0xff]
  %v175 = vld [vmem:[%s1 + $0x3b8] sm:$0xff]
  %v176 = vld [vmem:[%s1 + $0x3c0] sm:$0xff]
  %v177 = vld [vmem:[%s1 + $0x3c8] sm:$0xff]
  %v178 = vld [vmem:[%s1 + $0x3d0] sm:$0xff]
  %v179 = vld [vmem:[%s1 + $0x3d8] sm:$0xff]
  %v180 = vld [vmem:[%s1 + $0x3e0] sm:$0xff]
  %v181 = vld [vmem:[%s1 + $0x3e8] sm:$0xff]
  %v182 = vld [vmem:[%s1 + $0x3f0] sm:$0xff]
  %v183 = vld [vmem:[%s1 + $0x3f8] sm:$0xff]
  %v184 = vld [vmem:[%s1 + $0x400] sm:$0xff]
  %v185 = vld [vmem:[%s1 + $0x408] sm:$0xff]
  %v186 = vld [vmem:[%s1 + $0x410] sm:$0xff]
  %v187 = vld [vmem:[%s1 + $0x418] sm:$0xff]
  %v188 = vld [vmem:[%s1 + $0x420] sm:$0xff]
  %v189 = vld [vmem:[%s1 + $0x428] sm:$0xff]
  %v190 = vld [vmem:[%s1 + $0x430] sm:$0xff]
  %v191 = vld [vmem:[%s1 + $0x438] sm:$0xff]
  %v192 = vld [vmem:[%s1 + $0x440] sm:$0xff]
  %v193 = vld [vmem:[%s1 + $0x448] sm:$0xff]
  %v194 = vld [vmem:[%s1 + $0x450] sm:$0xff]
  %v195 = vld [vmem:[%s1 + $0x458] sm:$0xff]
  %v196 = vld [vmem:[%s1 + $0x460] sm:$0xff]
  %v197 = vld [vmem:[%s1 + $0x468] sm:$0xff]
  %v198 = vld [vmem:[%s1 + $0x470] sm:$0xff]
  %v199 = vld [vmem:[%s1 + $0x478] sm:$0xff]
  %v200 = vld [vmem:[%s1 + $0x480] sm:$0xff]
  %v201 = vld [vmem:[%s1 + $0x488] sm:$0xff]
  %v202 = vld [vmem:[%s1 + $0x490] sm:$0xff]
  %v203 = vld [vmem:[%s1 + $0x498] sm:$0xff]
  %v204 = vld [vmem:[%s1 + $0x4a0] sm:$0xff]
  %v205 = vld [vmem:[%s1 + $0x4a8] sm:$0xff]
  %v206 = vld [vmem:[%s1 + $0x4b0] sm:$0xff]
  %v207 = vld [vmem:[%s1 + $0x4b8] sm:$0xff]
  %v208 = vld [vmem:[%s1 + $0x4c0] sm:$0xff]
  %v209 = vld [vmem:[%s1 + $0x4c8] sm:$0xff]
  %v210 = vld [vmem:[%s1 + $0x4d0] sm:$0xff]
  %v211 = vld [vmem:[%s1 + $0x4d8] sm:$0xff]
  %v212 = vld [vmem:[%s1 + $0x4e0] sm:$0xff]
  %v213 = vld [vmem:[%s1 + $0x4e8] sm:$0xff]
  %v214 = vld [vmem:[%s1 + $0x4f0] sm:$0xff]
  %v215 = vld [vmem:[%s1 + $0x4f8] sm:$0xff]
  %v216 = vld [vmem:[%s1 + $0x500] sm:$0xff]
  %v217 = vld [vmem:[%s1 + $0x508] sm:$0xff]
  %v218 = vld [vmem:[%s1 + $0x510] sm:$0xff]
  %v219 = vld [vmem:[%s1 + $0x518] sm:$0xff]
  %v220 = vld [vmem:[%s1 + $0x520] sm:$0xff]
  %v221 = vld [vmem:[%s1 + $0x528] sm:$0xff]
  %v222 = vld [vmem:[%s1 + $0x530] sm:$0xff]
  %v223 = vld [vmem:[%s1 + $0x538] sm:$0xff]
  %v224 = vld [vmem:[%s1 + $0x540] sm:$0xff]
  %v225 = vld [vmem:[%s1 + $0x548] sm:$0xff]
  %v226 = vld [vmem:[%s1 + $0x550] sm:$0xff]
  %v227 = vld [vmem:[%s1 + $0x558] sm:$0xff]
  %v228 = vld [vmem:[%s1 + $0x560] sm:$0xff]
  %v229 = vld [vmem:[%s1 + $0x568] sm:$0xff]
  %v230 = vld [vmem:[%s1 + $0x570] sm:$0xff]
  %v231 = vld [vmem:[%s1 + $0x578] sm:$0xff]
  %v232 = vld [vmem:[%s1 + $0x580] sm:$0xff]
  %v233 = vld [vmem:[%s1 + $0x588] sm:$0xff]
  %v234 = vld [vmem:[%s1 + $0x590] sm:$0xff]
  %v235 = vld [vmem:[%s1 + $0x598] sm:$0xff]
  %v236 = vld [vmem:[%s1 + $0x5a0] sm:$0xff]
  %v237 = vld [vmem:[%s1 + $0x5a8] sm:$0xff]
  %v238 = vld [vmem:[%s1 + $0x5b0] sm:$0xff]
  %v239 = vld [vmem:[%s1 + $0x5b8] sm:$0xff]
  %v240 = vld [vmem:[%s1 + $0x5c0] sm:$0xff]
  %v241 = vld [vmem:[%s1 + $0x5c8] sm:$0xff]
  %v242 = vld [vmem:[%s1 + $0x5d0] sm:$0xff]
  %v243 = vld [vmem:[%s1 + $0x5d8] sm:$0xff]
  %v244 = vld [vmem:[%s1 + $0x5e0] sm:$0xff]
  %v245 = vld [vmem:[%s1 + $0x5e8] sm:$0xff]
  %v246 = vld [vmem:[%s1 + $0x5f0] sm:$0xff]
  %v247 = vld [vmem:[%s1 + $0x5f8] sm:$0xff]
  %v248 = vld [vmem:[%s1 + $0x600] sm:$0xff]
  %v249 = vld [vmem:[%s1 + $0x608] sm:$0xff]
  %v250 = vld [vmem:[%s1 + $0x610] sm:$0xff]
  %v251 = vld [vmem:[%s1 + $0x618] sm:$0xff]
  %v252 = vld [vmem:[%s1 + $0x620] sm:$0xff]
  %v253 = vld [vmem:[%s1 + $0x628] sm:$0xff]
  %v254 = vld [vmem:[%s1 + $0x630] sm:$0xff]
  %v255 = vld [vmem:[%s1 + $0x638] sm:$0xff]
  %v256 = vld [vmem:[%s1 + $0x640] sm:$0xff]
  %v257 = vld [vmem:[%s1 + $0x648] sm:$0xff]
  %v258 = vld [vmem:[%s1 + $0x650] sm:$0xff]
  %v259 = vld [vmem:[%s1 + $0x658] sm:$0xff]
  %v260 = vld [vmem:[%s1 + $0x660] sm:$0xff]
  %v261 = vld [vmem:[%s1 + $0x668] sm:$0xff]
  %v262 = vld [vmem:[%s1 + $0x670] sm:$0xff]
  %v263 = vld [vmem:[%s1 + $0x678] sm:$0xff]
  %v264 = vld [vmem:[%s1 + $0x680] sm:$0xff]
  %v265 = vld [vmem:[%s1 + $0x688] sm:$0xff]
  %v266 = vld [vmem:[%s1 + $0x690] sm:$0xff]
  %v267 = vld [vmem:[%s1 + $0x698] sm:$0xff]
  %v268 = vld [vmem:[%s1 + $0x6a0] sm:$0xff]
  %v269 = vld [vmem:[%s1 + $0x6a8] sm:$0xff]
  %v270 = vld [vmem:[%s1 + $0x6b0] sm:$0xff]
  %v271 = vld [vmem:[%s1 + $0x6b8] sm:$0xff]
  %v272 = vld [vmem:[%s1 + $0x6c0] sm:$0xff]
  %v273 = vld [vmem:[%s1 + $0x6c8] sm:$0xff]
  %v274 = vld [vmem:[%s1 + $0x6d0] sm:$0xff]
  %v275 = vld [vmem:[%s1 + $0x6d8] sm:$0xff]
  %v276 = vld [vmem:[%s1 + $0x6e0] sm:$0xff]
  %v277 = vld [vmem:[%s1 + $0x6e8] sm:$0xff]
  %v278 = vld [vmem:[%s1 + $0x6f0] sm:$0xff]
  %v279 = vld [vmem:[%s1 + $0x6f8] sm:$0xff]
  %v280 = vld [vmem:[%s1 + $0x700] sm:$0xff]
  %v281 = vld [vmem:[%s1 + $0x708] sm:$0xff]
  %v282 = vld [vmem:[%s1 + $0x710] sm:$0xff]
  %v283 = vld [vmem:[%s1 + $0x718] sm:$0xff]
  %v284 = vld [vmem:[%s1 + $0x720] sm:$0xff]
  %v285 = vld [vmem:[%s1 + $0x728] sm:$0xff]
  %v286 = vld [vmem:[%s1 + $0x730] sm:$0xff]
  %v287 = vld [vmem:[%s1 + $0x738] sm:$0xff]
  %v288 = vld [vmem:[%s1 + $0x740] sm:$0xff]
  %v289 = vld [vmem:[%s1 + $0x748] sm:$0xff]
  %v290 = vld [vmem:[%s1 + $0x750] sm:$0xff]
  %v291 = vld [vmem:[%s1 + $0x758] sm:$0xff]
  %v292 = vld [vmem:[%s1 + $0x760] sm:$0xff]
  %v293 = vld [vmem:[%s1 + $0x768] sm:$0xff]
  %v294 = vld [vmem:[%s1 + $0x770] sm:$0xff]
  %v295 = vld [vmem:[%s1 + $0x778] sm:$0xff]
  %v296 = vld [vmem:[%s1 + $0x780] sm:$0xff]
  %v297 = vld [vmem:[%s1 + $0x788] sm:$0xff]
  %v298 = vld [vmem:[%s1 + $0x790] sm:$0xff]
  %v299 = vld [vmem:[%s1 + $0x798] sm:$0xff]
  %v300 = vld [vmem:[%s1 + $0x7a0] sm:$0xff]
  %v301 = vld [vmem:[%s1 + $0x7a8] sm:$0xff]
  %v302 = vld [vmem:[%s1 + $0x7b0] sm:$0xff]
  %v303 = vld [vmem:[%s1 + $0x7b8] sm:$0xff]
  %v304 = vld [vmem:[%s1 + $0x7c0] sm:$0xff]
  %v305 = vld [vmem:[%s1 + $0x7c8] sm:$0xff]
  %v306 = vld [vmem:[%s1 + $0x7d0] sm:$0xff]
  %v307 = vld [vmem:[%s1 + $0x7d8] sm:$0xff]
  %v308 = vld [vmem:[%s1 + $0x7e0] sm:$0xff]
  %v309 = vld [vmem:[%s1 + $0x7e8] sm:$0xff]
  %v310 = vld [vmem:[%s1 + $0x7f0] sm:$0xff]
  %v311 = vld [vmem:[%s1 + $0x7f8] sm:$0xff]
  %v312 = vld [vmem:[%s1 + $0x800] sm:$0xff]
  %v313 = vld [vmem:[%s1 + $0x808] sm:$0xff]
  %v314 = vld [vmem:[%s1 + $0x810] sm:$0xff]
  %v315 = vld [vmem:[%s1 + $0x818] sm:$0xff]
  %v316 = vld [vmem:[%s1 + $0x820] sm:$0xff]
  %v317 = vld [vmem:[%s1 + $0x828] sm:$0xff]
  %v318 = vld [vmem:[%s1 + $0x830] sm:$0xff]
  %v319 = vld [vmem:[%s1 + $0x838] sm:$0xff]
  %v320 = vld [vmem:[%s1 + $0x840] sm:$0xff]
  %v321 = vld [vmem:[%s1 + $0x848] sm:$0xff]
  %v322 = vld [vmem:[%s1 + $0x850] sm:$0xff]
  %v323 = vld [vmem:[%s1 + $0x858] sm:$0xff]
  %v324 = vld [vmem:[%s1 + $0x860] sm:$0xff]
  %v325 = vld [vmem:[%s1 + $0x868] sm:$0xff]
  %v326 = vld [vmem:[%s1 + $0x870] sm:$0xff]
  %v327 = vld [vmem:[%s1 + $0x878] sm:$0xff]
  %v328 = vld [vmem:[%s1 + $0x880] sm:$0xff]
  %v329 = vld [vmem:[%s1 + $0x888] sm:$0xff]
  %v330 = vld [vmem:[%s1 + $0x890] sm:$0xff]
  %v331 = vld [vmem:[%s1 + $0x898] sm:$0xff]
  %v332 = vld [vmem:[%s1 + $0x8a0] sm:$0xff]
  %v333 = vld [vmem:[%s1 + $0x8a8] sm:$0xff]
  %v334 = vld [vmem:[%s1 + $0x8b0] sm:$0xff]
  %v335 = vld [vmem:[%s1 + $0x8b8] sm:$0xff]
  %v336 = vld [vmem:[%s1 + $0x8c0] sm:$0xff]
  %v337 = vld [vmem:[%s1 + $0x8c8] sm:$0xff]
  %v338 = vld [vmem:[%s1 + $0x8d0] sm:$0xff]
  %v339 = vld [vmem:[%s1 + $0x8d8] sm:$0xff]
  %v340 = vld [vmem:[%s1 + $0x8e0] sm:$0xff]
  %v341 = vld [vmem:[%s1 + $0x8e8] sm:$0xff]
  %v342 = vld [vmem:[%s1 + $0x8f0] sm:$0xff]
  %v343 = vld [vmem:[%s1 + $0x8f8] sm:$0xff]
  %v344 = vld [vmem:[%s1 + $0x900] sm:$0xff]
  %v345 = vld [vmem:[%s1 + $0x908] sm:$0xff]
  %v346 = vld [vmem:[%s1 + $0x910] sm:$0xff]
  %v347 = vld [vmem:[%s1 + $0x918] sm:$0xff]
  %v348 = vld [vmem:[%s1 + $0x920] sm:$0xff]
  %v349 = vld [vmem:[%s1 + $0x928] sm:$0xff]
  %v350 = vld [vmem:[%s1 + $0x930] sm:$0xff]
  %v351 = vld [vmem:[%s1 + $0x938] sm:$0xff]
  %v352 = vld [vmem:[%s1 + $0x940] sm:$0xff]
  %v353 = vld [vmem:[%s1 + $0x948] sm:$0xff]
  %v354 = vld [vmem:[%s1 + $0x950] sm:$0xff]
  %v355 = vld [vmem:[%s1 + $0x958] sm:$0xff]
  %v356 = vld [vmem:[%s1 + $0x960] sm:$0xff]
  %v357 = vld [vmem:[%s1 + $0x968] sm:$0xff]
  %v358 = vld [vmem:[%s1 + $0x970] sm:$0xff]
  %v359 = vld [vmem:[%s1 + $0x978] sm:$0xff]
  %v360 = vld [vmem:[%s1 + $0x980] sm:$0xff]
  %v361 = vld [vmem:[%s1 + $0x988] sm:$0xff]
  %v362 = vld [vmem:[%s1 + $0x990] sm:$0xff]
  %v363 = vld [vmem:[%s1 + $0x998] sm:$0xff]
  %v364 = vld [vmem:[%s1 + $0x9a0] sm:$0xff]
  %v365 = vld [vmem:[%s1 + $0x9a8] sm:$0xff]
  %v366 = vld [vmem:[%s1 + $0x9b0] sm:$0xff]
  %v367 = vld [vmem:[%s1 + $0x9b8] sm:$0xff]
  %v368 = vld [vmem:[%s1 + $0x9c0] sm:$0xff]
  %v369 = vld [vmem:[%s1 + $0x9c8] sm:$0xff]
  %v370 = vld [vmem:[%s1 + $0x9d0] sm:$0xff]
  %v371 = vld [vmem:[%s1 + $0x9d8] sm:$0xff]
  %v372 = vld [vmem:[%s1 + $0x9e0] sm:$0xff]
  %v373 = vld [vmem:[%s1 + $0x9e8] sm:$0xff]
  %v374 = vld [vmem:[%s1 + $0x9f0] sm:$0xff]
  %v375 = vld [vmem:[%s1 + $0x9f8] sm:$0xff]
  %v376 = vld [vmem:[%s1 + $0xa00] sm:$0xff]
  %v377 = vld [vmem:[%s1 + $0xa08] sm:$0xff]
  %v378 = vld [vmem:[%s1 + $0xa10] sm:$0xff]
  %v379 = vld [vmem:[%s1 + $0xa18] sm:$0xff]
  %v380 = vld [vmem:[%s1 + $0xa20] sm:$0xff]
  %v381 = vld [vmem:[%s1 + $0xa28] sm:$0xff]
  %v382 = vld [vmem:[%s1 + $0xa30] sm:$0xff]
  %v383 = vld [vmem:[%s1 + $0xa38] sm:$0xff]
  %v384 = vld [vmem:[%s1 + $0xa40] sm:$0xff]
  %v385 = vld [vmem:[%s1 + $0xa48] sm:$0xff]
  %v386 = vld [vmem:[%s1 + $0xa50] sm:$0xff]
  %v387 = vld [vmem:[%s1 + $0xa58] sm:$0xff]
  %v388 = vld [vmem:[%s1 + $0xa60] sm:$0xff]
  %v389 = vld [vmem:[%s1 + $0xa68] sm:$0xff]
  %v390 = vld [vmem:[%s1 + $0xa70] sm:$0xff]
  %v391 = vld [vmem:[%s1 + $0xa78] sm:$0xff]
  %v392 = vld [vmem:[%s1 + $0xa80] sm:$0xff]
  %v393 = vld [vmem:[%s1 + $0xa88] sm:$0xff]
  %v394 = vld [vmem:[%s1 + $0xa90] sm:$0xff]
  %v395 = vld [vmem:[%s1 + $0xa98] sm:$0xff]
  %v396 = vld [vmem:[%s1 + $0xaa0] sm:$0xff]
  %v397 = vld [vmem:[%s1 + $0xaa8] sm:$0xff]
  %v398 = vld [vmem:[%s1 + $0xab0] sm:$0xff]
  %v399 = vld [vmem:[%s1 + $0xab8] sm:$0xff]
  %v400 = vld [vmem:[%s1 + $0xac0] sm:$0xff]
  %v401 = vld [vmem:[%s1 + $0xac8] sm:$0xff]
  %v402 = vld [vmem:[%s1 + $0xad0] sm:$0xff]
  %v403 = vld [vmem:[%s1 + $0xad8] sm:$0xff]
  %v404 = vld [vmem:[%s1 + $0xae0] sm:$0xff]
  %v405 = vld [vmem:[%s1 + $0xae8] sm:$0xff]
  %v406 = vld [vmem:[%s1 + $0xaf0] sm:$0xff]
  %v407 = vld [vmem:[%s1 + $0xaf8] sm:$0xff]
  %v408 = vld [vmem:[%s1 + $0xb00] sm:$0xff]
  %v409 = vld [vmem:[%s1 + $0xb08] sm:$0xff]
  %v410 = vld [vmem:[%s1 + $0xb10] sm:$0xff]
  %v411 = vld [vmem:[%s1 + $0xb18] sm:$0xff]
  %v412 = vld [vmem:[%s1 + $0xb20] sm:$0xff]
  %v413 = vld [vmem:[%s1 + $0xb28] sm:$0xff]
  %v414 = vld [vmem:[%s1 + $0xb30] sm:$0xff]
  %v415 = vld [vmem:[%s1 + $0xb38] sm:$0xff]
  %v416 = vld [vmem:[%s1 + $0xb40] sm:$0xff]
  %v417 = vld [vmem:[%s1 + $0xb48] sm:$0xff]
  %v418 = vld [vmem:[%s1 + $0xb50] sm:$0xff]
  %v419 = vld [vmem:[%s1 + $0xb58] sm:$0xff]
  %v420 = vld [vmem:[%s1 + $0xb60] sm:$0xff]
  %v421 = vld [vmem:[%s1 + $0xb68] sm:$0xff]
  %v422 = vld [vmem:[%s1 + $0xb70] sm:$0xff]
  %v423 = vld [vmem:[%s1 + $0xb78] sm:$0xff]
  %v424 = vld [vmem:[%s1 + $0xb80] sm:$0xff]
  %v425 = vld [vmem:[%s1 + $0xb88] sm:$0xff]
  %v426 = vld [vmem:[%s1 + $0xb90] sm:$0xff]
  %v427 = vld [vmem:[%s1 + $0xb98] sm:$0xff]
  %v428 = vld [vmem:[%s1 + $0xba0] sm:$0xff]
  %v429 = vld [vmem:[%s1 + $0xba8] sm:$0xff]
  %v430 = vld [vmem:[%s1 + $0xbb0] sm:$0xff]
  %v431 = vld [vmem:[%s1 + $0xbb8] sm:$0xff]
  %v432 = vld [vmem:[%s1 + $0xbc0] sm:$0xff]
  %v433 = vld [vmem:[%s1 + $0xbc8] sm:$0xff]
  %v434 = vld [vmem:[%s1 + $0xbd0] sm:$0xff]
  %v435 = vld [vmem:[%s1 + $0xbd8] sm:$0xff]
  %v436 = vld [vmem:[%s1 + $0xbe0] sm:$0xff]
  %v437 = vld [vmem:[%s1 + $0xbe8] sm:$0xff]
  %v438 = vld [vmem:[%s1 + $0xbf0] sm:$0xff]
  %v439 = vld [vmem:[%s1 + $0xbf8] sm:$0xff]
  %v440 = vld [vmem:[%s1 + $0xc00] sm:$0xff]
  %v441 = vld [vmem:[%s1 + $0xc08] sm:$0xff]
  %v442 = vld [vmem:[%s1 + $0xc10] sm:$0xff]
  %v443 = vld [vmem:[%s1 + $0xc18] sm:$0xff]
  %v444 = vld [vmem:[%s1 + $0xc20] sm:$0xff]
  %v445 = vld [vmem:[%s1 + $0xc28] sm:$0xff]
  %v446 = vld [vmem:[%s1 + $0xc30] sm:$0xff]
  %v447 = vld [vmem:[%s1 + $0xc38] sm:$0xff]
  %v448 = vld [vmem:[%s1 + $0xc40] sm:$0xff]
  %v449 = vld [vmem:[%s1 + $0xc48] sm:$0xff]
  %v450 = vld [vmem:[%s1 + $0xc50] sm:$0xff]
  %v451 = vld [vmem:[%s1 + $0xc58] sm:$0xff]
  %v452 = vld [vmem:[%s1 + $0xc60] sm:$0xff]
  %v453 = vld [vmem:[%s1 + $0xc68] sm:$0xff]
  %v454 = vld [vmem:[%s1 + $0xc70] sm:$0xff]
  %v455 = vld [vmem:[%s1 + $0xc78] sm:$0xff]
  %v456 = vld [vmem:[%s1 + $0xc80] sm:$0xff]
  %v457 = vld [vmem:[%s1 + $0xc88] sm:$0xff]
  %v458 = vld [vmem:[%s1 + $0xc90] sm:$0xff]
  %v459 = vld [vmem:[%s1 + $0xc98] sm:$0xff]
  %v460 = vld [vmem:[%s1 + $0xca0] sm:$0xff]
  %v461 = vld [vmem:[%s1 + $0xca8] sm:$0xff]
  %v462 = vld [vmem:[%s1 + $0xcb0] sm:$0xff]
  %v463 = vld [vmem:[%s1 + $0xcb8] sm:$0xff]
  %v464 = vld [vmem:[%s1 + $0xcc0] sm:$0xff]
  %v465 = vld [vmem:[%s1 + $0xcc8] sm:$0xff]
  %v466 = vld [vmem:[%s1 + $0xcd0] sm:$0xff]
  %v467 = vld [vmem:[%s1 + $0xcd8] sm:$0xff]
  %v468 = vld [vmem:[%s1 + $0xce0] sm:$0xff]
  %v469 = vld [vmem:[%s1 + $0xce8] sm:$0xff]
  %v470 = vld [vmem:[%s1 + $0xcf0] sm:$0xff]
  %v471 = vld [vmem:[%s1 + $0xcf8] sm:$0xff]
  %v472 = vld [vmem:[%s1 + $0xd00] sm:$0xff]
  %v473 = vld [vmem:[%s1 + $0xd08] sm:$0xff]
  %v474 = vld [vmem:[%s1 + $0xd10] sm:$0xff]
  %v475 = vld [vmem:[%s1 + $0xd18] sm:$0xff]
  %v476 = vld [vmem:[%s1 + $0xd20] sm:$0xff]
  %v477 = vld [vmem:[%s1 + $0xd28] sm:$0xff]
  %v478 = vld [vmem:[%s1 + $0xd30] sm:$0xff]
  %v479 = vld [vmem:[%s1 + $0xd38] sm:$0xff]
  %v480 = vld [vmem:[%s1 + $0xd40] sm:$0xff]
  %v481 = vld [vmem:[%s1 + $0xd48] sm:$0xff]
  %v482 = vld [vmem:[%s1 + $0xd50] sm:$0xff]
  %v483 = vld [vmem:[%s1 + $0xd58] sm:$0xff]
  %v484 = vld [vmem:[%s1 + $0xd60] sm:$0xff]
  %v485 = vld [vmem:[%s1 + $0xd68] sm:$0xff]
  %v486 = vld [vmem:[%s1 + $0xd70] sm:$0xff]
  %v487 = vld [vmem:[%s1 + $0xd78] sm:$0xff]
  %v488 = vld [vmem:[%s1 + $0xd80] sm:$0xff]
  %v489 = vld [vmem:[%s1 + $0xd88] sm:$0xff]
  %v490 = vld [vmem:[%s1 + $0xd90] sm:$0xff]
  %v491 = vld [vmem:[%s1 + $0xd98] sm:$0xff]
  %v492 = vld [vmem:[%s1 + $0xda0] sm:$0xff]
  %v493 = vld [vmem:[%s1 + $0xda8] sm:$0xff]
  %v494 = vld [vmem:[%s1 + $0xdb0] sm:$0xff]
  %v495 = vld [vmem:[%s1 + $0xdb8] sm:$0xff]
  %v496 = vld [vmem:[%s1 + $0xdc0] sm:$0xff]
  %v497 = vld [vmem:[%s1 + $0xdc8] sm:$0xff]
  %v498 = vld [vmem:[%s1 + $0xdd0] sm:$0xff]
  %v499 = vld [vmem:[%s1 + $0xdd8] sm:$0xff]
  %v500 = vld [vmem:[%s1 + $0xde0] sm:$0xff]
  %v501 = vld [vmem:[%s1 + $0xde8] sm:$0xff]
  %v502 = vld [vmem:[%s1 + $0xdf0] sm:$0xff]
  %v503 = vld [vmem:[%s1 + $0xdf8] sm:$0xff]
  %v504 = vld [vmem:[%s1 + $0xe00] sm:$0xff]
  %v505 = vld [vmem:[%s1 + $0xe08] sm:$0xff]
  %v506 = vld [vmem:[%s1 + $0xe10] sm:$0xff]
  %v507 = vld [vmem:[%s1 + $0xe18] sm:$0xff]
  %v508 = vld [vmem:[%s1 + $0xe20] sm:$0xff]
  %v509 = vld [vmem:[%s1 + $0xe28] sm:$0xff]
  %v510 = vld [vmem:[%s1 + $0xe30] sm:$0xff]
  %v511 = vld [vmem:[%s1 + $0xe38] sm:$0xff]
  %v512 = vld [vmem:[%s1 + $0xe40] sm:$0xff]
  %v513 = vld [vmem:[%s1 + $0xe48] sm:$0xff]
  %v514 = vld [vmem:[%s1 + $0xe50] sm:$0xff]
  %v515 = vld [vmem:[%s1 + $0xe58] sm:$0xff]
  %v516 = vld [vmem:[%s1 + $0xe60] sm:$0xff]
  %v517 = vld [vmem:[%s1 + $0xe68] sm:$0xff]
  %v518 = vld [vmem:[%s1 + $0xe70] sm:$0xff]
  %v519 = vld [vmem:[%s1 + $0xe78] sm:$0xff]
  %v520 = vld [vmem:[%s1 + $0xe80] sm:$0xff]
  %v521 = vld [vmem:[%s1 + $0xe88] sm:$0xff]
  %v522 = vld [vmem:[%s1 + $0xe90] sm:$0xff]
  %v523 = vld [vmem:[%s1 + $0xe98] sm:$0xff]
  %v524 = vld [vmem:[%s1 + $0xea0] sm:$0xff]
  %v525 = vld [vmem:[%s1 + $0xea8] sm:$0xff]
  %v526 = vld [vmem:[%s1 + $0xeb0] sm:$0xff]
  %v527 = vld [vmem:[%s1 + $0xeb8] sm:$0xff]
  %v528 = vld [vmem:[%s1 + $0xec0] sm:$0xff]
  %v529 = vld [vmem:[%s1 + $0xec8] sm:$0xff]
  %v530 = vld [vmem:[%s1 + $0xed0] sm:$0xff]
  %v531 = vld [vmem:[%s1 + $0xed8] sm:$0xff]
  %v532 = vld [vmem:[%s1 + $0xee0] sm:$0xff]
  %v533 = vld [vmem:[%s1 + $0xee8] sm:$0xff]
  %v534 = vld [vmem:[%s1 + $0xef0] sm:$0xff]
  %v535 = vld [vmem:[%s1 + $0xef8] sm:$0xff]
  %v536 = vld [vmem:[%s1 + $0xf00] sm:$0xff]
  %v537 = vld [vmem:[%s1 + $0xf08] sm:$0xff]
  %v538 = vld [vmem:[%s1 + $0xf10] sm:$0xff]
  %v539 = vld [vmem:[%s1 + $0xf18] sm:$0xff]
  %v540 = vld [vmem:[%s1 + $0xf20] sm:$0xff]
  %v541 = vld [vmem:[%s1 + $0xf28] sm:$0xff]
  %v542 = vld [vmem:[%s1 + $0xf30] sm:$0xff]
  %v543 = vld [vmem:[%s1 + $0xf38] sm:$0xff]
  %v544 = vld [vmem:[%s1 + $0xf40] sm:$0xff]
  %v545 = vld [vmem:[%s1 + $0xf48] sm:$0xff]
  %v546 = vld [vmem:[%s1 + $0xf50] sm:$0xff]
  %v547 = vld [vmem:[%s1 + $0xf58] sm:$0xff]
  %v548 = vld [vmem:[%s1 + $0xf60] sm:$0xff]
  %v549 = vld [vmem:[%s1 + $0xf68] sm:$0xff]
  %v550 = vld [vmem:[%s1 + $0xf70] sm:$0xff]
  %v551 = vld [vmem:[%s1 + $0xf78] sm:$0xff]
  %v552 = vld [vmem:[%s1 + $0xf80] sm:$0xff]
  %v553 = vld [vmem:[%s1 + $0xf88] sm:$0xff]
  %v554 = vld [vmem:[%s1 + $0xf90] sm:$0xff]
  %v555 = vld [vmem:[%s1 + $0xf98] sm:$0xff]
  %v556 = vld [vmem:[%s1 + $0xfa0] sm:$0xff]
  %v557 = vld [vmem:[%s1 + $0xfa8] sm:$0xff]
  %v558 = vld [vmem:[%s1 + $0xfb0] sm:$0xff]
  %v559 = vld [vmem:[%s1 + $0xfb8] sm:$0xff]
  %v560 = vld [vmem:[%s1 + $0xfc0] sm:$0xff]
  %v561 = vld [vmem:[%s1 + $0xfc8] sm:$0xff]
  %v562 = vld [vmem:[%s1 + $0xfd0] sm:$0xff]
  %v563 = vld [vmem:[%s1 + $0xfd8] sm:$0xff]
  %v564 = vld [vmem:[%s1 + $0xfe0] sm:$0xff]
  %v565 = vld [vmem:[%s1 + $0xfe8] sm:$0xff]
  %v566 = vld [vmem:[%s1 + $0xff0] sm:$0xff]
  %v567 = vld [vmem:[%s1 + $0xff8] sm:$0xff]
  %v568 = vld [vmem:[%s1 + $0x1000] sm:$0xff]
  %v569 = vld [vmem:[%s1 + $0x1008] sm:$0xff]
  %v570 = vld [vmem:[%s1 + $0x1010] sm:$0xff]
  %v571 = vld [vmem:[%s1 + $0x1018] sm:$0xff]
  %v572 = vld [vmem:[%s1 + $0x1020] sm:$0xff]
  %v573 = vld [vmem:[%s1 + $0x1028] sm:$0xff]
  %v574 = vld [vmem:[%s1 + $0x1030] sm:$0xff]
  %v575 = vld [vmem:[%s1 + $0x1038] sm:$0xff]
  %v576 = vld [vmem:[%s1 + $0x1040] sm:$0xff]
  %v577 = vld [vmem:[%s1 + $0x1048] sm:$0xff]
  %v578 = vld [vmem:[%s1 + $0x1050] sm:$0xff]
  %v579 = vld [vmem:[%s1 + $0x1058] sm:$0xff]
  %v580 = vld [vmem:[%s1 + $0x1060] sm:$0xff]
  %v581 = vld [vmem:[%s1 + $0x1068] sm:$0xff]
  %v582 = vld [vmem:[%s1 + $0x1070] sm:$0xff]
  %v583 = vld [vmem:[%s1 + $0x1078] sm:$0xff]
  %v584 = vld [vmem:[%s1 + $0x1080] sm:$0xff]
  %v585 = vld [vmem:[%s1 + $0x1088] sm:$0xff]
  %v586 = vld [vmem:[%s1 + $0x1090] sm:$0xff]
  %v587 = vld [vmem:[%s1 + $0x1098] sm:$0xff]
  %v588 = vld [vmem:[%s1 + $0x10a0] sm:$0xff]
  %v589 = vld [vmem:[%s1 + $0x10a8] sm:$0xff]
  %v590 = vld [vmem:[%s1 + $0x10b0] sm:$0xff]
  %v591 = vld [vmem:[%s1 + $0x10b8] sm:$0xff]
  %v592 = vld [vmem:[%s1 + $0x10c0] sm:$0xff]
  %v593 = vld [vmem:[%s1 + $0x10c8] sm:$0xff]
  %v594 = vld [vmem:[%s1 + $0x10d0] sm:$0xff]
  %v595 = vld [vmem:[%s1 + $0x10d8] sm:$0xff]
  %v596 = vld [vmem:[%s1 + $0x10e0] sm:$0xff]
  %v597 = vld [vmem:[%s1 + $0x10e8] sm:$0xff]
  %v598 = vld [vmem:[%s1 + $0x10f0] sm:$0xff]
  %v599 = vld [vmem:[%s1 + $0x10f8] sm:$0xff]
  %v600 = vld [vmem:[%s1 + $0x1100] sm:$0xff]
  %v601 = vld [vmem:[%s1 + $0x1108] sm:$0xff]
  %v602 = vld [vmem:[%s1 + $0x1110] sm:$0xff]
  %v603 = vld [vmem:[%s1 + $0x1118] sm:$0xff]
  %v604 = vld [vmem:[%s1 + $0x1120] sm:$0xff]
  %v605 = vld [vmem:[%s1 + $0x1128] sm:$0xff]
  %v606 = vld [vmem:[%s1 + $0x1130] sm:$0xff]
  %v607 = vld [vmem:[%s1 + $0x1138] sm:$0xff]
  %v608 = vld [vmem:[%s1 + $0x1140] sm:$0xff]
  %v609 = vld [vmem:[%s1 + $0x1148] sm:$0xff]
  %v610 = vld [vmem:[%s1 + $0x1150] sm:$0xff]
  %v611 = vld [vmem:[%s1 + $0x1158] sm:$0xff]
  %v612 = vld [vmem:[%s1 + $0x1160] sm:$0xff]
  %v613 = vld [vmem:[%s1 + $0x1168] sm:$0xff]
  %v614 = vld [vmem:[%s1 + $0x1170] sm:$0xff]
  %v615 = vld [vmem:[%s1 + $0x1178] sm:$0xff]
  %v616 = vld [vmem:[%s1 + $0x1180] sm:$0xff]
  %v617 = vld [vmem:[%s1 + $0x1188] sm:$0xff]
  %v618 = vld [vmem:[%s1 + $0x1190] sm:$0xff]
  %v619 = vld [vmem:[%s1 + $0x1198] sm:$0xff]
  %v620 = vld [vmem:[%s1 + $0x11a0] sm:$0xff]
  %v621 = vld [vmem:[%s1 + $0x11a8] sm:$0xff]
  %v622 = vld [vmem:[%s1 + $0x11b0] sm:$0xff]
  %v623 = vld [vmem:[%s1 + $0x11b8] sm:$0xff]
  %v624 = vld [vmem:[%s1 + $0x11c0] sm:$0xff]
  %v625 = vld [vmem:[%s1 + $0x11c8] sm:$0xff]
  %v626 = vld [vmem:[%s1 + $0x11d0] sm:$0xff]
  %v627 = vld [vmem:[%s1 + $0x11d8] sm:$0xff]
  %v628 = vld [vmem:[%s1 + $0x11e0] sm:$0xff]
  %v629 = vld [vmem:[%s1 + $0x11e8] sm:$0xff]
  %v630 = vld [vmem:[%s1 + $0x11f0] sm:$0xff]
  %v631 = vld [vmem:[%s1 + $0x11f8] sm:$0xff]
  %v632 = vld [vmem:[%s2] sm:$0xf]
  %v634 = vlaneseq
  %v635 = vshrl.u32 %v634, 7
  %v636 = vsub.s32 0, %v635
  %v637 = vrot.slane %v632, %v636
  %v638 = vlaneseq
  %v639 = vshrl.u32 %v638, 7
  %v640 = vsub.s32 1, %v639
  %v641 = vrot.slane %v632, %v640
  %v642 = vlaneseq
  %v643 = vshrl.u32 %v642, 7
  %v644 = vsub.s32 2, %v643
  %v645 = vrot.slane %v632, %v644
  %v646 = vlaneseq
  %v647 = vshrl.u32 %v646, 7
  %v648 = vsub.s32 3, %v647
  %v649 = vrot.slane %v632, %v648
  %v690 = vunpack.c.l.b16 %v20
  %v691 = vunpack.c.h.b16 %v20
  %v692 = vunpack.c.l.b16 %v21
  %v693 = vunpack.c.h.b16 %v21
  %v694 = vunpack.c.l.b16 %v22
  %v695 = vunpack.c.h.b16 %v22
  %v696 = vunpack.c.l.b16 %v23
  %v697 = vunpack.c.h.b16 %v23
  %v698 = vunpack.c.l.b16 %v24
  %v699 = vunpack.c.h.b16 %v24
  %v700 = vunpack.c.l.b16 %v25
  %v701 = vunpack.c.h.b16 %v25
  %v702 = vunpack.c.l.b16 %v26
  %v703 = vunpack.c.h.b16 %v26
  %v704 = vunpack.c.l.b16 %v27
  %v705 = vunpack.c.h.b16 %v27
  %v706 = vunpack.c.l.b16 %v28
  %v707 = vunpack.c.h.b16 %v28
  %v708 = vunpack.c.l.b16 %v29
  %v709 = vunpack.c.h.b16 %v29
  %v710 = vunpack.c.l.b16 %v30
  %v711 = vunpack.c.h.b16 %v30
  %v712 = vunpack.c.l.b16 %v31
  %v713 = vunpack.c.h.b16 %v31
  %v714 = vunpack.c.l.b16 %v32
  %v715 = vunpack.c.h.b16 %v32
  %v716 = vunpack.c.l.b16 %v33
  %v717 = vunpack.c.h.b16 %v33
  %v718 = vunpack.c.l.b16 %v34
  %v719 = vunpack.c.h.b16 %v34
  %v720 = vunpack.c.l.b16 %v35
  %v721 = vunpack.c.h.b16 %v35
  %v722 = vunpack.c.l.b16 %v36
  %v723 = vunpack.c.h.b16 %v36
  %v724 = vunpack.c.l.b16 %v37
  %v725 = vunpack.c.h.b16 %v37
  %v726 = vunpack.c.l.b16 %v38
  %v727 = vunpack.c.h.b16 %v38
  %v728 = vunpack.c.l.b16 %v39
  %v729 = vunpack.c.h.b16 %v39
  %v730 = vunpack.c.l.b16 %v40
  %v731 = vunpack.c.h.b16 %v40
  %v732 = vunpack.c.l.b16 %v41
  %v733 = vunpack.c.h.b16 %v41
  %v734 = vunpack.c.l.b16 %v42
  %v735 = vunpack.c.h.b16 %v42
  %v736 = vunpack.c.l.b16 %v43
  %v737 = vunpack.c.h.b16 %v43
  %v738 = vunpack.c.l.b16 %v44
  %v739 = vunpack.c.h.b16 %v44
  %v740 = vunpack.c.l.b16 %v45
  %v741 = vunpack.c.h.b16 %v45
  %v742 = vunpack.c.l.b16 %v46
  %v743 = vunpack.c.h.b16 %v46
  %v744 = vunpack.c.l.b16 %v47
  %v745 = vunpack.c.h.b16 %v47
  %v746 = vunpack.c.l.b16 %v48
  %v747 = vunpack.c.h.b16 %v48
  %v748 = vunpack.c.l.b16 %v49
  %v749 = vunpack.c.h.b16 %v49
  %v750 = vunpack.c.l.b16 %v50
  %v751 = vunpack.c.h.b16 %v50
  %v752 = vunpack.c.l.b16 %v51
  %v753 = vunpack.c.h.b16 %v51
  %v754 = vunpack.c.l.b16 %v52
  %v755 = vunpack.c.h.b16 %v52
  %v756 = vunpack.c.l.b16 %v53
  %v757 = vunpack.c.h.b16 %v53
  %v758 = vunpack.c.l.b16 %v54
  %v759 = vunpack.c.h.b16 %v54
  %v760 = vunpack.c.l.b16 %v55
  %v761 = vunpack.c.h.b16 %v55
  %v762 = vpack.c.b16 %v708, %v690
  %v763 = vpack.c.b16 %v709, %v691
  %v764 = vpack.c.b16 %v710, %v692
  %v765 = vpack.c.b16 %v711, %v693
  %v766 = vpack.c.b16 %v712, %v694
  %v767 = vpack.c.b16 %v713, %v695
  %v768 = vpack.c.b16 %v714, %v696
  %v769 = vpack.c.b16 %v715, %v697
  %v770 = vpack.c.b16 %v716, %v698
  %v771 = vpack.c.b16 %v717, %v699
  %v772 = vpack.c.b16 %v718, %v700
  %v773 = vpack.c.b16 %v719, %v701
  %v774 = vpack.c.b16 %v720, %v702
  %v775 = vpack.c.b16 %v721, %v703
  %v776 = vpack.c.b16 %v722, %v704
  %v777 = vpack.c.b16 %v723, %v705
  %v778 = vpack.c.b16 %v724, %v706
  %v779 = vpack.c.b16 %v725, %v707
  %v780 = vpack.c.b16 %v744, %v726
  %v781 = vpack.c.b16 %v745, %v727
  %v782 = vpack.c.b16 %v746, %v728
  %v783 = vpack.c.b16 %v747, %v729
  %v784 = vpack.c.b16 %v748, %v730
  %v785 = vpack.c.b16 %v749, %v731
  %v786 = vpack.c.b16 %v750, %v732
  %v787 = vpack.c.b16 %v751, %v733
  %v788 = vpack.c.b16 %v752, %v734
  %v789 = vpack.c.b16 %v753, %v735
  %v790 = vpack.c.b16 %v754, %v736
  %v791 = vpack.c.b16 %v755, %v737
  %v792 = vpack.c.b16 %v756, %v738
  %v793 = vpack.c.b16 %v757, %v739
  %v794 = vpack.c.b16 %v758, %v740
  %v795 = vpack.c.b16 %v759, %v741
  %v796 = vpack.c.b16 %v760, %v742
  %v797 = vpack.c.b16 %v761, %v743
  %v1410 = vunpack.c.l.b16 %v56
  %v1411 = vunpack.c.h.b16 %v56
  %v1412 = vunpack.c.l.b16 %v57
  %v1413 = vunpack.c.h.b16 %v57
  %v1414 = vunpack.c.l.b16 %v58
  %v1415 = vunpack.c.h.b16 %v58
  %v1416 = vunpack.c.l.b16 %v59
  %v1417 = vunpack.c.h.b16 %v59
  %v1418 = vunpack.c.l.b16 %v60
  %v1419 = vunpack.c.h.b16 %v60
  %v1420 = vunpack.c.l.b16 %v61
  %v1421 = vunpack.c.h.b16 %v61
  %v1422 = vunpack.c.l.b16 %v62
  %v1423 = vunpack.c.h.b16 %v62
  %v1424 = vunpack.c.l.b16 %v63
  %v1425 = vunpack.c.h.b16 %v63
  %v1426 = vunpack.c.l.b16 %v64
  %v1427 = vunpack.c.h.b16 %v64
  %v1428 = vunpack.c.l.b16 %v65
  %v1429 = vunpack.c.h.b16 %v65
  %v1430 = vunpack.c.l.b16 %v66
  %v1431 = vunpack.c.h.b16 %v66
  %v1432 = vunpack.c.l.b16 %v67
  %v1433 = vunpack.c.h.b16 %v67
  %v1434 = vunpack.c.l.b16 %v68
  %v1435 = vunpack.c.h.b16 %v68
  %v1436 = vunpack.c.l.b16 %v69
  %v1437 = vunpack.c.h.b16 %v69
  %v1438 = vunpack.c.l.b16 %v70
  %v1439 = vunpack.c.h.b16 %v70
  %v1440 = vunpack.c.l.b16 %v71
  %v1441 = vunpack.c.h.b16 %v71
  %v1442 = vunpack.c.l.b16 %v72
  %v1443 = vunpack.c.h.b16 %v72
  %v1444 = vunpack.c.l.b16 %v73
  %v1445 = vunpack.c.h.b16 %v73
  %v1446 = vunpack.c.l.b16 %v74
  %v1447 = vunpack.c.h.b16 %v74
  %v1448 = vunpack.c.l.b16 %v75
  %v1449 = vunpack.c.h.b16 %v75
  %v1450 = vunpack.c.l.b16 %v76
  %v1451 = vunpack.c.h.b16 %v76
  %v1452 = vunpack.c.l.b16 %v77
  %v1453 = vunpack.c.h.b16 %v77
  %v1454 = vunpack.c.l.b16 %v78
  %v1455 = vunpack.c.h.b16 %v78
  %v1456 = vunpack.c.l.b16 %v79
  %v1457 = vunpack.c.h.b16 %v79
  %v1458 = vunpack.c.l.b16 %v80
  %v1459 = vunpack.c.h.b16 %v80
  %v1460 = vunpack.c.l.b16 %v81
  %v1461 = vunpack.c.h.b16 %v81
  %v1462 = vunpack.c.l.b16 %v82
  %v1463 = vunpack.c.h.b16 %v82
  %v1464 = vunpack.c.l.b16 %v83
  %v1465 = vunpack.c.h.b16 %v83
  %v1466 = vunpack.c.l.b16 %v84
  %v1467 = vunpack.c.h.b16 %v84
  %v1468 = vunpack.c.l.b16 %v85
  %v1469 = vunpack.c.h.b16 %v85
  %v1470 = vunpack.c.l.b16 %v86
  %v1471 = vunpack.c.h.b16 %v86
  %v1472 = vunpack.c.l.b16 %v87
  %v1473 = vunpack.c.h.b16 %v87
  %v1474 = vunpack.c.l.b16 %v88
  %v1475 = vunpack.c.h.b16 %v88
  %v1476 = vunpack.c.l.b16 %v89
  %v1477 = vunpack.c.h.b16 %v89
  %v1478 = vunpack.c.l.b16 %v90
  %v1479 = vunpack.c.h.b16 %v90
  %v1480 = vunpack.c.l.b16 %v91
  %v1481 = vunpack.c.h.b16 %v91
  %v1482 = vunpack.c.l.b16 %v92
  %v1483 = vunpack.c.h.b16 %v92
  %v1484 = vunpack.c.l.b16 %v93
  %v1485 = vunpack.c.h.b16 %v93
  %v1486 = vunpack.c.l.b16 %v94
  %v1487 = vunpack.c.h.b16 %v94
  %v1488 = vunpack.c.l.b16 %v95
  %v1489 = vunpack.c.h.b16 %v95
  %v1490 = vunpack.c.l.b16 %v96
  %v1491 = vunpack.c.h.b16 %v96
  %v1492 = vunpack.c.l.b16 %v97
  %v1493 = vunpack.c.h.b16 %v97
  %v1494 = vunpack.c.l.b16 %v98
  %v1495 = vunpack.c.h.b16 %v98
  %v1496 = vunpack.c.l.b16 %v99
  %v1497 = vunpack.c.h.b16 %v99
  %v1498 = vunpack.c.l.b16 %v100
  %v1499 = vunpack.c.h.b16 %v100
  %v1500 = vunpack.c.l.b16 %v101
  %v1501 = vunpack.c.h.b16 %v101
  %v1502 = vunpack.c.l.b16 %v102
  %v1503 = vunpack.c.h.b16 %v102
  %v1504 = vunpack.c.l.b16 %v103
  %v1505 = vunpack.c.h.b16 %v103
  %v1506 = vunpack.c.l.b16 %v104
  %v1507 = vunpack.c.h.b16 %v104
  %v1508 = vunpack.c.l.b16 %v105
  %v1509 = vunpack.c.h.b16 %v105
  %v1510 = vunpack.c.l.b16 %v106
  %v1511 = vunpack.c.h.b16 %v106
  %v1512 = vunpack.c.l.b16 %v107
  %v1513 = vunpack.c.h.b16 %v107
  %v1514 = vunpack.c.l.b16 %v108
  %v1515 = vunpack.c.h.b16 %v108
  %v1516 = vunpack.c.l.b16 %v109
  %v1517 = vunpack.c.h.b16 %v109
  %v1518 = vunpack.c.l.b16 %v110
  %v1519 = vunpack.c.h.b16 %v110
  %v1520 = vunpack.c.l.b16 %v111
  %v1521 = vunpack.c.h.b16 %v111
  %v1522 = vunpack.c.l.b16 %v112
  %v1523 = vunpack.c.h.b16 %v112
  %v1524 = vunpack.c.l.b16 %v113
  %v1525 = vunpack.c.h.b16 %v113
  %v1526 = vunpack.c.l.b16 %v114
  %v1527 = vunpack.c.h.b16 %v114
  %v1528 = vunpack.c.l.b16 %v115
  %v1529 = vunpack.c.h.b16 %v115
  %v1530 = vunpack.c.l.b16 %v116
  %v1531 = vunpack.c.h.b16 %v116
  %v1532 = vunpack.c.l.b16 %v117
  %v1533 = vunpack.c.h.b16 %v117
  %v1534 = vunpack.c.l.b16 %v118
  %v1535 = vunpack.c.h.b16 %v118
  %v1536 = vunpack.c.l.b16 %v119
  %v1537 = vunpack.c.h.b16 %v119
  %v1538 = vunpack.c.l.b16 %v120
  %v1539 = vunpack.c.h.b16 %v120
  %v1540 = vunpack.c.l.b16 %v121
  %v1541 = vunpack.c.h.b16 %v121
  %v1542 = vunpack.c.l.b16 %v122
  %v1543 = vunpack.c.h.b16 %v122
  %v1544 = vunpack.c.l.b16 %v123
  %v1545 = vunpack.c.h.b16 %v123
  %v1546 = vunpack.c.l.b16 %v124
  %v1547 = vunpack.c.h.b16 %v124
  %v1548 = vunpack.c.l.b16 %v125
  %v1549 = vunpack.c.h.b16 %v125
  %v1550 = vunpack.c.l.b16 %v126
  %v1551 = vunpack.c.h.b16 %v126
  %v1552 = vunpack.c.l.b16 %v127
  %v1553 = vunpack.c.h.b16 %v127
  %v1554 = vunpack.c.l.b16 %v128
  %v1555 = vunpack.c.h.b16 %v128
  %v1556 = vunpack.c.l.b16 %v129
  %v1557 = vunpack.c.h.b16 %v129
  %v1558 = vunpack.c.l.b16 %v130
  %v1559 = vunpack.c.h.b16 %v130
  %v1560 = vunpack.c.l.b16 %v131
  %v1561 = vunpack.c.h.b16 %v131
  %v1562 = vunpack.c.l.b16 %v132
  %v1563 = vunpack.c.h.b16 %v132
  %v1564 = vunpack.c.l.b16 %v133
  %v1565 = vunpack.c.h.b16 %v133
  %v1566 = vunpack.c.l.b16 %v134
  %v1567 = vunpack.c.h.b16 %v134
  %v1568 = vunpack.c.l.b16 %v135
  %v1569 = vunpack.c.h.b16 %v135
  %v1570 = vunpack.c.l.b16 %v136
  %v1571 = vunpack.c.h.b16 %v136
  %v1572 = vunpack.c.l.b16 %v137
  %v1573 = vunpack.c.h.b16 %v137
  %v1574 = vunpack.c.l.b16 %v138
  %v1575 = vunpack.c.h.b16 %v138
  %v1576 = vunpack.c.l.b16 %v139
  %v1577 = vunpack.c.h.b16 %v139
  %v1578 = vunpack.c.l.b16 %v140
  %v1579 = vunpack.c.h.b16 %v140
  %v1580 = vunpack.c.l.b16 %v141
  %v1581 = vunpack.c.h.b16 %v141
  %v1582 = vunpack.c.l.b16 %v142
  %v1583 = vunpack.c.h.b16 %v142
  %v1584 = vunpack.c.l.b16 %v143
  %v1585 = vunpack.c.h.b16 %v143
  %v1586 = vunpack.c.l.b16 %v144
  %v1587 = vunpack.c.h.b16 %v144
  %v1588 = vunpack.c.l.b16 %v145
  %v1589 = vunpack.c.h.b16 %v145
  %v1590 = vunpack.c.l.b16 %v146
  %v1591 = vunpack.c.h.b16 %v146
  %v1592 = vunpack.c.l.b16 %v147
  %v1593 = vunpack.c.h.b16 %v147
  %v1594 = vunpack.c.l.b16 %v148
  %v1595 = vunpack.c.h.b16 %v148
  %v1596 = vunpack.c.l.b16 %v149
  %v1597 = vunpack.c.h.b16 %v149
  %v1598 = vunpack.c.l.b16 %v150
  %v1599 = vunpack.c.h.b16 %v150
  %v1600 = vunpack.c.l.b16 %v151
  %v1601 = vunpack.c.h.b16 %v151
  %v1602 = vunpack.c.l.b16 %v152
  %v1603 = vunpack.c.h.b16 %v152
  %v1604 = vunpack.c.l.b16 %v153
  %v1605 = vunpack.c.h.b16 %v153
  %v1606 = vunpack.c.l.b16 %v154
  %v1607 = vunpack.c.h.b16 %v154
  %v1608 = vunpack.c.l.b16 %v155
  %v1609 = vunpack.c.h.b16 %v155
  %v1610 = vunpack.c.l.b16 %v156
  %v1611 = vunpack.c.h.b16 %v156
  %v1612 = vunpack.c.l.b16 %v157
  %v1613 = vunpack.c.h.b16 %v157
  %v1614 = vunpack.c.l.b16 %v158
  %v1615 = vunpack.c.h.b16 %v158
  %v1616 = vunpack.c.l.b16 %v159
  %v1617 = vunpack.c.h.b16 %v159
  %v1618 = vunpack.c.l.b16 %v160
  %v1619 = vunpack.c.h.b16 %v160
  %v1620 = vunpack.c.l.b16 %v161
  %v1621 = vunpack.c.h.b16 %v161
  %v1622 = vunpack.c.l.b16 %v162
  %v1623 = vunpack.c.h.b16 %v162
  %v1624 = vunpack.c.l.b16 %v163
  %v1625 = vunpack.c.h.b16 %v163
  %v1626 = vunpack.c.l.b16 %v164
  %v1627 = vunpack.c.h.b16 %v164
  %v1628 = vunpack.c.l.b16 %v165
  %v1629 = vunpack.c.h.b16 %v165
  %v1630 = vunpack.c.l.b16 %v166
  %v1631 = vunpack.c.h.b16 %v166
  %v1632 = vunpack.c.l.b16 %v167
  %v1633 = vunpack.c.h.b16 %v167
  %v1634 = vunpack.c.l.b16 %v168
  %v1635 = vunpack.c.h.b16 %v168
  %v1636 = vunpack.c.l.b16 %v169
  %v1637 = vunpack.c.h.b16 %v169
  %v1638 = vunpack.c.l.b16 %v170
  %v1639 = vunpack.c.h.b16 %v170
  %v1640 = vunpack.c.l.b16 %v171
  %v1641 = vunpack.c.h.b16 %v171
  %v1642 = vunpack.c.l.b16 %v172
  %v1643 = vunpack.c.h.b16 %v172
  %v1644 = vunpack.c.l.b16 %v173
  %v1645 = vunpack.c.h.b16 %v173
  %v1646 = vunpack.c.l.b16 %v174
  %v1647 = vunpack.c.h.b16 %v174
  %v1648 = vunpack.c.l.b16 %v175
  %v1649 = vunpack.c.h.b16 %v175
  %v1650 = vunpack.c.l.b16 %v176
  %v1651 = vunpack.c.h.b16 %v176
  %v1652 = vunpack.c.l.b16 %v177
  %v1653 = vunpack.c.h.b16 %v177
  %v1654 = vunpack.c.l.b16 %v178
  %v1655 = vunpack.c.h.b16 %v178
  %v1656 = vunpack.c.l.b16 %v179
  %v1657 = vunpack.c.h.b16 %v179
  %v1658 = vunpack.c.l.b16 %v180
  %v1659 = vunpack.c.h.b16 %v180
  %v1660 = vunpack.c.l.b16 %v181
  %v1661 = vunpack.c.h.b16 %v181
  %v1662 = vunpack.c.l.b16 %v182
  %v1663 = vunpack.c.h.b16 %v182
  %v1664 = vunpack.c.l.b16 %v183
  %v1665 = vunpack.c.h.b16 %v183
  %v1666 = vunpack.c.l.b16 %v184
  %v1667 = vunpack.c.h.b16 %v184
  %v1668 = vunpack.c.l.b16 %v185
  %v1669 = vunpack.c.h.b16 %v185
  %v1670 = vunpack.c.l.b16 %v186
  %v1671 = vunpack.c.h.b16 %v186
  %v1672 = vunpack.c.l.b16 %v187
  %v1673 = vunpack.c.h.b16 %v187
  %v1674 = vunpack.c.l.b16 %v188
  %v1675 = vunpack.c.h.b16 %v188
  %v1676 = vunpack.c.l.b16 %v189
  %v1677 = vunpack.c.h.b16 %v189
  %v1678 = vunpack.c.l.b16 %v190
  %v1679 = vunpack.c.h.b16 %v190
  %v1680 = vunpack.c.l.b16 %v191
  %v1681 = vunpack.c.h.b16 %v191
  %v1682 = vunpack.c.l.b16 %v192
  %v1683 = vunpack.c.h.b16 %v192
  %v1684 = vunpack.c.l.b16 %v193
  %v1685 = vunpack.c.h.b16 %v193
  %v1686 = vunpack.c.l.b16 %v194
  %v1687 = vunpack.c.h.b16 %v194
  %v1688 = vunpack.c.l.b16 %v195
  %v1689 = vunpack.c.h.b16 %v195
  %v1690 = vunpack.c.l.b16 %v196
  %v1691 = vunpack.c.h.b16 %v196
  %v1692 = vunpack.c.l.b16 %v197
  %v1693 = vunpack.c.h.b16 %v197
  %v1694 = vunpack.c.l.b16 %v198
  %v1695 = vunpack.c.h.b16 %v198
  %v1696 = vunpack.c.l.b16 %v199
  %v1697 = vunpack.c.h.b16 %v199
  %v1698 = vunpack.c.l.b16 %v200
  %v1699 = vunpack.c.h.b16 %v200
  %v1700 = vunpack.c.l.b16 %v201
  %v1701 = vunpack.c.h.b16 %v201
  %v1702 = vunpack.c.l.b16 %v202
  %v1703 = vunpack.c.h.b16 %v202
  %v1704 = vunpack.c.l.b16 %v203
  %v1705 = vunpack.c.h.b16 %v203
  %v1706 = vunpack.c.l.b16 %v204
  %v1707 = vunpack.c.h.b16 %v204
  %v1708 = vunpack.c.l.b16 %v205
  %v1709 = vunpack.c.h.b16 %v205
  %v1710 = vunpack.c.l.b16 %v206
  %v1711 = vunpack.c.h.b16 %v206
  %v1712 = vunpack.c.l.b16 %v207
  %v1713 = vunpack.c.h.b16 %v207
  %v1714 = vunpack.c.l.b16 %v208
  %v1715 = vunpack.c.h.b16 %v208
  %v1716 = vunpack.c.l.b16 %v209
  %v1717 = vunpack.c.h.b16 %v209
  %v1718 = vunpack.c.l.b16 %v210
  %v1719 = vunpack.c.h.b16 %v210
  %v1720 = vunpack.c.l.b16 %v211
  %v1721 = vunpack.c.h.b16 %v211
  %v1722 = vunpack.c.l.b16 %v212
  %v1723 = vunpack.c.h.b16 %v212
  %v1724 = vunpack.c.l.b16 %v213
  %v1725 = vunpack.c.h.b16 %v213
  %v1726 = vunpack.c.l.b16 %v214
  %v1727 = vunpack.c.h.b16 %v214
  %v1728 = vunpack.c.l.b16 %v215
  %v1729 = vunpack.c.h.b16 %v215
  %v1730 = vunpack.c.l.b16 %v216
  %v1731 = vunpack.c.h.b16 %v216
  %v1732 = vunpack.c.l.b16 %v217
  %v1733 = vunpack.c.h.b16 %v217
  %v1734 = vunpack.c.l.b16 %v218
  %v1735 = vunpack.c.h.b16 %v218
  %v1736 = vunpack.c.l.b16 %v219
  %v1737 = vunpack.c.h.b16 %v219
  %v1738 = vunpack.c.l.b16 %v220
  %v1739 = vunpack.c.h.b16 %v220
  %v1740 = vunpack.c.l.b16 %v221
  %v1741 = vunpack.c.h.b16 %v221
  %v1742 = vunpack.c.l.b16 %v222
  %v1743 = vunpack.c.h.b16 %v222
  %v1744 = vunpack.c.l.b16 %v223
  %v1745 = vunpack.c.h.b16 %v223
  %v1746 = vunpack.c.l.b16 %v224
  %v1747 = vunpack.c.h.b16 %v224
  %v1748 = vunpack.c.l.b16 %v225
  %v1749 = vunpack.c.h.b16 %v225
  %v1750 = vunpack.c.l.b16 %v226
  %v1751 = vunpack.c.h.b16 %v226
  %v1752 = vunpack.c.l.b16 %v227
  %v1753 = vunpack.c.h.b16 %v227
  %v1754 = vunpack.c.l.b16 %v228
  %v1755 = vunpack.c.h.b16 %v228
  %v1756 = vunpack.c.l.b16 %v229
  %v1757 = vunpack.c.h.b16 %v229
  %v1758 = vunpack.c.l.b16 %v230
  %v1759 = vunpack.c.h.b16 %v230
  %v1760 = vunpack.c.l.b16 %v231
  %v1761 = vunpack.c.h.b16 %v231
  %v1762 = vunpack.c.l.b16 %v232
  %v1763 = vunpack.c.h.b16 %v232
  %v1764 = vunpack.c.l.b16 %v233
  %v1765 = vunpack.c.h.b16 %v233
  %v1766 = vunpack.c.l.b16 %v234
  %v1767 = vunpack.c.h.b16 %v234
  %v1768 = vunpack.c.l.b16 %v235
  %v1769 = vunpack.c.h.b16 %v235
  %v1770 = vunpack.c.l.b16 %v236
  %v1771 = vunpack.c.h.b16 %v236
  %v1772 = vunpack.c.l.b16 %v237
  %v1773 = vunpack.c.h.b16 %v237
  %v1774 = vunpack.c.l.b16 %v238
  %v1775 = vunpack.c.h.b16 %v238
  %v1776 = vunpack.c.l.b16 %v239
  %v1777 = vunpack.c.h.b16 %v239
  %v1778 = vunpack.c.l.b16 %v240
  %v1779 = vunpack.c.h.b16 %v240
  %v1780 = vunpack.c.l.b16 %v241
  %v1781 = vunpack.c.h.b16 %v241
  %v1782 = vunpack.c.l.b16 %v242
  %v1783 = vunpack.c.h.b16 %v242
  %v1784 = vunpack.c.l.b16 %v243
  %v1785 = vunpack.c.h.b16 %v243
  %v1786 = vunpack.c.l.b16 %v244
  %v1787 = vunpack.c.h.b16 %v244
  %v1788 = vunpack.c.l.b16 %v245
  %v1789 = vunpack.c.h.b16 %v245
  %v1790 = vunpack.c.l.b16 %v246
  %v1791 = vunpack.c.h.b16 %v246
  %v1792 = vunpack.c.l.b16 %v247
  %v1793 = vunpack.c.h.b16 %v247
  %v1794 = vunpack.c.l.b16 %v248
  %v1795 = vunpack.c.h.b16 %v248
  %v1796 = vunpack.c.l.b16 %v249
  %v1797 = vunpack.c.h.b16 %v249
  %v1798 = vunpack.c.l.b16 %v250
  %v1799 = vunpack.c.h.b16 %v250
  %v1800 = vunpack.c.l.b16 %v251
  %v1801 = vunpack.c.h.b16 %v251
  %v1802 = vunpack.c.l.b16 %v252
  %v1803 = vunpack.c.h.b16 %v252
  %v1804 = vunpack.c.l.b16 %v253
  %v1805 = vunpack.c.h.b16 %v253
  %v1806 = vunpack.c.l.b16 %v254
  %v1807 = vunpack.c.h.b16 %v254
  %v1808 = vunpack.c.l.b16 %v255
  %v1809 = vunpack.c.h.b16 %v255
  %v1810 = vunpack.c.l.b16 %v256
  %v1811 = vunpack.c.h.b16 %v256
  %v1812 = vunpack.c.l.b16 %v257
  %v1813 = vunpack.c.h.b16 %v257
  %v1814 = vunpack.c.l.b16 %v258
  %v1815 = vunpack.c.h.b16 %v258
  %v1816 = vunpack.c.l.b16 %v259
  %v1817 = vunpack.c.h.b16 %v259
  %v1818 = vunpack.c.l.b16 %v260
  %v1819 = vunpack.c.h.b16 %v260
  %v1820 = vunpack.c.l.b16 %v261
  %v1821 = vunpack.c.h.b16 %v261
  %v1822 = vunpack.c.l.b16 %v262
  %v1823 = vunpack.c.h.b16 %v262
  %v1824 = vunpack.c.l.b16 %v263
  %v1825 = vunpack.c.h.b16 %v263
  %v1826 = vunpack.c.l.b16 %v264
  %v1827 = vunpack.c.h.b16 %v264
  %v1828 = vunpack.c.l.b16 %v265
  %v1829 = vunpack.c.h.b16 %v265
  %v1830 = vunpack.c.l.b16 %v266
  %v1831 = vunpack.c.h.b16 %v266
  %v1832 = vunpack.c.l.b16 %v267
  %v1833 = vunpack.c.h.b16 %v267
  %v1834 = vunpack.c.l.b16 %v268
  %v1835 = vunpack.c.h.b16 %v268
  %v1836 = vunpack.c.l.b16 %v269
  %v1837 = vunpack.c.h.b16 %v269
  %v1838 = vunpack.c.l.b16 %v270
  %v1839 = vunpack.c.h.b16 %v270
  %v1840 = vunpack.c.l.b16 %v271
  %v1841 = vunpack.c.h.b16 %v271
  %v1842 = vunpack.c.l.b16 %v272
  %v1843 = vunpack.c.h.b16 %v272
  %v1844 = vunpack.c.l.b16 %v273
  %v1845 = vunpack.c.h.b16 %v273
  %v1846 = vunpack.c.l.b16 %v274
  %v1847 = vunpack.c.h.b16 %v274
  %v1848 = vunpack.c.l.b16 %v275
  %v1849 = vunpack.c.h.b16 %v275
  %v1850 = vunpack.c.l.b16 %v276
  %v1851 = vunpack.c.h.b16 %v276
  %v1852 = vunpack.c.l.b16 %v277
  %v1853 = vunpack.c.h.b16 %v277
  %v1854 = vunpack.c.l.b16 %v278
  %v1855 = vunpack.c.h.b16 %v278
  %v1856 = vunpack.c.l.b16 %v279
  %v1857 = vunpack.c.h.b16 %v279
  %v1858 = vunpack.c.l.b16 %v280
  %v1859 = vunpack.c.h.b16 %v280
  %v1860 = vunpack.c.l.b16 %v281
  %v1861 = vunpack.c.h.b16 %v281
  %v1862 = vunpack.c.l.b16 %v282
  %v1863 = vunpack.c.h.b16 %v282
  %v1864 = vunpack.c.l.b16 %v283
  %v1865 = vunpack.c.h.b16 %v283
  %v1866 = vunpack.c.l.b16 %v284
  %v1867 = vunpack.c.h.b16 %v284
  %v1868 = vunpack.c.l.b16 %v285
  %v1869 = vunpack.c.h.b16 %v285
  %v1870 = vunpack.c.l.b16 %v286
  %v1871 = vunpack.c.h.b16 %v286
  %v1872 = vunpack.c.l.b16 %v287
  %v1873 = vunpack.c.h.b16 %v287
  %v1874 = vunpack.c.l.b16 %v288
  %v1875 = vunpack.c.h.b16 %v288
  %v1876 = vunpack.c.l.b16 %v289
  %v1877 = vunpack.c.h.b16 %v289
  %v1878 = vunpack.c.l.b16 %v290
  %v1879 = vunpack.c.h.b16 %v290
  %v1880 = vunpack.c.l.b16 %v291
  %v1881 = vunpack.c.h.b16 %v291
  %v1882 = vunpack.c.l.b16 %v292
  %v1883 = vunpack.c.h.b16 %v292
  %v1884 = vunpack.c.l.b16 %v293
  %v1885 = vunpack.c.h.b16 %v293
  %v1886 = vunpack.c.l.b16 %v294
  %v1887 = vunpack.c.h.b16 %v294
  %v1888 = vunpack.c.l.b16 %v295
  %v1889 = vunpack.c.h.b16 %v295
  %v1890 = vunpack.c.l.b16 %v296
  %v1891 = vunpack.c.h.b16 %v296
  %v1892 = vunpack.c.l.b16 %v297
  %v1893 = vunpack.c.h.b16 %v297
  %v1894 = vunpack.c.l.b16 %v298
  %v1895 = vunpack.c.h.b16 %v298
  %v1896 = vunpack.c.l.b16 %v299
  %v1897 = vunpack.c.h.b16 %v299
  %v1898 = vunpack.c.l.b16 %v300
  %v1899 = vunpack.c.h.b16 %v300
  %v1900 = vunpack.c.l.b16 %v301
  %v1901 = vunpack.c.h.b16 %v301
  %v1902 = vunpack.c.l.b16 %v302
  %v1903 = vunpack.c.h.b16 %v302
  %v1904 = vunpack.c.l.b16 %v303
  %v1905 = vunpack.c.h.b16 %v303
  %v1906 = vunpack.c.l.b16 %v304
  %v1907 = vunpack.c.h.b16 %v304
  %v1908 = vunpack.c.l.b16 %v305
  %v1909 = vunpack.c.h.b16 %v305
  %v1910 = vunpack.c.l.b16 %v306
  %v1911 = vunpack.c.h.b16 %v306
  %v1912 = vunpack.c.l.b16 %v307
  %v1913 = vunpack.c.h.b16 %v307
  %v1914 = vunpack.c.l.b16 %v308
  %v1915 = vunpack.c.h.b16 %v308
  %v1916 = vunpack.c.l.b16 %v309
  %v1917 = vunpack.c.h.b16 %v309
  %v1918 = vunpack.c.l.b16 %v310
  %v1919 = vunpack.c.h.b16 %v310
  %v1920 = vunpack.c.l.b16 %v311
  %v1921 = vunpack.c.h.b16 %v311
  %v1922 = vunpack.c.l.b16 %v312
  %v1923 = vunpack.c.h.b16 %v312
  %v1924 = vunpack.c.l.b16 %v313
  %v1925 = vunpack.c.h.b16 %v313
  %v1926 = vunpack.c.l.b16 %v314
  %v1927 = vunpack.c.h.b16 %v314
  %v1928 = vunpack.c.l.b16 %v315
  %v1929 = vunpack.c.h.b16 %v315
  %v1930 = vunpack.c.l.b16 %v316
  %v1931 = vunpack.c.h.b16 %v316
  %v1932 = vunpack.c.l.b16 %v317
  %v1933 = vunpack.c.h.b16 %v317
  %v1934 = vunpack.c.l.b16 %v318
  %v1935 = vunpack.c.h.b16 %v318
  %v1936 = vunpack.c.l.b16 %v319
  %v1937 = vunpack.c.h.b16 %v319
  %v1938 = vunpack.c.l.b16 %v320
  %v1939 = vunpack.c.h.b16 %v320
  %v1940 = vunpack.c.l.b16 %v321
  %v1941 = vunpack.c.h.b16 %v321
  %v1942 = vunpack.c.l.b16 %v322
  %v1943 = vunpack.c.h.b16 %v322
  %v1944 = vunpack.c.l.b16 %v323
  %v1945 = vunpack.c.h.b16 %v323
  %v1946 = vunpack.c.l.b16 %v324
  %v1947 = vunpack.c.h.b16 %v324
  %v1948 = vunpack.c.l.b16 %v325
  %v1949 = vunpack.c.h.b16 %v325
  %v1950 = vunpack.c.l.b16 %v326
  %v1951 = vunpack.c.h.b16 %v326
  %v1952 = vunpack.c.l.b16 %v327
  %v1953 = vunpack.c.h.b16 %v327
  %v1954 = vunpack.c.l.b16 %v328
  %v1955 = vunpack.c.h.b16 %v328
  %v1956 = vunpack.c.l.b16 %v329
  %v1957 = vunpack.c.h.b16 %v329
  %v1958 = vunpack.c.l.b16 %v330
  %v1959 = vunpack.c.h.b16 %v330
  %v1960 = vunpack.c.l.b16 %v331
  %v1961 = vunpack.c.h.b16 %v331
  %v1962 = vunpack.c.l.b16 %v332
  %v1963 = vunpack.c.h.b16 %v332
  %v1964 = vunpack.c.l.b16 %v333
  %v1965 = vunpack.c.h.b16 %v333
  %v1966 = vunpack.c.l.b16 %v334
  %v1967 = vunpack.c.h.b16 %v334
  %v1968 = vunpack.c.l.b16 %v335
  %v1969 = vunpack.c.h.b16 %v335
  %v1970 = vunpack.c.l.b16 %v336
  %v1971 = vunpack.c.h.b16 %v336
  %v1972 = vunpack.c.l.b16 %v337
  %v1973 = vunpack.c.h.b16 %v337
  %v1974 = vunpack.c.l.b16 %v338
  %v1975 = vunpack.c.h.b16 %v338
  %v1976 = vunpack.c.l.b16 %v339
  %v1977 = vunpack.c.h.b16 %v339
  %v1978 = vunpack.c.l.b16 %v340
  %v1979 = vunpack.c.h.b16 %v340
  %v1980 = vunpack.c.l.b16 %v341
  %v1981 = vunpack.c.h.b16 %v341
  %v1982 = vunpack.c.l.b16 %v342
  %v1983 = vunpack.c.h.b16 %v342
  %v1984 = vunpack.c.l.b16 %v343
  %v1985 = vunpack.c.h.b16 %v343
  %v1986 = vunpack.c.l.b16 %v344
  %v1987 = vunpack.c.h.b16 %v344
  %v1988 = vunpack.c.l.b16 %v345
  %v1989 = vunpack.c.h.b16 %v345
  %v1990 = vunpack.c.l.b16 %v346
  %v1991 = vunpack.c.h.b16 %v346
  %v1992 = vunpack.c.l.b16 %v347
  %v1993 = vunpack.c.h.b16 %v347
  %v1994 = vunpack.c.l.b16 %v348
  %v1995 = vunpack.c.h.b16 %v348
  %v1996 = vunpack.c.l.b16 %v349
  %v1997 = vunpack.c.h.b16 %v349
  %v1998 = vunpack.c.l.b16 %v350
  %v1999 = vunpack.c.h.b16 %v350
  %v2000 = vunpack.c.l.b16 %v351
  %v2001 = vunpack.c.h.b16 %v351
  %v2002 = vunpack.c.l.b16 %v352
  %v2003 = vunpack.c.h.b16 %v352
  %v2004 = vunpack.c.l.b16 %v353
  %v2005 = vunpack.c.h.b16 %v353
  %v2006 = vunpack.c.l.b16 %v354
  %v2007 = vunpack.c.h.b16 %v354
  %v2008 = vunpack.c.l.b16 %v355
  %v2009 = vunpack.c.h.b16 %v355
  %v2010 = vunpack.c.l.b16 %v356
  %v2011 = vunpack.c.h.b16 %v356
  %v2012 = vunpack.c.l.b16 %v357
  %v2013 = vunpack.c.h.b16 %v357
  %v2014 = vunpack.c.l.b16 %v358
  %v2015 = vunpack.c.h.b16 %v358
  %v2016 = vunpack.c.l.b16 %v359
  %v2017 = vunpack.c.h.b16 %v359
  %v2018 = vunpack.c.l.b16 %v360
  %v2019 = vunpack.c.h.b16 %v360
  %v2020 = vunpack.c.l.b16 %v361
  %v2021 = vunpack.c.h.b16 %v361
  %v2022 = vunpack.c.l.b16 %v362
  %v2023 = vunpack.c.h.b16 %v362
  %v2024 = vunpack.c.l.b16 %v363
  %v2025 = vunpack.c.h.b16 %v363
  %v2026 = vunpack.c.l.b16 %v364
  %v2027 = vunpack.c.h.b16 %v364
  %v2028 = vunpack.c.l.b16 %v365
  %v2029 = vunpack.c.h.b16 %v365
  %v2030 = vunpack.c.l.b16 %v366
  %v2031 = vunpack.c.h.b16 %v366
  %v2032 = vunpack.c.l.b16 %v367
  %v2033 = vunpack.c.h.b16 %v367
  %v2034 = vunpack.c.l.b16 %v368
  %v2035 = vunpack.c.h.b16 %v368
  %v2036 = vunpack.c.l.b16 %v369
  %v2037 = vunpack.c.h.b16 %v369
  %v2038 = vunpack.c.l.b16 %v370
  %v2039 = vunpack.c.h.b16 %v370
  %v2040 = vunpack.c.l.b16 %v371
  %v2041 = vunpack.c.h.b16 %v371
  %v2042 = vunpack.c.l.b16 %v372
  %v2043 = vunpack.c.h.b16 %v372
  %v2044 = vunpack.c.l.b16 %v373
  %v2045 = vunpack.c.h.b16 %v373
  %v2046 = vunpack.c.l.b16 %v374
  %v2047 = vunpack.c.h.b16 %v374
  %v2048 = vunpack.c.l.b16 %v375
  %v2049 = vunpack.c.h.b16 %v375
  %v2050 = vunpack.c.l.b16 %v376
  %v2051 = vunpack.c.h.b16 %v376
  %v2052 = vunpack.c.l.b16 %v377
  %v2053 = vunpack.c.h.b16 %v377
  %v2054 = vunpack.c.l.b16 %v378
  %v2055 = vunpack.c.h.b16 %v378
  %v2056 = vunpack.c.l.b16 %v379
  %v2057 = vunpack.c.h.b16 %v379
  %v2058 = vunpack.c.l.b16 %v380
  %v2059 = vunpack.c.h.b16 %v380
  %v2060 = vunpack.c.l.b16 %v381
  %v2061 = vunpack.c.h.b16 %v381
  %v2062 = vunpack.c.l.b16 %v382
  %v2063 = vunpack.c.h.b16 %v382
  %v2064 = vunpack.c.l.b16 %v383
  %v2065 = vunpack.c.h.b16 %v383
  %v2066 = vunpack.c.l.b16 %v384
  %v2067 = vunpack.c.h.b16 %v384
  %v2068 = vunpack.c.l.b16 %v385
  %v2069 = vunpack.c.h.b16 %v385
  %v2070 = vunpack.c.l.b16 %v386
  %v2071 = vunpack.c.h.b16 %v386
  %v2072 = vunpack.c.l.b16 %v387
  %v2073 = vunpack.c.h.b16 %v387
  %v2074 = vunpack.c.l.b16 %v388
  %v2075 = vunpack.c.h.b16 %v388
  %v2076 = vunpack.c.l.b16 %v389
  %v2077 = vunpack.c.h.b16 %v389
  %v2078 = vunpack.c.l.b16 %v390
  %v2079 = vunpack.c.h.b16 %v390
  %v2080 = vunpack.c.l.b16 %v391
  %v2081 = vunpack.c.h.b16 %v391
  %v2082 = vunpack.c.l.b16 %v392
  %v2083 = vunpack.c.h.b16 %v392
  %v2084 = vunpack.c.l.b16 %v393
  %v2085 = vunpack.c.h.b16 %v393
  %v2086 = vunpack.c.l.b16 %v394
  %v2087 = vunpack.c.h.b16 %v394
  %v2088 = vunpack.c.l.b16 %v395
  %v2089 = vunpack.c.h.b16 %v395
  %v2090 = vunpack.c.l.b16 %v396
  %v2091 = vunpack.c.h.b16 %v396
  %v2092 = vunpack.c.l.b16 %v397
  %v2093 = vunpack.c.h.b16 %v397
  %v2094 = vunpack.c.l.b16 %v398
  %v2095 = vunpack.c.h.b16 %v398
  %v2096 = vunpack.c.l.b16 %v399
  %v2097 = vunpack.c.h.b16 %v399
  %v2098 = vunpack.c.l.b16 %v400
  %v2099 = vunpack.c.h.b16 %v400
  %v2100 = vunpack.c.l.b16 %v401
  %v2101 = vunpack.c.h.b16 %v401
  %v2102 = vunpack.c.l.b16 %v402
  %v2103 = vunpack.c.h.b16 %v402
  %v2104 = vunpack.c.l.b16 %v403
  %v2105 = vunpack.c.h.b16 %v403
  %v2106 = vunpack.c.l.b16 %v404
  %v2107 = vunpack.c.h.b16 %v404
  %v2108 = vunpack.c.l.b16 %v405
  %v2109 = vunpack.c.h.b16 %v405
  %v2110 = vunpack.c.l.b16 %v406
  %v2111 = vunpack.c.h.b16 %v406
  %v2112 = vunpack.c.l.b16 %v407
  %v2113 = vunpack.c.h.b16 %v407
  %v2114 = vunpack.c.l.b16 %v408
  %v2115 = vunpack.c.h.b16 %v408
  %v2116 = vunpack.c.l.b16 %v409
  %v2117 = vunpack.c.h.b16 %v409
  %v2118 = vunpack.c.l.b16 %v410
  %v2119 = vunpack.c.h.b16 %v410
  %v2120 = vunpack.c.l.b16 %v411
  %v2121 = vunpack.c.h.b16 %v411
  %v2122 = vunpack.c.l.b16 %v412
  %v2123 = vunpack.c.h.b16 %v412
  %v2124 = vunpack.c.l.b16 %v413
  %v2125 = vunpack.c.h.b16 %v413
  %v2126 = vunpack.c.l.b16 %v414
  %v2127 = vunpack.c.h.b16 %v414
  %v2128 = vunpack.c.l.b16 %v415
  %v2129 = vunpack.c.h.b16 %v415
  %v2130 = vunpack.c.l.b16 %v416
  %v2131 = vunpack.c.h.b16 %v416
  %v2132 = vunpack.c.l.b16 %v417
  %v2133 = vunpack.c.h.b16 %v417
  %v2134 = vunpack.c.l.b16 %v418
  %v2135 = vunpack.c.h.b16 %v418
  %v2136 = vunpack.c.l.b16 %v419
  %v2137 = vunpack.c.h.b16 %v419
  %v2138 = vunpack.c.l.b16 %v420
  %v2139 = vunpack.c.h.b16 %v420
  %v2140 = vunpack.c.l.b16 %v421
  %v2141 = vunpack.c.h.b16 %v421
  %v2142 = vunpack.c.l.b16 %v422
  %v2143 = vunpack.c.h.b16 %v422
  %v2144 = vunpack.c.l.b16 %v423
  %v2145 = vunpack.c.h.b16 %v423
  %v2146 = vunpack.c.l.b16 %v424
  %v2147 = vunpack.c.h.b16 %v424
  %v2148 = vunpack.c.l.b16 %v425
  %v2149 = vunpack.c.h.b16 %v425
  %v2150 = vunpack.c.l.b16 %v426
  %v2151 = vunpack.c.h.b16 %v426
  %v2152 = vunpack.c.l.b16 %v427
  %v2153 = vunpack.c.h.b16 %v427
  %v2154 = vunpack.c.l.b16 %v428
  %v2155 = vunpack.c.h.b16 %v428
  %v2156 = vunpack.c.l.b16 %v429
  %v2157 = vunpack.c.h.b16 %v429
  %v2158 = vunpack.c.l.b16 %v430
  %v2159 = vunpack.c.h.b16 %v430
  %v2160 = vunpack.c.l.b16 %v431
  %v2161 = vunpack.c.h.b16 %v431
  %v2162 = vunpack.c.l.b16 %v432
  %v2163 = vunpack.c.h.b16 %v432
  %v2164 = vunpack.c.l.b16 %v433
  %v2165 = vunpack.c.h.b16 %v433
  %v2166 = vunpack.c.l.b16 %v434
  %v2167 = vunpack.c.h.b16 %v434
  %v2168 = vunpack.c.l.b16 %v435
  %v2169 = vunpack.c.h.b16 %v435
  %v2170 = vunpack.c.l.b16 %v436
  %v2171 = vunpack.c.h.b16 %v436
  %v2172 = vunpack.c.l.b16 %v437
  %v2173 = vunpack.c.h.b16 %v437
  %v2174 = vunpack.c.l.b16 %v438
  %v2175 = vunpack.c.h.b16 %v438
  %v2176 = vunpack.c.l.b16 %v439
  %v2177 = vunpack.c.h.b16 %v439
  %v2178 = vunpack.c.l.b16 %v440
  %v2179 = vunpack.c.h.b16 %v440
  %v2180 = vunpack.c.l.b16 %v441
  %v2181 = vunpack.c.h.b16 %v441
  %v2182 = vunpack.c.l.b16 %v442
  %v2183 = vunpack.c.h.b16 %v442
  %v2184 = vunpack.c.l.b16 %v443
  %v2185 = vunpack.c.h.b16 %v443
  %v2186 = vunpack.c.l.b16 %v444
  %v2187 = vunpack.c.h.b16 %v444
  %v2188 = vunpack.c.l.b16 %v445
  %v2189 = vunpack.c.h.b16 %v445
  %v2190 = vunpack.c.l.b16 %v446
  %v2191 = vunpack.c.h.b16 %v446
  %v2192 = vunpack.c.l.b16 %v447
  %v2193 = vunpack.c.h.b16 %v447
  %v2194 = vunpack.c.l.b16 %v448
  %v2195 = vunpack.c.h.b16 %v448
  %v2196 = vunpack.c.l.b16 %v449
  %v2197 = vunpack.c.h.b16 %v449
  %v2198 = vunpack.c.l.b16 %v450
  %v2199 = vunpack.c.h.b16 %v450
  %v2200 = vunpack.c.l.b16 %v451
  %v2201 = vunpack.c.h.b16 %v451
  %v2202 = vunpack.c.l.b16 %v452
  %v2203 = vunpack.c.h.b16 %v452
  %v2204 = vunpack.c.l.b16 %v453
  %v2205 = vunpack.c.h.b16 %v453
  %v2206 = vunpack.c.l.b16 %v454
  %v2207 = vunpack.c.h.b16 %v454
  %v2208 = vunpack.c.l.b16 %v455
  %v2209 = vunpack.c.h.b16 %v455
  %v2210 = vunpack.c.l.b16 %v456
  %v2211 = vunpack.c.h.b16 %v456
  %v2212 = vunpack.c.l.b16 %v457
  %v2213 = vunpack.c.h.b16 %v457
  %v2214 = vunpack.c.l.b16 %v458
  %v2215 = vunpack.c.h.b16 %v458
  %v2216 = vunpack.c.l.b16 %v459
  %v2217 = vunpack.c.h.b16 %v459
  %v2218 = vunpack.c.l.b16 %v460
  %v2219 = vunpack.c.h.b16 %v460
  %v2220 = vunpack.c.l.b16 %v461
  %v2221 = vunpack.c.h.b16 %v461
  %v2222 = vunpack.c.l.b16 %v462
  %v2223 = vunpack.c.h.b16 %v462
  %v2224 = vunpack.c.l.b16 %v463
  %v2225 = vunpack.c.h.b16 %v463
  %v2226 = vunpack.c.l.b16 %v464
  %v2227 = vunpack.c.h.b16 %v464
  %v2228 = vunpack.c.l.b16 %v465
  %v2229 = vunpack.c.h.b16 %v465
  %v2230 = vunpack.c.l.b16 %v466
  %v2231 = vunpack.c.h.b16 %v466
  %v2232 = vunpack.c.l.b16 %v467
  %v2233 = vunpack.c.h.b16 %v467
  %v2234 = vunpack.c.l.b16 %v468
  %v2235 = vunpack.c.h.b16 %v468
  %v2236 = vunpack.c.l.b16 %v469
  %v2237 = vunpack.c.h.b16 %v469
  %v2238 = vunpack.c.l.b16 %v470
  %v2239 = vunpack.c.h.b16 %v470
  %v2240 = vunpack.c.l.b16 %v471
  %v2241 = vunpack.c.h.b16 %v471
  %v2242 = vunpack.c.l.b16 %v472
  %v2243 = vunpack.c.h.b16 %v472
  %v2244 = vunpack.c.l.b16 %v473
  %v2245 = vunpack.c.h.b16 %v473
  %v2246 = vunpack.c.l.b16 %v474
  %v2247 = vunpack.c.h.b16 %v474
  %v2248 = vunpack.c.l.b16 %v475
  %v2249 = vunpack.c.h.b16 %v475
  %v2250 = vunpack.c.l.b16 %v476
  %v2251 = vunpack.c.h.b16 %v476
  %v2252 = vunpack.c.l.b16 %v477
  %v2253 = vunpack.c.h.b16 %v477
  %v2254 = vunpack.c.l.b16 %v478
  %v2255 = vunpack.c.h.b16 %v478
  %v2256 = vunpack.c.l.b16 %v479
  %v2257 = vunpack.c.h.b16 %v479
  %v2258 = vunpack.c.l.b16 %v480
  %v2259 = vunpack.c.h.b16 %v480
  %v2260 = vunpack.c.l.b16 %v481
  %v2261 = vunpack.c.h.b16 %v481
  %v2262 = vunpack.c.l.b16 %v482
  %v2263 = vunpack.c.h.b16 %v482
  %v2264 = vunpack.c.l.b16 %v483
  %v2265 = vunpack.c.h.b16 %v483
  %v2266 = vunpack.c.l.b16 %v484
  %v2267 = vunpack.c.h.b16 %v484
  %v2268 = vunpack.c.l.b16 %v485
  %v2269 = vunpack.c.h.b16 %v485
  %v2270 = vunpack.c.l.b16 %v486
  %v2271 = vunpack.c.h.b16 %v486
  %v2272 = vunpack.c.l.b16 %v487
  %v2273 = vunpack.c.h.b16 %v487
  %v2274 = vunpack.c.l.b16 %v488
  %v2275 = vunpack.c.h.b16 %v488
  %v2276 = vunpack.c.l.b16 %v489
  %v2277 = vunpack.c.h.b16 %v489
  %v2278 = vunpack.c.l.b16 %v490
  %v2279 = vunpack.c.h.b16 %v490
  %v2280 = vunpack.c.l.b16 %v491
  %v2281 = vunpack.c.h.b16 %v491
  %v2282 = vunpack.c.l.b16 %v492
  %v2283 = vunpack.c.h.b16 %v492
  %v2284 = vunpack.c.l.b16 %v493
  %v2285 = vunpack.c.h.b16 %v493
  %v2286 = vunpack.c.l.b16 %v494
  %v2287 = vunpack.c.h.b16 %v494
  %v2288 = vunpack.c.l.b16 %v495
  %v2289 = vunpack.c.h.b16 %v495
  %v2290 = vunpack.c.l.b16 %v496
  %v2291 = vunpack.c.h.b16 %v496
  %v2292 = vunpack.c.l.b16 %v497
  %v2293 = vunpack.c.h.b16 %v497
  %v2294 = vunpack.c.l.b16 %v498
  %v2295 = vunpack.c.h.b16 %v498
  %v2296 = vunpack.c.l.b16 %v499
  %v2297 = vunpack.c.h.b16 %v499
  %v2298 = vunpack.c.l.b16 %v500
  %v2299 = vunpack.c.h.b16 %v500
  %v2300 = vunpack.c.l.b16 %v501
  %v2301 = vunpack.c.h.b16 %v501
  %v2302 = vunpack.c.l.b16 %v502
  %v2303 = vunpack.c.h.b16 %v502
  %v2304 = vunpack.c.l.b16 %v503
  %v2305 = vunpack.c.h.b16 %v503
  %v2306 = vunpack.c.l.b16 %v504
  %v2307 = vunpack.c.h.b16 %v504
  %v2308 = vunpack.c.l.b16 %v505
  %v2309 = vunpack.c.h.b16 %v505
  %v2310 = vunpack.c.l.b16 %v506
  %v2311 = vunpack.c.h.b16 %v506
  %v2312 = vunpack.c.l.b16 %v507
  %v2313 = vunpack.c.h.b16 %v507
  %v2314 = vunpack.c.l.b16 %v508
  %v2315 = vunpack.c.h.b16 %v508
  %v2316 = vunpack.c.l.b16 %v509
  %v2317 = vunpack.c.h.b16 %v509
  %v2318 = vunpack.c.l.b16 %v510
  %v2319 = vunpack.c.h.b16 %v510
  %v2320 = vunpack.c.l.b16 %v511
  %v2321 = vunpack.c.h.b16 %v511
  %v2322 = vunpack.c.l.b16 %v512
  %v2323 = vunpack.c.h.b16 %v512
  %v2324 = vunpack.c.l.b16 %v513
  %v2325 = vunpack.c.h.b16 %v513
  %v2326 = vunpack.c.l.b16 %v514
  %v2327 = vunpack.c.h.b16 %v514
  %v2328 = vunpack.c.l.b16 %v515
  %v2329 = vunpack.c.h.b16 %v515
  %v2330 = vunpack.c.l.b16 %v516
  %v2331 = vunpack.c.h.b16 %v516
  %v2332 = vunpack.c.l.b16 %v517
  %v2333 = vunpack.c.h.b16 %v517
  %v2334 = vunpack.c.l.b16 %v518
  %v2335 = vunpack.c.h.b16 %v518
  %v2336 = vunpack.c.l.b16 %v519
  %v2337 = vunpack.c.h.b16 %v519
  %v2338 = vunpack.c.l.b16 %v520
  %v2339 = vunpack.c.h.b16 %v520
  %v2340 = vunpack.c.l.b16 %v521
  %v2341 = vunpack.c.h.b16 %v521
  %v2342 = vunpack.c.l.b16 %v522
  %v2343 = vunpack.c.h.b16 %v522
  %v2344 = vunpack.c.l.b16 %v523
  %v2345 = vunpack.c.h.b16 %v523
  %v2346 = vunpack.c.l.b16 %v524
  %v2347 = vunpack.c.h.b16 %v524
  %v2348 = vunpack.c.l.b16 %v525
  %v2349 = vunpack.c.h.b16 %v525
  %v2350 = vunpack.c.l.b16 %v526
  %v2351 = vunpack.c.h.b16 %v526
  %v2352 = vunpack.c.l.b16 %v527
  %v2353 = vunpack.c.h.b16 %v527
  %v2354 = vunpack.c.l.b16 %v528
  %v2355 = vunpack.c.h.b16 %v528
  %v2356 = vunpack.c.l.b16 %v529
  %v2357 = vunpack.c.h.b16 %v529
  %v2358 = vunpack.c.l.b16 %v530
  %v2359 = vunpack.c.h.b16 %v530
  %v2360 = vunpack.c.l.b16 %v531
  %v2361 = vunpack.c.h.b16 %v531
  %v2362 = vunpack.c.l.b16 %v532
  %v2363 = vunpack.c.h.b16 %v532
  %v2364 = vunpack.c.l.b16 %v533
  %v2365 = vunpack.c.h.b16 %v533
  %v2366 = vunpack.c.l.b16 %v534
  %v2367 = vunpack.c.h.b16 %v534
  %v2368 = vunpack.c.l.b16 %v535
  %v2369 = vunpack.c.h.b16 %v535
  %v2370 = vunpack.c.l.b16 %v536
  %v2371 = vunpack.c.h.b16 %v536
  %v2372 = vunpack.c.l.b16 %v537
  %v2373 = vunpack.c.h.b16 %v537
  %v2374 = vunpack.c.l.b16 %v538
  %v2375 = vunpack.c.h.b16 %v538
  %v2376 = vunpack.c.l.b16 %v539
  %v2377 = vunpack.c.h.b16 %v539
  %v2378 = vunpack.c.l.b16 %v540
  %v2379 = vunpack.c.h.b16 %v540
  %v2380 = vunpack.c.l.b16 %v541
  %v2381 = vunpack.c.h.b16 %v541
  %v2382 = vunpack.c.l.b16 %v542
  %v2383 = vunpack.c.h.b16 %v542
  %v2384 = vunpack.c.l.b16 %v543
  %v2385 = vunpack.c.h.b16 %v543
  %v2386 = vunpack.c.l.b16 %v544
  %v2387 = vunpack.c.h.b16 %v544
  %v2388 = vunpack.c.l.b16 %v545
  %v2389 = vunpack.c.h.b16 %v545
  %v2390 = vunpack.c.l.b16 %v546
  %v2391 = vunpack.c.h.b16 %v546
  %v2392 = vunpack.c.l.b16 %v547
  %v2393 = vunpack.c.h.b16 %v547
  %v2394 = vunpack.c.l.b16 %v548
  %v2395 = vunpack.c.h.b16 %v548
  %v2396 = vunpack.c.l.b16 %v549
  %v2397 = vunpack.c.h.b16 %v549
  %v2398 = vunpack.c.l.b16 %v550
  %v2399 = vunpack.c.h.b16 %v550
  %v2400 = vunpack.c.l.b16 %v551
  %v2401 = vunpack.c.h.b16 %v551
  %v2402 = vunpack.c.l.b16 %v552
  %v2403 = vunpack.c.h.b16 %v552
  %v2404 = vunpack.c.l.b16 %v553
  %v2405 = vunpack.c.h.b16 %v553
  %v2406 = vunpack.c.l.b16 %v554
  %v2407 = vunpack.c.h.b16 %v554
  %v2408 = vunpack.c.l.b16 %v555
  %v2409 = vunpack.c.h.b16 %v555
  %v2410 = vunpack.c.l.b16 %v556
  %v2411 = vunpack.c.h.b16 %v556
  %v2412 = vunpack.c.l.b16 %v557
  %v2413 = vunpack.c.h.b16 %v557
  %v2414 = vunpack.c.l.b16 %v558
  %v2415 = vunpack.c.h.b16 %v558
  %v2416 = vunpack.c.l.b16 %v559
  %v2417 = vunpack.c.h.b16 %v559
  %v2418 = vunpack.c.l.b16 %v560
  %v2419 = vunpack.c.h.b16 %v560
  %v2420 = vunpack.c.l.b16 %v561
  %v2421 = vunpack.c.h.b16 %v561
  %v2422 = vunpack.c.l.b16 %v562
  %v2423 = vunpack.c.h.b16 %v562
  %v2424 = vunpack.c.l.b16 %v563
  %v2425 = vunpack.c.h.b16 %v563
  %v2426 = vunpack.c.l.b16 %v564
  %v2427 = vunpack.c.h.b16 %v564
  %v2428 = vunpack.c.l.b16 %v565
  %v2429 = vunpack.c.h.b16 %v565
  %v2430 = vunpack.c.l.b16 %v566
  %v2431 = vunpack.c.h.b16 %v566
  %v2432 = vunpack.c.l.b16 %v567
  %v2433 = vunpack.c.h.b16 %v567
  %v2434 = vunpack.c.l.b16 %v568
  %v2435 = vunpack.c.h.b16 %v568
  %v2436 = vunpack.c.l.b16 %v569
  %v2437 = vunpack.c.h.b16 %v569
  %v2438 = vunpack.c.l.b16 %v570
  %v2439 = vunpack.c.h.b16 %v570
  %v2440 = vunpack.c.l.b16 %v571
  %v2441 = vunpack.c.h.b16 %v571
  %v2442 = vunpack.c.l.b16 %v572
  %v2443 = vunpack.c.h.b16 %v572
  %v2444 = vunpack.c.l.b16 %v573
  %v2445 = vunpack.c.h.b16 %v573
  %v2446 = vunpack.c.l.b16 %v574
  %v2447 = vunpack.c.h.b16 %v574
  %v2448 = vunpack.c.l.b16 %v575
  %v2449 = vunpack.c.h.b16 %v575
  %v2450 = vunpack.c.l.b16 %v576
  %v2451 = vunpack.c.h.b16 %v576
  %v2452 = vunpack.c.l.b16 %v577
  %v2453 = vunpack.c.h.b16 %v577
  %v2454 = vunpack.c.l.b16 %v578
  %v2455 = vunpack.c.h.b16 %v578
  %v2456 = vunpack.c.l.b16 %v579
  %v2457 = vunpack.c.h.b16 %v579
  %v2458 = vunpack.c.l.b16 %v580
  %v2459 = vunpack.c.h.b16 %v580
  %v2460 = vunpack.c.l.b16 %v581
  %v2461 = vunpack.c.h.b16 %v581
  %v2462 = vunpack.c.l.b16 %v582
  %v2463 = vunpack.c.h.b16 %v582
  %v2464 = vunpack.c.l.b16 %v583
  %v2465 = vunpack.c.h.b16 %v583
  %v2466 = vunpack.c.l.b16 %v584
  %v2467 = vunpack.c.h.b16 %v584
  %v2468 = vunpack.c.l.b16 %v585
  %v2469 = vunpack.c.h.b16 %v585
  %v2470 = vunpack.c.l.b16 %v586
  %v2471 = vunpack.c.h.b16 %v586
  %v2472 = vunpack.c.l.b16 %v587
  %v2473 = vunpack.c.h.b16 %v587
  %v2474 = vunpack.c.l.b16 %v588
  %v2475 = vunpack.c.h.b16 %v588
  %v2476 = vunpack.c.l.b16 %v589
  %v2477 = vunpack.c.h.b16 %v589
  %v2478 = vunpack.c.l.b16 %v590
  %v2479 = vunpack.c.h.b16 %v590
  %v2480 = vunpack.c.l.b16 %v591
  %v2481 = vunpack.c.h.b16 %v591
  %v2482 = vunpack.c.l.b16 %v592
  %v2483 = vunpack.c.h.b16 %v592
  %v2484 = vunpack.c.l.b16 %v593
  %v2485 = vunpack.c.h.b16 %v593
  %v2486 = vunpack.c.l.b16 %v594
  %v2487 = vunpack.c.h.b16 %v594
  %v2488 = vunpack.c.l.b16 %v595
  %v2489 = vunpack.c.h.b16 %v595
  %v2490 = vunpack.c.l.b16 %v596
  %v2491 = vunpack.c.h.b16 %v596
  %v2492 = vunpack.c.l.b16 %v597
  %v2493 = vunpack.c.h.b16 %v597
  %v2494 = vunpack.c.l.b16 %v598
  %v2495 = vunpack.c.h.b16 %v598
  %v2496 = vunpack.c.l.b16 %v599
  %v2497 = vunpack.c.h.b16 %v599
  %v2498 = vunpack.c.l.b16 %v600
  %v2499 = vunpack.c.h.b16 %v600
  %v2500 = vunpack.c.l.b16 %v601
  %v2501 = vunpack.c.h.b16 %v601
  %v2502 = vunpack.c.l.b16 %v602
  %v2503 = vunpack.c.h.b16 %v602
  %v2504 = vunpack.c.l.b16 %v603
  %v2505 = vunpack.c.h.b16 %v603
  %v2506 = vunpack.c.l.b16 %v604
  %v2507 = vunpack.c.h.b16 %v604
  %v2508 = vunpack.c.l.b16 %v605
  %v2509 = vunpack.c.h.b16 %v605
  %v2510 = vunpack.c.l.b16 %v606
  %v2511 = vunpack.c.h.b16 %v606
  %v2512 = vunpack.c.l.b16 %v607
  %v2513 = vunpack.c.h.b16 %v607
  %v2514 = vunpack.c.l.b16 %v608
  %v2515 = vunpack.c.h.b16 %v608
  %v2516 = vunpack.c.l.b16 %v609
  %v2517 = vunpack.c.h.b16 %v609
  %v2518 = vunpack.c.l.b16 %v610
  %v2519 = vunpack.c.h.b16 %v610
  %v2520 = vunpack.c.l.b16 %v611
  %v2521 = vunpack.c.h.b16 %v611
  %v2522 = vunpack.c.l.b16 %v612
  %v2523 = vunpack.c.h.b16 %v612
  %v2524 = vunpack.c.l.b16 %v613
  %v2525 = vunpack.c.h.b16 %v613
  %v2526 = vunpack.c.l.b16 %v614
  %v2527 = vunpack.c.h.b16 %v614
  %v2528 = vunpack.c.l.b16 %v615
  %v2529 = vunpack.c.h.b16 %v615
  %v2530 = vunpack.c.l.b16 %v616
  %v2531 = vunpack.c.h.b16 %v616
  %v2532 = vunpack.c.l.b16 %v617
  %v2533 = vunpack.c.h.b16 %v617
  %v2534 = vunpack.c.l.b16 %v618
  %v2535 = vunpack.c.h.b16 %v618
  %v2536 = vunpack.c.l.b16 %v619
  %v2537 = vunpack.c.h.b16 %v619
  %v2538 = vunpack.c.l.b16 %v620
  %v2539 = vunpack.c.h.b16 %v620
  %v2540 = vunpack.c.l.b16 %v621
  %v2541 = vunpack.c.h.b16 %v621
  %v2542 = vunpack.c.l.b16 %v622
  %v2543 = vunpack.c.h.b16 %v622
  %v2544 = vunpack.c.l.b16 %v623
  %v2545 = vunpack.c.h.b16 %v623
  %v2546 = vunpack.c.l.b16 %v624
  %v2547 = vunpack.c.h.b16 %v624
  %v2548 = vunpack.c.l.b16 %v625
  %v2549 = vunpack.c.h.b16 %v625
  %v2550 = vunpack.c.l.b16 %v626
  %v2551 = vunpack.c.h.b16 %v626
  %v2552 = vunpack.c.l.b16 %v627
  %v2553 = vunpack.c.h.b16 %v627
  %v2554 = vunpack.c.l.b16 %v628
  %v2555 = vunpack.c.h.b16 %v628
  %v2556 = vunpack.c.l.b16 %v629
  %v2557 = vunpack.c.h.b16 %v629
  %v2558 = vunpack.c.l.b16 %v630
  %v2559 = vunpack.c.h.b16 %v630
  %v2560 = vunpack.c.l.b16 %v631
  %v2561 = vunpack.c.h.b16 %v631
  %v2562 = vpack.c.b16 %v1414, %v1410
  %v2563 = vpack.c.b16 %v1415, %v1411
  %v2564 = vpack.c.b16 %v1416, %v1412
  %v2565 = vpack.c.b16 %v1417, %v1413
  %v2566 = vpack.c.b16 %v1422, %v1418
  %v2567 = vpack.c.b16 %v1423, %v1419
  %v2568 = vpack.c.b16 %v1424, %v1420
  %v2569 = vpack.c.b16 %v1425, %v1421
  %v2570 = vpack.c.b16 %v1430, %v1426
  %v2571 = vpack.c.b16 %v1431, %v1427
  %v2572 = vpack.c.b16 %v1432, %v1428
  %v2573 = vpack.c.b16 %v1433, %v1429
  %v2574 = vpack.c.b16 %v1438, %v1434
  %v2575 = vpack.c.b16 %v1439, %v1435
  %v2576 = vpack.c.b16 %v1440, %v1436
  %v2577 = vpack.c.b16 %v1441, %v1437
  %v2578 = vpack.c.b16 %v1446, %v1442
  %v2579 = vpack.c.b16 %v1447, %v1443
  %v2580 = vpack.c.b16 %v1448, %v1444
  %v2581 = vpack.c.b16 %v1449, %v1445
  %v2582 = vpack.c.b16 %v1454, %v1450
  %v2583 = vpack.c.b16 %v1455, %v1451
  %v2584 = vpack.c.b16 %v1456, %v1452
  %v2585 = vpack.c.b16 %v1457, %v1453
  %v2586 = vpack.c.b16 %v1462, %v1458
  %v2587 = vpack.c.b16 %v1463, %v1459
  %v2588 = vpack.c.b16 %v1464, %v1460
  %v2589 = vpack.c.b16 %v1465, %v1461
  %v2590 = vpack.c.b16 %v1470, %v1466
  %v2591 = vpack.c.b16 %v1471, %v1467
  %v2592 = vpack.c.b16 %v1472, %v1468
  %v2593 = vpack.c.b16 %v1473, %v1469
  %v2594 = vpack.c.b16 %v1478, %v1474
  %v2595 = vpack.c.b16 %v1479, %v1475
  %v2596 = vpack.c.b16 %v1480, %v1476
  %v2597 = vpack.c.b16 %v1481, %v1477
  %v2598 = vpack.c.b16 %v1486, %v1482
  %v2599 = vpack.c.b16 %v1487, %v1483
  %v2600 = vpack.c.b16 %v1488, %v1484
  %v2601 = vpack.c.b16 %v1489, %v1485
  %v2602 = vpack.c.b16 %v1494, %v1490
  %v2603 = vpack.c.b16 %v1495, %v1491
  %v2604 = vpack.c.b16 %v1496, %v1492
  %v2605 = vpack.c.b16 %v1497, %v1493
  %v2606 = vpack.c.b16 %v1502, %v1498
  %v2607 = vpack.c.b16 %v1503, %v1499
  %v2608 = vpack.c.b16 %v1504, %v1500
  %v2609 = vpack.c.b16 %v1505, %v1501
  %v2610 = vpack.c.b16 %v1510, %v1506
  %v2611 = vpack.c.b16 %v1511, %v1507
  %v2612 = vpack.c.b16 %v1512, %v1508
  %v2613 = vpack.c.b16 %v1513, %v1509
  %v2614 = vpack.c.b16 %v1518, %v1514
  %v2615 = vpack.c.b16 %v1519, %v1515
  %v2616 = vpack.c.b16 %v1520, %v1516
  %v2617 = vpack.c.b16 %v1521, %v1517
  %v2618 = vpack.c.b16 %v1526, %v1522
  %v2619 = vpack.c.b16 %v1527, %v1523
  %v2620 = vpack.c.b16 %v1528, %v1524
  %v2621 = vpack.c.b16 %v1529, %v1525
  %v2622 = vpack.c.b16 %v1534, %v1530
  %v2623 = vpack.c.b16 %v1535, %v1531
  %v2624 = vpack.c.b16 %v1536, %v1532
  %v2625 = vpack.c.b16 %v1537, %v1533
  %v2626 = vpack.c.b16 %v1542, %v1538
  %v2627 = vpack.c.b16 %v1543, %v1539
  %v2628 = vpack.c.b16 %v1544, %v1540
  %v2629 = vpack.c.b16 %v1545, %v1541
  %v2630 = vpack.c.b16 %v1550, %v1546
  %v2631 = vpack.c.b16 %v1551, %v1547
  %v2632 = vpack.c.b16 %v1552, %v1548
  %v2633 = vpack.c.b16 %v1553, %v1549
  %v2634 = vpack.c.b16 %v1558, %v1554
  %v2635 = vpack.c.b16 %v1559, %v1555
  %v2636 = vpack.c.b16 %v1560, %v1556
  %v2637 = vpack.c.b16 %v1561, %v1557
  %v2638 = vpack.c.b16 %v1566, %v1562
  %v2639 = vpack.c.b16 %v1567, %v1563
  %v2640 = vpack.c.b16 %v1568, %v1564
  %v2641 = vpack.c.b16 %v1569, %v1565
  %v2642 = vpack.c.b16 %v1574, %v1570
  %v2643 = vpack.c.b16 %v1575, %v1571
  %v2644 = vpack.c.b16 %v1576, %v1572
  %v2645 = vpack.c.b16 %v1577, %v1573
  %v2646 = vpack.c.b16 %v1582, %v1578
  %v2647 = vpack.c.b16 %v1583, %v1579
  %v2648 = vpack.c.b16 %v1584, %v1580
  %v2649 = vpack.c.b16 %v1585, %v1581
  %v2650 = vpack.c.b16 %v1590, %v1586
  %v2651 = vpack.c.b16 %v1591, %v1587
  %v2652 = vpack.c.b16 %v1592, %v1588
  %v2653 = vpack.c.b16 %v1593, %v1589
  %v2654 = vpack.c.b16 %v1598, %v1594
  %v2655 = vpack.c.b16 %v1599, %v1595
  %v2656 = vpack.c.b16 %v1600, %v1596
  %v2657 = vpack.c.b16 %v1601, %v1597
  %v2658 = vpack.c.b16 %v1606, %v1602
  %v2659 = vpack.c.b16 %v1607, %v1603
  %v2660 = vpack.c.b16 %v1608, %v1604
  %v2661 = vpack.c.b16 %v1609, %v1605
  %v2662 = vpack.c.b16 %v1614, %v1610
  %v2663 = vpack.c.b16 %v1615, %v1611
  %v2664 = vpack.c.b16 %v1616, %v1612
  %v2665 = vpack.c.b16 %v1617, %v1613
  %v2666 = vpack.c.b16 %v1622, %v1618
  %v2667 = vpack.c.b16 %v1623, %v1619
  %v2668 = vpack.c.b16 %v1624, %v1620
  %v2669 = vpack.c.b16 %v1625, %v1621
  %v2670 = vpack.c.b16 %v1630, %v1626
  %v2671 = vpack.c.b16 %v1631, %v1627
  %v2672 = vpack.c.b16 %v1632, %v1628
  %v2673 = vpack.c.b16 %v1633, %v1629
  %v2674 = vpack.c.b16 %v1638, %v1634
  %v2675 = vpack.c.b16 %v1639, %v1635
  %v2676 = vpack.c.b16 %v1640, %v1636
  %v2677 = vpack.c.b16 %v1641, %v1637
  %v2678 = vpack.c.b16 %v1646, %v1642
  %v2679 = vpack.c.b16 %v1647, %v1643
  %v2680 = vpack.c.b16 %v1648, %v1644
  %v2681 = vpack.c.b16 %v1649, %v1645
  %v2682 = vpack.c.b16 %v1654, %v1650
  %v2683 = vpack.c.b16 %v1655, %v1651
  %v2684 = vpack.c.b16 %v1656, %v1652
  %v2685 = vpack.c.b16 %v1657, %v1653
  %v2686 = vpack.c.b16 %v1662, %v1658
  %v2687 = vpack.c.b16 %v1663, %v1659
  %v2688 = vpack.c.b16 %v1664, %v1660
  %v2689 = vpack.c.b16 %v1665, %v1661
  %v2690 = vpack.c.b16 %v1670, %v1666
  %v2691 = vpack.c.b16 %v1671, %v1667
  %v2692 = vpack.c.b16 %v1672, %v1668
  %v2693 = vpack.c.b16 %v1673, %v1669
  %v2694 = vpack.c.b16 %v1678, %v1674
  %v2695 = vpack.c.b16 %v1679, %v1675
  %v2696 = vpack.c.b16 %v1680, %v1676
  %v2697 = vpack.c.b16 %v1681, %v1677
  %v2698 = vpack.c.b16 %v1686, %v1682
  %v2699 = vpack.c.b16 %v1687, %v1683
  %v2700 = vpack.c.b16 %v1688, %v1684
  %v2701 = vpack.c.b16 %v1689, %v1685
  %v2702 = vpack.c.b16 %v1694, %v1690
  %v2703 = vpack.c.b16 %v1695, %v1691
  %v2704 = vpack.c.b16 %v1696, %v1692
  %v2705 = vpack.c.b16 %v1697, %v1693
  %v2706 = vpack.c.b16 %v1702, %v1698
  %v2707 = vpack.c.b16 %v1703, %v1699
  %v2708 = vpack.c.b16 %v1704, %v1700
  %v2709 = vpack.c.b16 %v1705, %v1701
  %v2710 = vpack.c.b16 %v1710, %v1706
  %v2711 = vpack.c.b16 %v1711, %v1707
  %v2712 = vpack.c.b16 %v1712, %v1708
  %v2713 = vpack.c.b16 %v1713, %v1709
  %v2714 = vpack.c.b16 %v1718, %v1714
  %v2715 = vpack.c.b16 %v1719, %v1715
  %v2716 = vpack.c.b16 %v1720, %v1716
  %v2717 = vpack.c.b16 %v1721, %v1717
  %v2718 = vpack.c.b16 %v1726, %v1722
  %v2719 = vpack.c.b16 %v1727, %v1723
  %v2720 = vpack.c.b16 %v1728, %v1724
  %v2721 = vpack.c.b16 %v1729, %v1725
  %v2722 = vpack.c.b16 %v1734, %v1730
  %v2723 = vpack.c.b16 %v1735, %v1731
  %v2724 = vpack.c.b16 %v1736, %v1732
  %v2725 = vpack.c.b16 %v1737, %v1733
  %v2726 = vpack.c.b16 %v1742, %v1738
  %v2727 = vpack.c.b16 %v1743, %v1739
  %v2728 = vpack.c.b16 %v1744, %v1740
  %v2729 = vpack.c.b16 %v1745, %v1741
  %v2730 = vpack.c.b16 %v1750, %v1746
  %v2731 = vpack.c.b16 %v1751, %v1747
  %v2732 = vpack.c.b16 %v1752, %v1748
  %v2733 = vpack.c.b16 %v1753, %v1749
  %v2734 = vpack.c.b16 %v1758, %v1754
  %v2735 = vpack.c.b16 %v1759, %v1755
  %v2736 = vpack.c.b16 %v1760, %v1756
  %v2737 = vpack.c.b16 %v1761, %v1757
  %v2738 = vpack.c.b16 %v1766, %v1762
  %v2739 = vpack.c.b16 %v1767, %v1763
  %v2740 = vpack.c.b16 %v1768, %v1764
  %v2741 = vpack.c.b16 %v1769, %v1765
  %v2742 = vpack.c.b16 %v1774, %v1770
  %v2743 = vpack.c.b16 %v1775, %v1771
  %v2744 = vpack.c.b16 %v1776, %v1772
  %v2745 = vpack.c.b16 %v1777, %v1773
  %v2746 = vpack.c.b16 %v1782, %v1778
  %v2747 = vpack.c.b16 %v1783, %v1779
  %v2748 = vpack.c.b16 %v1784, %v1780
  %v2749 = vpack.c.b16 %v1785, %v1781
  %v2750 = vpack.c.b16 %v1790, %v1786
  %v2751 = vpack.c.b16 %v1791, %v1787
  %v2752 = vpack.c.b16 %v1792, %v1788
  %v2753 = vpack.c.b16 %v1793, %v1789
  %v2754 = vpack.c.b16 %v1798, %v1794
  %v2755 = vpack.c.b16 %v1799, %v1795
  %v2756 = vpack.c.b16 %v1800, %v1796
  %v2757 = vpack.c.b16 %v1801, %v1797
  %v2758 = vpack.c.b16 %v1806, %v1802
  %v2759 = vpack.c.b16 %v1807, %v1803
  %v2760 = vpack.c.b16 %v1808, %v1804
  %v2761 = vpack.c.b16 %v1809, %v1805
  %v2762 = vpack.c.b16 %v1814, %v1810
  %v2763 = vpack.c.b16 %v1815, %v1811
  %v2764 = vpack.c.b16 %v1816, %v1812
  %v2765 = vpack.c.b16 %v1817, %v1813
  %v2766 = vpack.c.b16 %v1822, %v1818
  %v2767 = vpack.c.b16 %v1823, %v1819
  %v2768 = vpack.c.b16 %v1824, %v1820
  %v2769 = vpack.c.b16 %v1825, %v1821
  %v2770 = vpack.c.b16 %v1830, %v1826
  %v2771 = vpack.c.b16 %v1831, %v1827
  %v2772 = vpack.c.b16 %v1832, %v1828
  %v2773 = vpack.c.b16 %v1833, %v1829
  %v2774 = vpack.c.b16 %v1838, %v1834
  %v2775 = vpack.c.b16 %v1839, %v1835
  %v2776 = vpack.c.b16 %v1840, %v1836
  %v2777 = vpack.c.b16 %v1841, %v1837
  %v2778 = vpack.c.b16 %v1846, %v1842
  %v2779 = vpack.c.b16 %v1847, %v1843
  %v2780 = vpack.c.b16 %v1848, %v1844
  %v2781 = vpack.c.b16 %v1849, %v1845
  %v2782 = vpack.c.b16 %v1854, %v1850
  %v2783 = vpack.c.b16 %v1855, %v1851
  %v2784 = vpack.c.b16 %v1856, %v1852
  %v2785 = vpack.c.b16 %v1857, %v1853
  %v2786 = vpack.c.b16 %v1862, %v1858
  %v2787 = vpack.c.b16 %v1863, %v1859
  %v2788 = vpack.c.b16 %v1864, %v1860
  %v2789 = vpack.c.b16 %v1865, %v1861
  %v2790 = vpack.c.b16 %v1870, %v1866
  %v2791 = vpack.c.b16 %v1871, %v1867
  %v2792 = vpack.c.b16 %v1872, %v1868
  %v2793 = vpack.c.b16 %v1873, %v1869
  %v2794 = vpack.c.b16 %v1878, %v1874
  %v2795 = vpack.c.b16 %v1879, %v1875
  %v2796 = vpack.c.b16 %v1880, %v1876
  %v2797 = vpack.c.b16 %v1881, %v1877
  %v2798 = vpack.c.b16 %v1886, %v1882
  %v2799 = vpack.c.b16 %v1887, %v1883
  %v2800 = vpack.c.b16 %v1888, %v1884
  %v2801 = vpack.c.b16 %v1889, %v1885
  %v2802 = vpack.c.b16 %v1894, %v1890
  %v2803 = vpack.c.b16 %v1895, %v1891
  %v2804 = vpack.c.b16 %v1896, %v1892
  %v2805 = vpack.c.b16 %v1897, %v1893
  %v2806 = vpack.c.b16 %v1902, %v1898
  %v2807 = vpack.c.b16 %v1903, %v1899
  %v2808 = vpack.c.b16 %v1904, %v1900
  %v2809 = vpack.c.b16 %v1905, %v1901
  %v2810 = vpack.c.b16 %v1910, %v1906
  %v2811 = vpack.c.b16 %v1911, %v1907
  %v2812 = vpack.c.b16 %v1912, %v1908
  %v2813 = vpack.c.b16 %v1913, %v1909
  %v2814 = vpack.c.b16 %v1918, %v1914
  %v2815 = vpack.c.b16 %v1919, %v1915
  %v2816 = vpack.c.b16 %v1920, %v1916
  %v2817 = vpack.c.b16 %v1921, %v1917
  %v2818 = vpack.c.b16 %v1926, %v1922
  %v2819 = vpack.c.b16 %v1927, %v1923
  %v2820 = vpack.c.b16 %v1928, %v1924
  %v2821 = vpack.c.b16 %v1929, %v1925
  %v2822 = vpack.c.b16 %v1934, %v1930
  %v2823 = vpack.c.b16 %v1935, %v1931
  %v2824 = vpack.c.b16 %v1936, %v1932
  %v2825 = vpack.c.b16 %v1937, %v1933
  %v2826 = vpack.c.b16 %v1942, %v1938
  %v2827 = vpack.c.b16 %v1943, %v1939
  %v2828 = vpack.c.b16 %v1944, %v1940
  %v2829 = vpack.c.b16 %v1945, %v1941
  %v2830 = vpack.c.b16 %v1950, %v1946
  %v2831 = vpack.c.b16 %v1951, %v1947
  %v2832 = vpack.c.b16 %v1952, %v1948
  %v2833 = vpack.c.b16 %v1953, %v1949
  %v2834 = vpack.c.b16 %v1958, %v1954
  %v2835 = vpack.c.b16 %v1959, %v1955
  %v2836 = vpack.c.b16 %v1960, %v1956
  %v2837 = vpack.c.b16 %v1961, %v1957
  %v2838 = vpack.c.b16 %v1966, %v1962
  %v2839 = vpack.c.b16 %v1967, %v1963
  %v2840 = vpack.c.b16 %v1968, %v1964
  %v2841 = vpack.c.b16 %v1969, %v1965
  %v2842 = vpack.c.b16 %v1974, %v1970
  %v2843 = vpack.c.b16 %v1975, %v1971
  %v2844 = vpack.c.b16 %v1976, %v1972
  %v2845 = vpack.c.b16 %v1977, %v1973
  %v2846 = vpack.c.b16 %v1982, %v1978
  %v2847 = vpack.c.b16 %v1983, %v1979
  %v2848 = vpack.c.b16 %v1984, %v1980
  %v2849 = vpack.c.b16 %v1985, %v1981
  %v2850 = vpack.c.b16 %v1990, %v1986
  %v2851 = vpack.c.b16 %v1991, %v1987
  %v2852 = vpack.c.b16 %v1992, %v1988
  %v2853 = vpack.c.b16 %v1993, %v1989
  %v2854 = vpack.c.b16 %v1998, %v1994
  %v2855 = vpack.c.b16 %v1999, %v1995
  %v2856 = vpack.c.b16 %v2000, %v1996
  %v2857 = vpack.c.b16 %v2001, %v1997
  %v2858 = vpack.c.b16 %v2006, %v2002
  %v2859 = vpack.c.b16 %v2007, %v2003
  %v2860 = vpack.c.b16 %v2008, %v2004
  %v2861 = vpack.c.b16 %v2009, %v2005
  %v2862 = vpack.c.b16 %v2014, %v2010
  %v2863 = vpack.c.b16 %v2015, %v2011
  %v2864 = vpack.c.b16 %v2016, %v2012
  %v2865 = vpack.c.b16 %v2017, %v2013
  %v2866 = vpack.c.b16 %v2022, %v2018
  %v2867 = vpack.c.b16 %v2023, %v2019
  %v2868 = vpack.c.b16 %v2024, %v2020
  %v2869 = vpack.c.b16 %v2025, %v2021
  %v2870 = vpack.c.b16 %v2030, %v2026
  %v2871 = vpack.c.b16 %v2031, %v2027
  %v2872 = vpack.c.b16 %v2032, %v2028
  %v2873 = vpack.c.b16 %v2033, %v2029
  %v2874 = vpack.c.b16 %v2038, %v2034
  %v2875 = vpack.c.b16 %v2039, %v2035
  %v2876 = vpack.c.b16 %v2040, %v2036
  %v2877 = vpack.c.b16 %v2041, %v2037
  %v2878 = vpack.c.b16 %v2046, %v2042
  %v2879 = vpack.c.b16 %v2047, %v2043
  %v2880 = vpack.c.b16 %v2048, %v2044
  %v2881 = vpack.c.b16 %v2049, %v2045
  %v2882 = vpack.c.b16 %v2054, %v2050
  %v2883 = vpack.c.b16 %v2055, %v2051
  %v2884 = vpack.c.b16 %v2056, %v2052
  %v2885 = vpack.c.b16 %v2057, %v2053
  %v2886 = vpack.c.b16 %v2062, %v2058
  %v2887 = vpack.c.b16 %v2063, %v2059
  %v2888 = vpack.c.b16 %v2064, %v2060
  %v2889 = vpack.c.b16 %v2065, %v2061
  %v2890 = vpack.c.b16 %v2070, %v2066
  %v2891 = vpack.c.b16 %v2071, %v2067
  %v2892 = vpack.c.b16 %v2072, %v2068
  %v2893 = vpack.c.b16 %v2073, %v2069
  %v2894 = vpack.c.b16 %v2078, %v2074
  %v2895 = vpack.c.b16 %v2079, %v2075
  %v2896 = vpack.c.b16 %v2080, %v2076
  %v2897 = vpack.c.b16 %v2081, %v2077
  %v2898 = vpack.c.b16 %v2086, %v2082
  %v2899 = vpack.c.b16 %v2087, %v2083
  %v2900 = vpack.c.b16 %v2088, %v2084
  %v2901 = vpack.c.b16 %v2089, %v2085
  %v2902 = vpack.c.b16 %v2094, %v2090
  %v2903 = vpack.c.b16 %v2095, %v2091
  %v2904 = vpack.c.b16 %v2096, %v2092
  %v2905 = vpack.c.b16 %v2097, %v2093
  %v2906 = vpack.c.b16 %v2102, %v2098
  %v2907 = vpack.c.b16 %v2103, %v2099
  %v2908 = vpack.c.b16 %v2104, %v2100
  %v2909 = vpack.c.b16 %v2105, %v2101
  %v2910 = vpack.c.b16 %v2110, %v2106
  %v2911 = vpack.c.b16 %v2111, %v2107
  %v2912 = vpack.c.b16 %v2112, %v2108
  %v2913 = vpack.c.b16 %v2113, %v2109
  %v2914 = vpack.c.b16 %v2118, %v2114
  %v2915 = vpack.c.b16 %v2119, %v2115
  %v2916 = vpack.c.b16 %v2120, %v2116
  %v2917 = vpack.c.b16 %v2121, %v2117
  %v2918 = vpack.c.b16 %v2126, %v2122
  %v2919 = vpack.c.b16 %v2127, %v2123
  %v2920 = vpack.c.b16 %v2128, %v2124
  %v2921 = vpack.c.b16 %v2129, %v2125
  %v2922 = vpack.c.b16 %v2134, %v2130
  %v2923 = vpack.c.b16 %v2135, %v2131
  %v2924 = vpack.c.b16 %v2136, %v2132
  %v2925 = vpack.c.b16 %v2137, %v2133
  %v2926 = vpack.c.b16 %v2142, %v2138
  %v2927 = vpack.c.b16 %v2143, %v2139
  %v2928 = vpack.c.b16 %v2144, %v2140
  %v2929 = vpack.c.b16 %v2145, %v2141
  %v2930 = vpack.c.b16 %v2150, %v2146
  %v2931 = vpack.c.b16 %v2151, %v2147
  %v2932 = vpack.c.b16 %v2152, %v2148
  %v2933 = vpack.c.b16 %v2153, %v2149
  %v2934 = vpack.c.b16 %v2158, %v2154
  %v2935 = vpack.c.b16 %v2159, %v2155
  %v2936 = vpack.c.b16 %v2160, %v2156
  %v2937 = vpack.c.b16 %v2161, %v2157
  %v2938 = vpack.c.b16 %v2166, %v2162
  %v2939 = vpack.c.b16 %v2167, %v2163
  %v2940 = vpack.c.b16 %v2168, %v2164
  %v2941 = vpack.c.b16 %v2169, %v2165
  %v2942 = vpack.c.b16 %v2174, %v2170
  %v2943 = vpack.c.b16 %v2175, %v2171
  %v2944 = vpack.c.b16 %v2176, %v2172
  %v2945 = vpack.c.b16 %v2177, %v2173
  %v2946 = vpack.c.b16 %v2182, %v2178
  %v2947 = vpack.c.b16 %v2183, %v2179
  %v2948 = vpack.c.b16 %v2184, %v2180
  %v2949 = vpack.c.b16 %v2185, %v2181
  %v2950 = vpack.c.b16 %v2190, %v2186
  %v2951 = vpack.c.b16 %v2191, %v2187
  %v2952 = vpack.c.b16 %v2192, %v2188
  %v2953 = vpack.c.b16 %v2193, %v2189
  %v2954 = vpack.c.b16 %v2198, %v2194
  %v2955 = vpack.c.b16 %v2199, %v2195
  %v2956 = vpack.c.b16 %v2200, %v2196
  %v2957 = vpack.c.b16 %v2201, %v2197
  %v2958 = vpack.c.b16 %v2206, %v2202
  %v2959 = vpack.c.b16 %v2207, %v2203
  %v2960 = vpack.c.b16 %v2208, %v2204
  %v2961 = vpack.c.b16 %v2209, %v2205
  %v2962 = vpack.c.b16 %v2214, %v2210
  %v2963 = vpack.c.b16 %v2215, %v2211
  %v2964 = vpack.c.b16 %v2216, %v2212
  %v2965 = vpack.c.b16 %v2217, %v2213
  %v2966 = vpack.c.b16 %v2222, %v2218
  %v2967 = vpack.c.b16 %v2223, %v2219
  %v2968 = vpack.c.b16 %v2224, %v2220
  %v2969 = vpack.c.b16 %v2225, %v2221
  %v2970 = vpack.c.b16 %v2230, %v2226
  %v2971 = vpack.c.b16 %v2231, %v2227
  %v2972 = vpack.c.b16 %v2232, %v2228
  %v2973 = vpack.c.b16 %v2233, %v2229
  %v2974 = vpack.c.b16 %v2238, %v2234
  %v2975 = vpack.c.b16 %v2239, %v2235
  %v2976 = vpack.c.b16 %v2240, %v2236
  %v2977 = vpack.c.b16 %v2241, %v2237
  %v2978 = vpack.c.b16 %v2246, %v2242
  %v2979 = vpack.c.b16 %v2247, %v2243
  %v2980 = vpack.c.b16 %v2248, %v2244
  %v2981 = vpack.c.b16 %v2249, %v2245
  %v2982 = vpack.c.b16 %v2254, %v2250
  %v2983 = vpack.c.b16 %v2255, %v2251
  %v2984 = vpack.c.b16 %v2256, %v2252
  %v2985 = vpack.c.b16 %v2257, %v2253
  %v2986 = vpack.c.b16 %v2262, %v2258
  %v2987 = vpack.c.b16 %v2263, %v2259
  %v2988 = vpack.c.b16 %v2264, %v2260
  %v2989 = vpack.c.b16 %v2265, %v2261
  %v2990 = vpack.c.b16 %v2270, %v2266
  %v2991 = vpack.c.b16 %v2271, %v2267
  %v2992 = vpack.c.b16 %v2272, %v2268
  %v2993 = vpack.c.b16 %v2273, %v2269
  %v2994 = vpack.c.b16 %v2278, %v2274
  %v2995 = vpack.c.b16 %v2279, %v2275
  %v2996 = vpack.c.b16 %v2280, %v2276
  %v2997 = vpack.c.b16 %v2281, %v2277
  %v2998 = vpack.c.b16 %v2286, %v2282
  %v2999 = vpack.c.b16 %v2287, %v2283
  %v3000 = vpack.c.b16 %v2288, %v2284
  %v3001 = vpack.c.b16 %v2289, %v2285
  %v3002 = vpack.c.b16 %v2294, %v2290
  %v3003 = vpack.c.b16 %v2295, %v2291
  %v3004 = vpack.c.b16 %v2296, %v2292
  %v3005 = vpack.c.b16 %v2297, %v2293
  %v3006 = vpack.c.b16 %v2302, %v2298
  %v3007 = vpack.c.b16 %v2303, %v2299
  %v3008 = vpack.c.b16 %v2304, %v2300
  %v3009 = vpack.c.b16 %v2305, %v2301
  %v3010 = vpack.c.b16 %v2310, %v2306
  %v3011 = vpack.c.b16 %v2311, %v2307
  %v3012 = vpack.c.b16 %v2312, %v2308
  %v3013 = vpack.c.b16 %v2313, %v2309
  %v3014 = vpack.c.b16 %v2318, %v2314
  %v3015 = vpack.c.b16 %v2319, %v2315
  %v3016 = vpack.c.b16 %v2320, %v2316
  %v3017 = vpack.c.b16 %v2321, %v2317
  %v3018 = vpack.c.b16 %v2326, %v2322
  %v3019 = vpack.c.b16 %v2327, %v2323
  %v3020 = vpack.c.b16 %v2328, %v2324
  %v3021 = vpack.c.b16 %v2329, %v2325
  %v3022 = vpack.c.b16 %v2334, %v2330
  %v3023 = vpack.c.b16 %v2335, %v2331
  %v3024 = vpack.c.b16 %v2336, %v2332
  %v3025 = vpack.c.b16 %v2337, %v2333
  %v3026 = vpack.c.b16 %v2342, %v2338
  %v3027 = vpack.c.b16 %v2343, %v2339
  %v3028 = vpack.c.b16 %v2344, %v2340
  %v3029 = vpack.c.b16 %v2345, %v2341
  %v3030 = vpack.c.b16 %v2350, %v2346
  %v3031 = vpack.c.b16 %v2351, %v2347
  %v3032 = vpack.c.b16 %v2352, %v2348
  %v3033 = vpack.c.b16 %v2353, %v2349
  %v3034 = vpack.c.b16 %v2358, %v2354
  %v3035 = vpack.c.b16 %v2359, %v2355
  %v3036 = vpack.c.b16 %v2360, %v2356
  %v3037 = vpack.c.b16 %v2361, %v2357
  %v3038 = vpack.c.b16 %v2366, %v2362
  %v3039 = vpack.c.b16 %v2367, %v2363
  %v3040 = vpack.c.b16 %v2368, %v2364
  %v3041 = vpack.c.b16 %v2369, %v2365
  %v3042 = vpack.c.b16 %v2374, %v2370
  %v3043 = vpack.c.b16 %v2375, %v2371
  %v3044 = vpack.c.b16 %v2376, %v2372
  %v3045 = vpack.c.b16 %v2377, %v2373
  %v3046 = vpack.c.b16 %v2382, %v2378
  %v3047 = vpack.c.b16 %v2383, %v2379
  %v3048 = vpack.c.b16 %v2384, %v2380
  %v3049 = vpack.c.b16 %v2385, %v2381
  %v3050 = vpack.c.b16 %v2390, %v2386
  %v3051 = vpack.c.b16 %v2391, %v2387
  %v3052 = vpack.c.b16 %v2392, %v2388
  %v3053 = vpack.c.b16 %v2393, %v2389
  %v3054 = vpack.c.b16 %v2398, %v2394
  %v3055 = vpack.c.b16 %v2399, %v2395
  %v3056 = vpack.c.b16 %v2400, %v2396
  %v3057 = vpack.c.b16 %v2401, %v2397
  %v3058 = vpack.c.b16 %v2406, %v2402
  %v3059 = vpack.c.b16 %v2407, %v2403
  %v3060 = vpack.c.b16 %v2408, %v2404
  %v3061 = vpack.c.b16 %v2409, %v2405
  %v3062 = vpack.c.b16 %v2414, %v2410
  %v3063 = vpack.c.b16 %v2415, %v2411
  %v3064 = vpack.c.b16 %v2416, %v2412
  %v3065 = vpack.c.b16 %v2417, %v2413
  %v3066 = vpack.c.b16 %v2422, %v2418
  %v3067 = vpack.c.b16 %v2423, %v2419
  %v3068 = vpack.c.b16 %v2424, %v2420
  %v3069 = vpack.c.b16 %v2425, %v2421
  %v3070 = vpack.c.b16 %v2430, %v2426
  %v3071 = vpack.c.b16 %v2431, %v2427
  %v3072 = vpack.c.b16 %v2432, %v2428
  %v3073 = vpack.c.b16 %v2433, %v2429
  %v3074 = vpack.c.b16 %v2438, %v2434
  %v3075 = vpack.c.b16 %v2439, %v2435
  %v3076 = vpack.c.b16 %v2440, %v2436
  %v3077 = vpack.c.b16 %v2441, %v2437
  %v3078 = vpack.c.b16 %v2446, %v2442
  %v3079 = vpack.c.b16 %v2447, %v2443
  %v3080 = vpack.c.b16 %v2448, %v2444
  %v3081 = vpack.c.b16 %v2449, %v2445
  %v3082 = vpack.c.b16 %v2454, %v2450
  %v3083 = vpack.c.b16 %v2455, %v2451
  %v3084 = vpack.c.b16 %v2456, %v2452
  %v3085 = vpack.c.b16 %v2457, %v2453
  %v3086 = vpack.c.b16 %v2462, %v2458
  %v3087 = vpack.c.b16 %v2463, %v2459
  %v3088 = vpack.c.b16 %v2464, %v2460
  %v3089 = vpack.c.b16 %v2465, %v2461
  %v3090 = vpack.c.b16 %v2470, %v2466
  %v3091 = vpack.c.b16 %v2471, %v2467
  %v3092 = vpack.c.b16 %v2472, %v2468
  %v3093 = vpack.c.b16 %v2473, %v2469
  %v3094 = vpack.c.b16 %v2478, %v2474
  %v3095 = vpack.c.b16 %v2479, %v2475
  %v3096 = vpack.c.b16 %v2480, %v2476
  %v3097 = vpack.c.b16 %v2481, %v2477
  %v3098 = vpack.c.b16 %v2486, %v2482
  %v3099 = vpack.c.b16 %v2487, %v2483
  %v3100 = vpack.c.b16 %v2488, %v2484
  %v3101 = vpack.c.b16 %v2489, %v2485
  %v3102 = vpack.c.b16 %v2494, %v2490
  %v3103 = vpack.c.b16 %v2495, %v2491
  %v3104 = vpack.c.b16 %v2496, %v2492
  %v3105 = vpack.c.b16 %v2497, %v2493
  %v3106 = vpack.c.b16 %v2502, %v2498
  %v3107 = vpack.c.b16 %v2503, %v2499
  %v3108 = vpack.c.b16 %v2504, %v2500
  %v3109 = vpack.c.b16 %v2505, %v2501
  %v3110 = vpack.c.b16 %v2510, %v2506
  %v3111 = vpack.c.b16 %v2511, %v2507
  %v3112 = vpack.c.b16 %v2512, %v2508
  %v3113 = vpack.c.b16 %v2513, %v2509
  %v3114 = vpack.c.b16 %v2518, %v2514
  %v3115 = vpack.c.b16 %v2519, %v2515
  %v3116 = vpack.c.b16 %v2520, %v2516
  %v3117 = vpack.c.b16 %v2521, %v2517
  %v3118 = vpack.c.b16 %v2526, %v2522
  %v3119 = vpack.c.b16 %v2527, %v2523
  %v3120 = vpack.c.b16 %v2528, %v2524
  %v3121 = vpack.c.b16 %v2529, %v2525
  %v3122 = vpack.c.b16 %v2534, %v2530
  %v3123 = vpack.c.b16 %v2535, %v2531
  %v3124 = vpack.c.b16 %v2536, %v2532
  %v3125 = vpack.c.b16 %v2537, %v2533
  %v3126 = vpack.c.b16 %v2542, %v2538
  %v3127 = vpack.c.b16 %v2543, %v2539
  %v3128 = vpack.c.b16 %v2544, %v2540
  %v3129 = vpack.c.b16 %v2545, %v2541
  %v3130 = vpack.c.b16 %v2550, %v2546
  %v3131 = vpack.c.b16 %v2551, %v2547
  %v3132 = vpack.c.b16 %v2552, %v2548
  %v3133 = vpack.c.b16 %v2553, %v2549
  %v3134 = vpack.c.b16 %v2558, %v2554
  %v3135 = vpack.c.b16 %v2559, %v2555
  %v3136 = vpack.c.b16 %v2560, %v2556
  %v3137 = vpack.c.b16 %v2561, %v2557
  %3714 = vmatprep.subr.bf16.mxu0 %v2591
  %3715 = vmatpush1.bf16.msra.mxu0 %v2590
  %3716 = vmatprep.subr.bf16.mxu0 %v2587
  %3717 = vmatpush1.bf16.msra.mxu0 %v2586
  %3718 = vmatprep.subr.bf16.mxu0 %v2583
  %3719 = vmatpush1.bf16.msra.mxu0 %v2582
  %3720 = vmatprep.subr.bf16.mxu0 %v2579
  %3721 = vmatpush1.bf16.msra.mxu0 %v2578
  %3722 = vmatprep.subr.bf16.mxu0 %v2575
  %3723 = vmatpush1.bf16.msra.mxu0 %v2574
  %3724 = vmatprep.subr.bf16.mxu0 %v2571
  %3725 = vmatpush1.bf16.msra.mxu0 %v2570
  %3726 = vmatprep.subr.bf16.mxu0 %v2567
  %3727 = vmatpush1.bf16.msra.mxu0 %v2566
  %3728 = vmatprep.subr.bf16.mxu0 %v2563
  %3729 = vmatpush1.bf16.msra.mxu0 %v2562
  %3730 = vmatprep.subr.bf16.mxu0 %v2623
  %3731 = vmatpush2.bf16.msra.mxu0 %v2622
  %3732 = vmatprep.subr.bf16.mxu0 %v2619
  %3733 = vmatpush2.bf16.msra.mxu0 %v2618
  %3734 = vmatprep.subr.bf16.mxu0 %v2615
  %3735 = vmatpush2.bf16.msra.mxu0 %v2614
  %3736 = vmatprep.subr.bf16.mxu0 %v2611
  %3737 = vmatpush2.bf16.msra.mxu0 %v2610
  %3738 = vmatprep.subr.bf16.mxu0 %v2607
  %3739 = vmatpush2.bf16.msra.mxu0 %v2606
  %3740 = vmatprep.subr.bf16.mxu0 %v2603
  %3741 = vmatpush2.bf16.msra.mxu0 %v2602
  %3742 = vmatprep.subr.bf16.mxu0 %v2599
  %3743 = vmatpush2.bf16.msra.mxu0 %v2598
  %3744 = vmatprep.subr.bf16.mxu0 %v2595
  %3745 = vmatpush2.bf16.msra.mxu0 %v2594
  %3746 = vmatprep.mubr.bf16.mxu0 %v763
  %3747 = vmatmul.mubr.bf16.gmra.mxu0 %v762
  %v3748 = vpop.f32.mrf.mxu0
  %v3749 = vadd.f32 %v637, %v3748
  %v3750 = vpop.f32.mrf.mxu0
  %v3751 = vadd.f32 %v641, %v3750
  %v3752 = vpop.f32.mrf.mxu0
  %v3753 = vadd.f32 %v637, %v3752
  %v3754 = vpop.f32.mrf.mxu0
  %v3755 = vadd.f32 %v641, %v3754
  %3756 = vmatprep.mubr.bf16.mxu0 %v781
  %3757 = vmatmul.mubr.bf16.gmra.mxu0 %v780
  %v3758 = vpop.f32.mrf.mxu0
  %v3759 = vadd.f32 %v637, %v3758
  %v3760 = vpop.f32.mrf.mxu0
  %v3761 = vadd.f32 %v641, %v3760
  %v3762 = vpop.f32.mrf.mxu0
  %v3763 = vadd.f32 %v637, %v3762
  %v3764 = vpop.f32.mrf.mxu0
  %v3765 = vadd.f32 %v641, %v3764
  %3766 = vdwg.mxu0
  %3767 = vmatprep.subr.bf16.mxu0 %v2655
  %3768 = vmatpush1.bf16.msra.mxu0 %v2654
  %3769 = vmatprep.subr.bf16.mxu0 %v2651
  %3770 = vmatpush1.bf16.msra.mxu0 %v2650
  %3771 = vmatprep.subr.bf16.mxu0 %v2647
  %3772 = vmatpush1.bf16.msra.mxu0 %v2646
  %3773 = vmatprep.subr.bf16.mxu0 %v2643
  %3774 = vmatpush1.bf16.msra.mxu0 %v2642
  %3775 = vmatprep.subr.bf16.mxu0 %v2639
  %3776 = vmatpush1.bf16.msra.mxu0 %v2638
  %3777 = vmatprep.subr.bf16.mxu0 %v2635
  %3778 = vmatpush1.bf16.msra.mxu0 %v2634
  %3779 = vmatprep.subr.bf16.mxu0 %v2631
  %3780 = vmatpush1.bf16.msra.mxu0 %v2630
  %3781 = vmatprep.subr.bf16.mxu0 %v2627
  %3782 = vmatpush1.bf16.msra.mxu0 %v2626
  %3783 = vmatprep.subr.bf16.mxu0 %v2687
  %3784 = vmatpush2.bf16.msra.mxu0 %v2686
  %3785 = vmatprep.subr.bf16.mxu0 %v2683
  %3786 = vmatpush2.bf16.msra.mxu0 %v2682
  %3787 = vmatprep.subr.bf16.mxu0 %v2679
  %3788 = vmatpush2.bf16.msra.mxu0 %v2678
  %3789 = vmatprep.subr.bf16.mxu0 %v2675
  %3790 = vmatpush2.bf16.msra.mxu0 %v2674
  %3791 = vmatprep.subr.bf16.mxu0 %v2671
  %3792 = vmatpush2.bf16.msra.mxu0 %v2670
  %3793 = vmatprep.subr.bf16.mxu0 %v2667
  %3794 = vmatpush2.bf16.msra.mxu0 %v2666
  %3795 = vmatprep.subr.bf16.mxu0 %v2663
  %3796 = vmatpush2.bf16.msra.mxu0 %v2662
  %3797 = vmatprep.subr.bf16.mxu0 %v2659
  %3798 = vmatpush2.bf16.msra.mxu0 %v2658
  %3799 = vmatprep.mubr.bf16.mxu0 %v765
  %3800 = vmatmul.mubr.bf16.gmra.mxu0 %v764
  %v3801 = vpop.f32.mrf.mxu0
  %v3802 = vadd.f32 %v3749, %v3801
  %v3803 = vpop.f32.mrf.mxu0
  %v3804 = vadd.f32 %v3751, %v3803
  %v3805 = vpop.f32.mrf.mxu0
  %v3806 = vadd.f32 %v3753, %v3805
  %v3807 = vpop.f32.mrf.mxu0
  %v3808 = vadd.f32 %v3755, %v3807
  %3809 = vmatprep.mubr.bf16.mxu0 %v783
  %3810 = vmatmul.mubr.bf16.gmra.mxu0 %v782
  %v3811 = vpop.f32.mrf.mxu0
  %v3812 = vadd.f32 %v3759, %v3811
  %v3813 = vpop.f32.mrf.mxu0
  %v3814 = vadd.f32 %v3761, %v3813
  %v3815 = vpop.f32.mrf.mxu0
  %v3816 = vadd.f32 %v3763, %v3815
  %v3817 = vpop.f32.mrf.mxu0
  %v3818 = vadd.f32 %v3765, %v3817
  %3819 = vdwg.mxu0
  %3820 = vmatprep.subr.bf16.mxu0 %v2719
  %3821 = vmatpush1.bf16.msra.mxu0 %v2718
  %3822 = vmatprep.subr.bf16.mxu0 %v2715
  %3823 = vmatpush1.bf16.msra.mxu0 %v2714
  %3824 = vmatprep.subr.bf16.mxu0 %v2711
  %3825 = vmatpush1.bf16.msra.mxu0 %v2710
  %3826 = vmatprep.subr.bf16.mxu0 %v2707
  %3827 = vmatpush1.bf16.msra.mxu0 %v2706
  %3828 = vmatprep.subr.bf16.mxu0 %v2703
  %3829 = vmatpush1.bf16.msra.mxu0 %v2702
  %3830 = vmatprep.subr.bf16.mxu0 %v2699
  %3831 = vmatpush1.bf16.msra.mxu0 %v2698
  %3832 = vmatprep.subr.bf16.mxu0 %v2695
  %3833 = vmatpush1.bf16.msra.mxu0 %v2694
  %3834 = vmatprep.subr.bf16.mxu0 %v2691
  %3835 = vmatpush1.bf16.msra.mxu0 %v2690
  %3836 = vmatprep.subr.bf16.mxu0 %v2751
  %3837 = vmatpush2.bf16.msra.mxu0 %v2750
  %3838 = vmatprep.subr.bf16.mxu0 %v2747
  %3839 = vmatpush2.bf16.msra.mxu0 %v2746
  %3840 = vmatprep.subr.bf16.mxu0 %v2743
  %3841 = vmatpush2.bf16.msra.mxu0 %v2742
  %3842 = vmatprep.subr.bf16.mxu0 %v2739
  %3843 = vmatpush2.bf16.msra.mxu0 %v2738
  %3844 = vmatprep.subr.bf16.mxu0 %v2735
  %3845 = vmatpush2.bf16.msra.mxu0 %v2734
  %3846 = vmatprep.subr.bf16.mxu0 %v2731
  %3847 = vmatpush2.bf16.msra.mxu0 %v2730
  %3848 = vmatprep.subr.bf16.mxu0 %v2727
  %3849 = vmatpush2.bf16.msra.mxu0 %v2726
  %3850 = vmatprep.subr.bf16.mxu0 %v2723
  %3851 = vmatpush2.bf16.msra.mxu0 %v2722
  %3852 = vmatprep.mubr.bf16.mxu0 %v767
  %3853 = vmatmul.mubr.bf16.gmra.mxu0 %v766
  %v3854 = vpop.f32.mrf.mxu0
  %v3855 = vadd.f32 %v3802, %v3854
  %v3856 = vpop.f32.mrf.mxu0
  %v3857 = vadd.f32 %v3804, %v3856
  %v3858 = vpop.f32.mrf.mxu0
  %v3859 = vadd.f32 %v3806, %v3858
  %v3860 = vpop.f32.mrf.mxu0
  %v3861 = vadd.f32 %v3808, %v3860
  %3862 = vmatprep.mubr.bf16.mxu0 %v785
  %3863 = vmatmul.mubr.bf16.gmra.mxu0 %v784
  %v3864 = vpop.f32.mrf.mxu0
  %v3865 = vadd.f32 %v3812, %v3864
  %v3866 = vpop.f32.mrf.mxu0
  %v3867 = vadd.f32 %v3814, %v3866
  %v3868 = vpop.f32.mrf.mxu0
  %v3869 = vadd.f32 %v3816, %v3868
  %v3870 = vpop.f32.mrf.mxu0
  %v3871 = vadd.f32 %v3818, %v3870
  %3872 = vdwg.mxu0
  %3873 = vmatprep.subr.bf16.mxu0 %v2783
  %3874 = vmatpush1.bf16.msra.mxu0 %v2782
  %3875 = vmatprep.subr.bf16.mxu0 %v2779
  %3876 = vmatpush1.bf16.msra.mxu0 %v2778
  %3877 = vmatprep.subr.bf16.mxu0 %v2775
  %3878 = vmatpush1.bf16.msra.mxu0 %v2774
  %3879 = vmatprep.subr.bf16.mxu0 %v2771
  %3880 = vmatpush1.bf16.msra.mxu0 %v2770
  %3881 = vmatprep.subr.bf16.mxu0 %v2767
  %3882 = vmatpush1.bf16.msra.mxu0 %v2766
  %3883 = vmatprep.subr.bf16.mxu0 %v2763
  %3884 = vmatpush1.bf16.msra.mxu0 %v2762
  %3885 = vmatprep.subr.bf16.mxu0 %v2759
  %3886 = vmatpush1.bf16.msra.mxu0 %v2758
  %3887 = vmatprep.subr.bf16.mxu0 %v2755
  %3888 = vmatpush1.bf16.msra.mxu0 %v2754
  %3889 = vmatprep.subr.bf16.mxu0 %v2815
  %3890 = vmatpush2.bf16.msra.mxu0 %v2814
  %3891 = vmatprep.subr.bf16.mxu0 %v2811
  %3892 = vmatpush2.bf16.msra.mxu0 %v2810
  %3893 = vmatprep.subr.bf16.mxu0 %v2807
  %3894 = vmatpush2.bf16.msra.mxu0 %v2806
  %3895 = vmatprep.subr.bf16.mxu0 %v2803
  %3896 = vmatpush2.bf16.msra.mxu0 %v2802
  %3897 = vmatprep.subr.bf16.mxu0 %v2799
  %3898 = vmatpush2.bf16.msra.mxu0 %v2798
  %3899 = vmatprep.subr.bf16.mxu0 %v2795
  %3900 = vmatpush2.bf16.msra.mxu0 %v2794
  %3901 = vmatprep.subr.bf16.mxu0 %v2791
  %3902 = vmatpush2.bf16.msra.mxu0 %v2790
  %3903 = vmatprep.subr.bf16.mxu0 %v2787
  %3904 = vmatpush2.bf16.msra.mxu0 %v2786
  %3905 = vmatprep.mubr.bf16.mxu0 %v769
  %3906 = vmatmul.mubr.bf16.gmra.mxu0 %v768
  %v3907 = vpop.f32.mrf.mxu0
  %v3908 = vadd.f32 %v3855, %v3907
  %v3909 = vpop.f32.mrf.mxu0
  %v3910 = vadd.f32 %v3857, %v3909
  %v3911 = vpop.f32.mrf.mxu0
  %v3912 = vadd.f32 %v3859, %v3911
  %v3913 = vpop.f32.mrf.mxu0
  %v3914 = vadd.f32 %v3861, %v3913
  %3915 = vmatprep.mubr.bf16.mxu0 %v787
  %3916 = vmatmul.mubr.bf16.gmra.mxu0 %v786
  %v3917 = vpop.f32.mrf.mxu0
  %v3918 = vadd.f32 %v3865, %v3917
  %v3919 = vpop.f32.mrf.mxu0
  %v3920 = vadd.f32 %v3867, %v3919
  %v3921 = vpop.f32.mrf.mxu0
  %v3922 = vadd.f32 %v3869, %v3921
  %v3923 = vpop.f32.mrf.mxu0
  %v3924 = vadd.f32 %v3871, %v3923
  %3925 = vdwg.mxu0
  %3926 = vmatprep.subr.bf16.mxu0 %v2847
  %3927 = vmatpush1.bf16.msra.mxu0 %v2846
  %3928 = vmatprep.subr.bf16.mxu0 %v2843
  %3929 = vmatpush1.bf16.msra.mxu0 %v2842
  %3930 = vmatprep.subr.bf16.mxu0 %v2839
  %3931 = vmatpush1.bf16.msra.mxu0 %v2838
  %3932 = vmatprep.subr.bf16.mxu0 %v2835
  %3933 = vmatpush1.bf16.msra.mxu0 %v2834
  %3934 = vmatprep.subr.bf16.mxu0 %v2831
  %3935 = vmatpush1.bf16.msra.mxu0 %v2830
  %3936 = vmatprep.subr.bf16.mxu0 %v2827
  %3937 = vmatpush1.bf16.msra.mxu0 %v2826
  %3938 = vmatprep.subr.bf16.mxu0 %v2823
  %3939 = vmatpush1.bf16.msra.mxu0 %v2822
  %3940 = vmatprep.subr.bf16.mxu0 %v2819
  %3941 = vmatpush1.bf16.msra.mxu0 %v2818
  %3942 = vmatprep.subr.bf16.mxu0 %v2879
  %3943 = vmatpush2.bf16.msra.mxu0 %v2878
  %3944 = vmatprep.subr.bf16.mxu0 %v2875
  %3945 = vmatpush2.bf16.msra.mxu0 %v2874
  %3946 = vmatprep.subr.bf16.mxu0 %v2871
  %3947 = vmatpush2.bf16.msra.mxu0 %v2870
  %3948 = vmatprep.subr.bf16.mxu0 %v2867
  %3949 = vmatpush2.bf16.msra.mxu0 %v2866
  %3950 = vmatprep.subr.bf16.mxu0 %v2863
  %3951 = vmatpush2.bf16.msra.mxu0 %v2862
  %3952 = vmatprep.subr.bf16.mxu0 %v2859
  %3953 = vmatpush2.bf16.msra.mxu0 %v2858
  %3954 = vmatprep.subr.bf16.mxu0 %v2855
  %3955 = vmatpush2.bf16.msra.mxu0 %v2854
  %3956 = vmatprep.subr.bf16.mxu0 %v2851
  %3957 = vmatpush2.bf16.msra.mxu0 %v2850
  %3958 = vmatprep.mubr.bf16.mxu0 %v771
  %3959 = vmatmul.mubr.bf16.gmra.mxu0 %v770
  %v3960 = vpop.f32.mrf.mxu0
  %v3961 = vadd.f32 %v3908, %v3960
  %v3962 = vpop.f32.mrf.mxu0
  %v3963 = vadd.f32 %v3910, %v3962
  %v3964 = vpop.f32.mrf.mxu0
  %v3965 = vadd.f32 %v3912, %v3964
  %v3966 = vpop.f32.mrf.mxu0
  %v3967 = vadd.f32 %v3914, %v3966
  %3968 = vmatprep.mubr.bf16.mxu0 %v789
  %3969 = vmatmul.mubr.bf16.gmra.mxu0 %v788
  %v3970 = vpop.f32.mrf.mxu0
  %v3971 = vadd.f32 %v3918, %v3970
  %v3972 = vpop.f32.mrf.mxu0
  %v3973 = vadd.f32 %v3920, %v3972
  %v3974 = vpop.f32.mrf.mxu0
  %v3975 = vadd.f32 %v3922, %v3974
  %v3976 = vpop.f32.mrf.mxu0
  %v3977 = vadd.f32 %v3924, %v3976
  %3978 = vdwg.mxu0
  %3979 = vmatprep.subr.bf16.mxu0 %v2911
  %3980 = vmatpush1.bf16.msra.mxu0 %v2910
  %3981 = vmatprep.subr.bf16.mxu0 %v2907
  %3982 = vmatpush1.bf16.msra.mxu0 %v2906
  %3983 = vmatprep.subr.bf16.mxu0 %v2903
  %3984 = vmatpush1.bf16.msra.mxu0 %v2902
  %3985 = vmatprep.subr.bf16.mxu0 %v2899
  %3986 = vmatpush1.bf16.msra.mxu0 %v2898
  %3987 = vmatprep.subr.bf16.mxu0 %v2895
  %3988 = vmatpush1.bf16.msra.mxu0 %v2894
  %3989 = vmatprep.subr.bf16.mxu0 %v2891
  %3990 = vmatpush1.bf16.msra.mxu0 %v2890
  %3991 = vmatprep.subr.bf16.mxu0 %v2887
  %3992 = vmatpush1.bf16.msra.mxu0 %v2886
  %3993 = vmatprep.subr.bf16.mxu0 %v2883
  %3994 = vmatpush1.bf16.msra.mxu0 %v2882
  %3995 = vmatprep.subr.bf16.mxu0 %v2943
  %3996 = vmatpush2.bf16.msra.mxu0 %v2942
  %3997 = vmatprep.subr.bf16.mxu0 %v2939
  %3998 = vmatpush2.bf16.msra.mxu0 %v2938
  %3999 = vmatprep.subr.bf16.mxu0 %v2935
  %4000 = vmatpush2.bf16.msra.mxu0 %v2934
  %4001 = vmatprep.subr.bf16.mxu0 %v2931
  %4002 = vmatpush2.bf16.msra.mxu0 %v2930
  %4003 = vmatprep.subr.bf16.mxu0 %v2927
  %4004 = vmatpush2.bf16.msra.mxu0 %v2926
  %4005 = vmatprep.subr.bf16.mxu0 %v2923
  %4006 = vmatpush2.bf16.msra.mxu0 %v2922
  %4007 = vmatprep.subr.bf16.mxu0 %v2919
  %4008 = vmatpush2.bf16.msra.mxu0 %v2918
  %4009 = vmatprep.subr.bf16.mxu0 %v2915
  %4010 = vmatpush2.bf16.msra.mxu0 %v2914
  %4011 = vmatprep.mubr.bf16.mxu0 %v773
  %4012 = vmatmul.mubr.bf16.gmra.mxu0 %v772
  %v4013 = vpop.f32.mrf.mxu0
  %v4014 = vadd.f32 %v3961, %v4013
  %v4015 = vpop.f32.mrf.mxu0
  %v4016 = vadd.f32 %v3963, %v4015
  %v4017 = vpop.f32.mrf.mxu0
  %v4018 = vadd.f32 %v3965, %v4017
  %v4019 = vpop.f32.mrf.mxu0
  %v4020 = vadd.f32 %v3967, %v4019
  %4021 = vmatprep.mubr.bf16.mxu0 %v791
  %4022 = vmatmul.mubr.bf16.gmra.mxu0 %v790
  %v4023 = vpop.f32.mrf.mxu0
  %v4024 = vadd.f32 %v3971, %v4023
  %v4025 = vpop.f32.mrf.mxu0
  %v4026 = vadd.f32 %v3973, %v4025
  %v4027 = vpop.f32.mrf.mxu0
  %v4028 = vadd.f32 %v3975, %v4027
  %v4029 = vpop.f32.mrf.mxu0
  %v4030 = vadd.f32 %v3977, %v4029
  %4031 = vdwg.mxu0
  %4032 = vmatprep.subr.bf16.mxu0 %v2975
  %4033 = vmatpush1.bf16.msra.mxu0 %v2974
  %4034 = vmatprep.subr.bf16.mxu0 %v2971
  %4035 = vmatpush1.bf16.msra.mxu0 %v2970
  %4036 = vmatprep.subr.bf16.mxu0 %v2967
  %4037 = vmatpush1.bf16.msra.mxu0 %v2966
  %4038 = vmatprep.subr.bf16.mxu0 %v2963
  %4039 = vmatpush1.bf16.msra.mxu0 %v2962
  %4040 = vmatprep.subr.bf16.mxu0 %v2959
  %4041 = vmatpush1.bf16.msra.mxu0 %v2958
  %4042 = vmatprep.subr.bf16.mxu0 %v2955
  %4043 = vmatpush1.bf16.msra.mxu0 %v2954
  %4044 = vmatprep.subr.bf16.mxu0 %v2951
  %4045 = vmatpush1.bf16.msra.mxu0 %v2950
  %4046 = vmatprep.subr.bf16.mxu0 %v2947
  %4047 = vmatpush1.bf16.msra.mxu0 %v2946
  %4048 = vmatprep.subr.bf16.mxu0 %v3007
  %4049 = vmatpush2.bf16.msra.mxu0 %v3006
  %4050 = vmatprep.subr.bf16.mxu0 %v3003
  %4051 = vmatpush2.bf16.msra.mxu0 %v3002
  %4052 = vmatprep.subr.bf16.mxu0 %v2999
  %4053 = vmatpush2.bf16.msra.mxu0 %v2998
  %4054 = vmatprep.subr.bf16.mxu0 %v2995
  %4055 = vmatpush2.bf16.msra.mxu0 %v2994
  %4056 = vmatprep.subr.bf16.mxu0 %v2991
  %4057 = vmatpush2.bf16.msra.mxu0 %v2990
  %4058 = vmatprep.subr.bf16.mxu0 %v2987
  %4059 = vmatpush2.bf16.msra.mxu0 %v2986
  %4060 = vmatprep.subr.bf16.mxu0 %v2983
  %4061 = vmatpush2.bf16.msra.mxu0 %v2982
  %4062 = vmatprep.subr.bf16.mxu0 %v2979
  %4063 = vmatpush2.bf16.msra.mxu0 %v2978
  %4064 = vmatprep.mubr.bf16.mxu0 %v775
  %4065 = vmatmul.mubr.bf16.gmra.mxu0 %v774
  %v4066 = vpop.f32.mrf.mxu0
  %v4067 = vadd.f32 %v4014, %v4066
  %v4068 = vpop.f32.mrf.mxu0
  %v4069 = vadd.f32 %v4016, %v4068
  %v4070 = vpop.f32.mrf.mxu0
  %v4071 = vadd.f32 %v4018, %v4070
  %v4072 = vpop.f32.mrf.mxu0
  %v4073 = vadd.f32 %v4020, %v4072
  %4074 = vmatprep.mubr.bf16.mxu0 %v793
  %4075 = vmatmul.mubr.bf16.gmra.mxu0 %v792
  %v4076 = vpop.f32.mrf.mxu0
  %v4077 = vadd.f32 %v4024, %v4076
  %v4078 = vpop.f32.mrf.mxu0
  %v4079 = vadd.f32 %v4026, %v4078
  %v4080 = vpop.f32.mrf.mxu0
  %v4081 = vadd.f32 %v4028, %v4080
  %v4082 = vpop.f32.mrf.mxu0
  %v4083 = vadd.f32 %v4030, %v4082
  %4084 = vdwg.mxu0
  %4085 = vmatprep.subr.bf16.mxu0 %v3039
  %4086 = vmatpush1.bf16.msra.mxu0 %v3038
  %4087 = vmatprep.subr.bf16.mxu0 %v3035
  %4088 = vmatpush1.bf16.msra.mxu0 %v3034
  %4089 = vmatprep.subr.bf16.mxu0 %v3031
  %4090 = vmatpush1.bf16.msra.mxu0 %v3030
  %4091 = vmatprep.subr.bf16.mxu0 %v3027
  %4092 = vmatpush1.bf16.msra.mxu0 %v3026
  %4093 = vmatprep.subr.bf16.mxu0 %v3023
  %4094 = vmatpush1.bf16.msra.mxu0 %v3022
  %4095 = vmatprep.subr.bf16.mxu0 %v3019
  %4096 = vmatpush1.bf16.msra.mxu0 %v3018
  %4097 = vmatprep.subr.bf16.mxu0 %v3015
  %4098 = vmatpush1.bf16.msra.mxu0 %v3014
  %4099 = vmatprep.subr.bf16.mxu0 %v3011
  %4100 = vmatpush1.bf16.msra.mxu0 %v3010
  %4101 = vmatprep.subr.bf16.mxu0 %v3071
  %4102 = vmatpush2.bf16.msra.mxu0 %v3070
  %4103 = vmatprep.subr.bf16.mxu0 %v3067
  %4104 = vmatpush2.bf16.msra.mxu0 %v3066
  %4105 = vmatprep.subr.bf16.mxu0 %v3063
  %4106 = vmatpush2.bf16.msra.mxu0 %v3062
  %4107 = vmatprep.subr.bf16.mxu0 %v3059
  %4108 = vmatpush2.bf16.msra.mxu0 %v3058
  %4109 = vmatprep.subr.bf16.mxu0 %v3055
  %4110 = vmatpush2.bf16.msra.mxu0 %v3054
  %4111 = vmatprep.subr.bf16.mxu0 %v3051
  %4112 = vmatpush2.bf16.msra.mxu0 %v3050
  %4113 = vmatprep.subr.bf16.mxu0 %v3047
  %4114 = vmatpush2.bf16.msra.mxu0 %v3046
  %4115 = vmatprep.subr.bf16.mxu0 %v3043
  %4116 = vmatpush2.bf16.msra.mxu0 %v3042
  %4117 = vmatprep.mubr.bf16.mxu0 %v777
  %4118 = vmatmul.mubr.bf16.gmra.mxu0 %v776
  %v4119 = vpop.f32.mrf.mxu0
  %v4120 = vadd.f32 %v4067, %v4119
  %v4121 = vpop.f32.mrf.mxu0
  %v4122 = vadd.f32 %v4069, %v4121
  %v4123 = vpop.f32.mrf.mxu0
  %v4124 = vadd.f32 %v4071, %v4123
  %v4125 = vpop.f32.mrf.mxu0
  %v4126 = vadd.f32 %v4073, %v4125
  %4127 = vmatprep.mubr.bf16.mxu0 %v795
  %4128 = vmatmul.mubr.bf16.gmra.mxu0 %v794
  %v4129 = vpop.f32.mrf.mxu0
  %v4130 = vadd.f32 %v4077, %v4129
  %v4131 = vpop.f32.mrf.mxu0
  %v4132 = vadd.f32 %v4079, %v4131
  %v4133 = vpop.f32.mrf.mxu0
  %v4134 = vadd.f32 %v4081, %v4133
  %v4135 = vpop.f32.mrf.mxu0
  %v4136 = vadd.f32 %v4083, %v4135
  %4137 = vdwg.mxu0
  %4138 = vmatprep.subr.bf16.mxu0 %v3103
  %4139 = vmatpush1.bf16.msra.mxu0 %v3102
  %4140 = vmatprep.subr.bf16.mxu0 %v3099
  %4141 = vmatpush1.bf16.msra.mxu0 %v3098
  %4142 = vmatprep.subr.bf16.mxu0 %v3095
  %4143 = vmatpush1.bf16.msra.mxu0 %v3094
  %4144 = vmatprep.subr.bf16.mxu0 %v3091
  %4145 = vmatpush1.bf16.msra.mxu0 %v3090
  %4146 = vmatprep.subr.bf16.mxu0 %v3087
  %4147 = vmatpush1.bf16.msra.mxu0 %v3086
  %4148 = vmatprep.subr.bf16.mxu0 %v3083
  %4149 = vmatpush1.bf16.msra.mxu0 %v3082
  %4150 = vmatprep.subr.bf16.mxu0 %v3079
  %4151 = vmatpush1.bf16.msra.mxu0 %v3078
  %4152 = vmatprep.subr.bf16.mxu0 %v3075
  %4153 = vmatpush1.bf16.msra.mxu0 %v3074
  %4154 = vmatprep.subr.bf16.mxu0 %v3135
  %4155 = vmatpush2.bf16.msra.mxu0 %v3134
  %4156 = vmatprep.subr.bf16.mxu0 %v3131
  %4157 = vmatpush2.bf16.msra.mxu0 %v3130
  %4158 = vmatprep.subr.bf16.mxu0 %v3127
  %4159 = vmatpush2.bf16.msra.mxu0 %v3126
  %4160 = vmatprep.subr.bf16.mxu0 %v3123
  %4161 = vmatpush2.bf16.msra.mxu0 %v3122
  %4162 = vmatprep.subr.bf16.mxu0 %v3119
  %4163 = vmatpush2.bf16.msra.mxu0 %v3118
  %4164 = vmatprep.subr.bf16.mxu0 %v3115
  %4165 = vmatpush2.bf16.msra.mxu0 %v3114
  %4166 = vmatprep.subr.bf16.mxu0 %v3111
  %4167 = vmatpush2.bf16.msra.mxu0 %v3110
  %4168 = vmatprep.subr.bf16.mxu0 %v3107
  %4169 = vmatpush2.bf16.msra.mxu0 %v3106
  %4170 = vmatprep.mubr.bf16.mxu0 %v779
  %4171 = vmatmul.mubr.bf16.gmra.mxu0 %v778
  %v4172 = vpop.f32.mrf.mxu0
  %v4173 = vadd.f32 %v4120, %v4172
  %v4174 = vpop.f32.mrf.mxu0
  %v4175 = vadd.f32 %v4122, %v4174
  %v4176 = vpop.f32.mrf.mxu0
  %v4177 = vadd.f32 %v4124, %v4176
  %v4178 = vpop.f32.mrf.mxu0
  %v4179 = vadd.f32 %v4126, %v4178
  %4180 = vmatprep.mubr.bf16.mxu0 %v797
  %4181 = vmatmul.mubr.bf16.gmra.mxu0 %v796
  %v4182 = vpop.f32.mrf.mxu0
  %v4183 = vadd.f32 %v4130, %v4182
  %v4184 = vpop.f32.mrf.mxu0
  %v4185 = vadd.f32 %v4132, %v4184
  %v4186 = vpop.f32.mrf.mxu0
  %v4187 = vadd.f32 %v4134, %v4186
  %v4188 = vpop.f32.mrf.mxu0
  %v4189 = vadd.f32 %v4136, %v4188
  %4190 = vdwg.mxu0
  %4191 = vmatprep.subr.bf16.mxu0 %v2593
  %4192 = vmatpush1.bf16.msra.mxu0 %v2592
  %4193 = vmatprep.subr.bf16.mxu0 %v2589
  %4194 = vmatpush1.bf16.msra.mxu0 %v2588
  %4195 = vmatprep.subr.bf16.mxu0 %v2585
  %4196 = vmatpush1.bf16.msra.mxu0 %v2584
  %4197 = vmatprep.subr.bf16.mxu0 %v2581
  %4198 = vmatpush1.bf16.msra.mxu0 %v2580
  %4199 = vmatprep.subr.bf16.mxu0 %v2577
  %4200 = vmatpush1.bf16.msra.mxu0 %v2576
  %4201 = vmatprep.subr.bf16.mxu0 %v2573
  %4202 = vmatpush1.bf16.msra.mxu0 %v2572
  %4203 = vmatprep.subr.bf16.mxu0 %v2569
  %4204 = vmatpush1.bf16.msra.mxu0 %v2568
  %4205 = vmatprep.subr.bf16.mxu0 %v2565
  %4206 = vmatpush1.bf16.msra.mxu0 %v2564
  %4207 = vmatprep.subr.bf16.mxu0 %v2625
  %4208 = vmatpush2.bf16.msra.mxu0 %v2624
  %4209 = vmatprep.subr.bf16.mxu0 %v2621
  %4210 = vmatpush2.bf16.msra.mxu0 %v2620
  %4211 = vmatprep.subr.bf16.mxu0 %v2617
  %4212 = vmatpush2.bf16.msra.mxu0 %v2616
  %4213 = vmatprep.subr.bf16.mxu0 %v2613
  %4214 = vmatpush2.bf16.msra.mxu0 %v2612
  %4215 = vmatprep.subr.bf16.mxu0 %v2609
  %4216 = vmatpush2.bf16.msra.mxu0 %v2608
  %4217 = vmatprep.subr.bf16.mxu0 %v2605
  %4218 = vmatpush2.bf16.msra.mxu0 %v2604
  %4219 = vmatprep.subr.bf16.mxu0 %v2601
  %4220 = vmatpush2.bf16.msra.mxu0 %v2600
  %4221 = vmatprep.subr.bf16.mxu0 %v2597
  %4222 = vmatpush2.bf16.msra.mxu0 %v2596
  %4223 = vmatprep.mubr.bf16.mxu0 %v763
  %4224 = vmatmul.mubr.bf16.gmra.mxu0 %v762
  %v4225 = vpop.f32.mrf.mxu0
  %v4226 = vadd.f32 %v645, %v4225
  %v4227 = vpop.f32.mrf.mxu0
  %v4228 = vadd.f32 %v649, %v4227
  %v4229 = vpop.f32.mrf.mxu0
  %v4230 = vadd.f32 %v645, %v4229
  %v4231 = vpop.f32.mrf.mxu0
  %v4232 = vadd.f32 %v649, %v4231
  %4233 = vmatprep.mubr.bf16.mxu0 %v781
  %4234 = vmatmul.mubr.bf16.gmra.mxu0 %v780
  %v4235 = vpop.f32.mrf.mxu0
  %v4236 = vadd.f32 %v645, %v4235
  %v4237 = vpop.f32.mrf.mxu0
  %v4238 = vadd.f32 %v649, %v4237
  %v4239 = vpop.f32.mrf.mxu0
  %v4240 = vadd.f32 %v645, %v4239
  %v4241 = vpop.f32.mrf.mxu0
  %v4242 = vadd.f32 %v649, %v4241
  %4243 = vdwg.mxu0
  %4244 = vmatprep.subr.bf16.mxu0 %v2657
  %4245 = vmatpush1.bf16.msra.mxu0 %v2656
  %4246 = vmatprep.subr.bf16.mxu0 %v2653
  %4247 = vmatpush1.bf16.msra.mxu0 %v2652
  %4248 = vmatprep.subr.bf16.mxu0 %v2649
  %4249 = vmatpush1.bf16.msra.mxu0 %v2648
  %4250 = vmatprep.subr.bf16.mxu0 %v2645
  %4251 = vmatpush1.bf16.msra.mxu0 %v2644
  %4252 = vmatprep.subr.bf16.mxu0 %v2641
  %4253 = vmatpush1.bf16.msra.mxu0 %v2640
  %4254 = vmatprep.subr.bf16.mxu0 %v2637
  %4255 = vmatpush1.bf16.msra.mxu0 %v2636
  %4256 = vmatprep.subr.bf16.mxu0 %v2633
  %4257 = vmatpush1.bf16.msra.mxu0 %v2632
  %4258 = vmatprep.subr.bf16.mxu0 %v2629
  %4259 = vmatpush1.bf16.msra.mxu0 %v2628
  %4260 = vmatprep.subr.bf16.mxu0 %v2689
  %4261 = vmatpush2.bf16.msra.mxu0 %v2688
  %4262 = vmatprep.subr.bf16.mxu0 %v2685
  %4263 = vmatpush2.bf16.msra.mxu0 %v2684
  %4264 = vmatprep.subr.bf16.mxu0 %v2681
  %4265 = vmatpush2.bf16.msra.mxu0 %v2680
  %4266 = vmatprep.subr.bf16.mxu0 %v2677
  %4267 = vmatpush2.bf16.msra.mxu0 %v2676
  %4268 = vmatprep.subr.bf16.mxu0 %v2673
  %4269 = vmatpush2.bf16.msra.mxu0 %v2672
  %4270 = vmatprep.subr.bf16.mxu0 %v2669
  %4271 = vmatpush2.bf16.msra.mxu0 %v2668
  %4272 = vmatprep.subr.bf16.mxu0 %v2665
  %4273 = vmatpush2.bf16.msra.mxu0 %v2664
  %4274 = vmatprep.subr.bf16.mxu0 %v2661
  %4275 = vmatpush2.bf16.msra.mxu0 %v2660
  %4276 = vmatprep.mubr.bf16.mxu0 %v765
  %4277 = vmatmul.mubr.bf16.gmra.mxu0 %v764
  %v4278 = vpop.f32.mrf.mxu0
  %v4279 = vadd.f32 %v4226, %v4278
  %v4280 = vpop.f32.mrf.mxu0
  %v4281 = vadd.f32 %v4228, %v4280
  %v4282 = vpop.f32.mrf.mxu0
  %v4283 = vadd.f32 %v4230, %v4282
  %v4284 = vpop.f32.mrf.mxu0
  %v4285 = vadd.f32 %v4232, %v4284
  %4286 = vmatprep.mubr.bf16.mxu0 %v783
  %4287 = vmatmul.mubr.bf16.gmra.mxu0 %v782
  %v4288 = vpop.f32.mrf.mxu0
  %v4289 = vadd.f32 %v4236, %v4288
  %v4290 = vpop.f32.mrf.mxu0
  %v4291 = vadd.f32 %v4238, %v4290
  %v4292 = vpop.f32.mrf.mxu0
  %v4293 = vadd.f32 %v4240, %v4292
  %v4294 = vpop.f32.mrf.mxu0
  %v4295 = vadd.f32 %v4242, %v4294
  %4296 = vdwg.mxu0
  %4297 = vmatprep.subr.bf16.mxu0 %v2721
  %4298 = vmatpush1.bf16.msra.mxu0 %v2720
  %4299 = vmatprep.subr.bf16.mxu0 %v2717
  %4300 = vmatpush1.bf16.msra.mxu0 %v2716
  %4301 = vmatprep.subr.bf16.mxu0 %v2713
  %4302 = vmatpush1.bf16.msra.mxu0 %v2712
  %4303 = vmatprep.subr.bf16.mxu0 %v2709
  %4304 = vmatpush1.bf16.msra.mxu0 %v2708
  %4305 = vmatprep.subr.bf16.mxu0 %v2705
  %4306 = vmatpush1.bf16.msra.mxu0 %v2704
  %4307 = vmatprep.subr.bf16.mxu0 %v2701
  %4308 = vmatpush1.bf16.msra.mxu0 %v2700
  %4309 = vmatprep.subr.bf16.mxu0 %v2697
  %4310 = vmatpush1.bf16.msra.mxu0 %v2696
  %4311 = vmatprep.subr.bf16.mxu0 %v2693
  %4312 = vmatpush1.bf16.msra.mxu0 %v2692
  %4313 = vmatprep.subr.bf16.mxu0 %v2753
  %4314 = vmatpush2.bf16.msra.mxu0 %v2752
  %4315 = vmatprep.subr.bf16.mxu0 %v2749
  %4316 = vmatpush2.bf16.msra.mxu0 %v2748
  %4317 = vmatprep.subr.bf16.mxu0 %v2745
  %4318 = vmatpush2.bf16.msra.mxu0 %v2744
  %4319 = vmatprep.subr.bf16.mxu0 %v2741
  %4320 = vmatpush2.bf16.msra.mxu0 %v2740
  %4321 = vmatprep.subr.bf16.mxu0 %v2737
  %4322 = vmatpush2.bf16.msra.mxu0 %v2736
  %4323 = vmatprep.subr.bf16.mxu0 %v2733
  %4324 = vmatpush2.bf16.msra.mxu0 %v2732
  %4325 = vmatprep.subr.bf16.mxu0 %v2729
  %4326 = vmatpush2.bf16.msra.mxu0 %v2728
  %4327 = vmatprep.subr.bf16.mxu0 %v2725
  %4328 = vmatpush2.bf16.msra.mxu0 %v2724
  %4329 = vmatprep.mubr.bf16.mxu0 %v767
  %4330 = vmatmul.mubr.bf16.gmra.mxu0 %v766
  %v4331 = vpop.f32.mrf.mxu0
  %v4332 = vadd.f32 %v4279, %v4331
  %v4333 = vpop.f32.mrf.mxu0
  %v4334 = vadd.f32 %v4281, %v4333
  %v4335 = vpop.f32.mrf.mxu0
  %v4336 = vadd.f32 %v4283, %v4335
  %v4337 = vpop.f32.mrf.mxu0
  %v4338 = vadd.f32 %v4285, %v4337
  %4339 = vmatprep.mubr.bf16.mxu0 %v785
  %4340 = vmatmul.mubr.bf16.gmra.mxu0 %v784
  %v4341 = vpop.f32.mrf.mxu0
  %v4342 = vadd.f32 %v4289, %v4341
  %v4343 = vpop.f32.mrf.mxu0
  %v4344 = vadd.f32 %v4291, %v4343
  %v4345 = vpop.f32.mrf.mxu0
  %v4346 = vadd.f32 %v4293, %v4345
  %v4347 = vpop.f32.mrf.mxu0
  %v4348 = vadd.f32 %v4295, %v4347
  %4349 = vdwg.mxu0
  %4350 = vmatprep.subr.bf16.mxu0 %v2785
  %4351 = vmatpush1.bf16.msra.mxu0 %v2784
  %4352 = vmatprep.subr.bf16.mxu0 %v2781
  %4353 = vmatpush1.bf16.msra.mxu0 %v2780
  %4354 = vmatprep.subr.bf16.mxu0 %v2777
  %4355 = vmatpush1.bf16.msra.mxu0 %v2776
  %4356 = vmatprep.subr.bf16.mxu0 %v2773
  %4357 = vmatpush1.bf16.msra.mxu0 %v2772
  %4358 = vmatprep.subr.bf16.mxu0 %v2769
  %4359 = vmatpush1.bf16.msra.mxu0 %v2768
  %4360 = vmatprep.subr.bf16.mxu0 %v2765
  %4361 = vmatpush1.bf16.msra.mxu0 %v2764
  %4362 = vmatprep.subr.bf16.mxu0 %v2761
  %4363 = vmatpush1.bf16.msra.mxu0 %v2760
  %4364 = vmatprep.subr.bf16.mxu0 %v2757
  %4365 = vmatpush1.bf16.msra.mxu0 %v2756
  %4366 = vmatprep.subr.bf16.mxu0 %v2817
  %4367 = vmatpush2.bf16.msra.mxu0 %v2816
  %4368 = vmatprep.subr.bf16.mxu0 %v2813
  %4369 = vmatpush2.bf16.msra.mxu0 %v2812
  %4370 = vmatprep.subr.bf16.mxu0 %v2809
  %4371 = vmatpush2.bf16.msra.mxu0 %v2808
  %4372 = vmatprep.subr.bf16.mxu0 %v2805
  %4373 = vmatpush2.bf16.msra.mxu0 %v2804
  %4374 = vmatprep.subr.bf16.mxu0 %v2801
  %4375 = vmatpush2.bf16.msra.mxu0 %v2800
  %4376 = vmatprep.subr.bf16.mxu0 %v2797
  %4377 = vmatpush2.bf16.msra.mxu0 %v2796
  %4378 = vmatprep.subr.bf16.mxu0 %v2793
  %4379 = vmatpush2.bf16.msra.mxu0 %v2792
  %4380 = vmatprep.subr.bf16.mxu0 %v2789
  %4381 = vmatpush2.bf16.msra.mxu0 %v2788
  %4382 = vmatprep.mubr.bf16.mxu0 %v769
  %4383 = vmatmul.mubr.bf16.gmra.mxu0 %v768
  %v4384 = vpop.f32.mrf.mxu0
  %v4385 = vadd.f32 %v4332, %v4384
  %v4386 = vpop.f32.mrf.mxu0
  %v4387 = vadd.f32 %v4334, %v4386
  %v4388 = vpop.f32.mrf.mxu0
  %v4389 = vadd.f32 %v4336, %v4388
  %v4390 = vpop.f32.mrf.mxu0
  %v4391 = vadd.f32 %v4338, %v4390
  %4392 = vmatprep.mubr.bf16.mxu0 %v787
  %4393 = vmatmul.mubr.bf16.gmra.mxu0 %v786
  %v4394 = vpop.f32.mrf.mxu0
  %v4395 = vadd.f32 %v4342, %v4394
  %v4396 = vpop.f32.mrf.mxu0
  %v4397 = vadd.f32 %v4344, %v4396
  %v4398 = vpop.f32.mrf.mxu0
  %v4399 = vadd.f32 %v4346, %v4398
  %v4400 = vpop.f32.mrf.mxu0
  %v4401 = vadd.f32 %v4348, %v4400
  %4402 = vdwg.mxu0
  %4403 = vmatprep.subr.bf16.mxu0 %v2849
  %4404 = vmatpush1.bf16.msra.mxu0 %v2848
  %4405 = vmatprep.subr.bf16.mxu0 %v2845
  %4406 = vmatpush1.bf16.msra.mxu0 %v2844
  %4407 = vmatprep.subr.bf16.mxu0 %v2841
  %4408 = vmatpush1.bf16.msra.mxu0 %v2840
  %4409 = vmatprep.subr.bf16.mxu0 %v2837
  %4410 = vmatpush1.bf16.msra.mxu0 %v2836
  %4411 = vmatprep.subr.bf16.mxu0 %v2833
  %4412 = vmatpush1.bf16.msra.mxu0 %v2832
  %4413 = vmatprep.subr.bf16.mxu0 %v2829
  %4414 = vmatpush1.bf16.msra.mxu0 %v2828
  %4415 = vmatprep.subr.bf16.mxu0 %v2825
  %4416 = vmatpush1.bf16.msra.mxu0 %v2824
  %4417 = vmatprep.subr.bf16.mxu0 %v2821
  %4418 = vmatpush1.bf16.msra.mxu0 %v2820
  %4419 = vmatprep.subr.bf16.mxu0 %v2881
  %4420 = vmatpush2.bf16.msra.mxu0 %v2880
  %4421 = vmatprep.subr.bf16.mxu0 %v2877
  %4422 = vmatpush2.bf16.msra.mxu0 %v2876
  %4423 = vmatprep.subr.bf16.mxu0 %v2873
  %4424 = vmatpush2.bf16.msra.mxu0 %v2872
  %4425 = vmatprep.subr.bf16.mxu0 %v2869
  %4426 = vmatpush2.bf16.msra.mxu0 %v2868
  %4427 = vmatprep.subr.bf16.mxu0 %v2865
  %4428 = vmatpush2.bf16.msra.mxu0 %v2864
  %4429 = vmatprep.subr.bf16.mxu0 %v2861
  %4430 = vmatpush2.bf16.msra.mxu0 %v2860
  %4431 = vmatprep.subr.bf16.mxu0 %v2857
  %4432 = vmatpush2.bf16.msra.mxu0 %v2856
  %4433 = vmatprep.subr.bf16.mxu0 %v2853
  %4434 = vmatpush2.bf16.msra.mxu0 %v2852
  %4435 = vmatprep.mubr.bf16.mxu0 %v771
  %4436 = vmatmul.mubr.bf16.gmra.mxu0 %v770
  %v4437 = vpop.f32.mrf.mxu0
  %v4438 = vadd.f32 %v4385, %v4437
  %v4439 = vpop.f32.mrf.mxu0
  %v4440 = vadd.f32 %v4387, %v4439
  %v4441 = vpop.f32.mrf.mxu0
  %v4442 = vadd.f32 %v4389, %v4441
  %v4443 = vpop.f32.mrf.mxu0
  %v4444 = vadd.f32 %v4391, %v4443
  %4445 = vmatprep.mubr.bf16.mxu0 %v789
  %4446 = vmatmul.mubr.bf16.gmra.mxu0 %v788
  %v4447 = vpop.f32.mrf.mxu0
  %v4448 = vadd.f32 %v4395, %v4447
  %v4449 = vpop.f32.mrf.mxu0
  %v4450 = vadd.f32 %v4397, %v4449
  %v4451 = vpop.f32.mrf.mxu0
  %v4452 = vadd.f32 %v4399, %v4451
  %v4453 = vpop.f32.mrf.mxu0
  %v4454 = vadd.f32 %v4401, %v4453
  %4455 = vdwg.mxu0
  %4456 = vmatprep.subr.bf16.mxu0 %v2913
  %4457 = vmatpush1.bf16.msra.mxu0 %v2912
  %4458 = vmatprep.subr.bf16.mxu0 %v2909
  %4459 = vmatpush1.bf16.msra.mxu0 %v2908
  %4460 = vmatprep.subr.bf16.mxu0 %v2905
  %4461 = vmatpush1.bf16.msra.mxu0 %v2904
  %4462 = vmatprep.subr.bf16.mxu0 %v2901
  %4463 = vmatpush1.bf16.msra.mxu0 %v2900
  %4464 = vmatprep.subr.bf16.mxu0 %v2897
  %4465 = vmatpush1.bf16.msra.mxu0 %v2896
  %4466 = vmatprep.subr.bf16.mxu0 %v2893
  %4467 = vmatpush1.bf16.msra.mxu0 %v2892
  %4468 = vmatprep.subr.bf16.mxu0 %v2889
  %4469 = vmatpush1.bf16.msra.mxu0 %v2888
  %4470 = vmatprep.subr.bf16.mxu0 %v2885
  %4471 = vmatpush1.bf16.msra.mxu0 %v2884
  %4472 = vmatprep.subr.bf16.mxu0 %v2945
  %4473 = vmatpush2.bf16.msra.mxu0 %v2944
  %4474 = vmatprep.subr.bf16.mxu0 %v2941
  %4475 = vmatpush2.bf16.msra.mxu0 %v2940
  %4476 = vmatprep.subr.bf16.mxu0 %v2937
  %4477 = vmatpush2.bf16.msra.mxu0 %v2936
  %4478 = vmatprep.subr.bf16.mxu0 %v2933
  %4479 = vmatpush2.bf16.msra.mxu0 %v2932
  %4480 = vmatprep.subr.bf16.mxu0 %v2929
  %4481 = vmatpush2.bf16.msra.mxu0 %v2928
  %4482 = vmatprep.subr.bf16.mxu0 %v2925
  %4483 = vmatpush2.bf16.msra.mxu0 %v2924
  %4484 = vmatprep.subr.bf16.mxu0 %v2921
  %4485 = vmatpush2.bf16.msra.mxu0 %v2920
  %4486 = vmatprep.subr.bf16.mxu0 %v2917
  %4487 = vmatpush2.bf16.msra.mxu0 %v2916
  %4488 = vmatprep.mubr.bf16.mxu0 %v773
  %4489 = vmatmul.mubr.bf16.gmra.mxu0 %v772
  %v4490 = vpop.f32.mrf.mxu0
  %v4491 = vadd.f32 %v4438, %v4490
  %v4492 = vpop.f32.mrf.mxu0
  %v4493 = vadd.f32 %v4440, %v4492
  %v4494 = vpop.f32.mrf.mxu0
  %v4495 = vadd.f32 %v4442, %v4494
  %v4496 = vpop.f32.mrf.mxu0
  %v4497 = vadd.f32 %v4444, %v4496
  %4498 = vmatprep.mubr.bf16.mxu0 %v791
  %4499 = vmatmul.mubr.bf16.gmra.mxu0 %v790
  %v4500 = vpop.f32.mrf.mxu0
  %v4501 = vadd.f32 %v4448, %v4500
  %v4502 = vpop.f32.mrf.mxu0
  %v4503 = vadd.f32 %v4450, %v4502
  %v4504 = vpop.f32.mrf.mxu0
  %v4505 = vadd.f32 %v4452, %v4504
  %v4506 = vpop.f32.mrf.mxu0
  %v4507 = vadd.f32 %v4454, %v4506
  %4508 = vdwg.mxu0
  %4509 = vmatprep.subr.bf16.mxu0 %v2977
  %4510 = vmatpush1.bf16.msra.mxu0 %v2976
  %4511 = vmatprep.subr.bf16.mxu0 %v2973
  %4512 = vmatpush1.bf16.msra.mxu0 %v2972
  %4513 = vmatprep.subr.bf16.mxu0 %v2969
  %4514 = vmatpush1.bf16.msra.mxu0 %v2968
  %4515 = vmatprep.subr.bf16.mxu0 %v2965
  %4516 = vmatpush1.bf16.msra.mxu0 %v2964
  %4517 = vmatprep.subr.bf16.mxu0 %v2961
  %4518 = vmatpush1.bf16.msra.mxu0 %v2960
  %4519 = vmatprep.subr.bf16.mxu0 %v2957
  %4520 = vmatpush1.bf16.msra.mxu0 %v2956
  %4521 = vmatprep.subr.bf16.mxu0 %v2953
  %4522 = vmatpush1.bf16.msra.mxu0 %v2952
  %4523 = vmatprep.subr.bf16.mxu0 %v2949
  %4524 = vmatpush1.bf16.msra.mxu0 %v2948
  %4525 = vmatprep.subr.bf16.mxu0 %v3009
  %4526 = vmatpush2.bf16.msra.mxu0 %v3008
  %4527 = vmatprep.subr.bf16.mxu0 %v3005
  %4528 = vmatpush2.bf16.msra.mxu0 %v3004
  %4529 = vmatprep.subr.bf16.mxu0 %v3001
  %4530 = vmatpush2.bf16.msra.mxu0 %v3000
  %4531 = vmatprep.subr.bf16.mxu0 %v2997
  %4532 = vmatpush2.bf16.msra.mxu0 %v2996
  %4533 = vmatprep.subr.bf16.mxu0 %v2993
  %4534 = vmatpush2.bf16.msra.mxu0 %v2992
  %4535 = vmatprep.subr.bf16.mxu0 %v2989
  %4536 = vmatpush2.bf16.msra.mxu0 %v2988
  %4537 = vmatprep.subr.bf16.mxu0 %v2985
  %4538 = vmatpush2.bf16.msra.mxu0 %v2984
  %4539 = vmatprep.subr.bf16.mxu0 %v2981
  %4540 = vmatpush2.bf16.msra.mxu0 %v2980
  %4541 = vmatprep.mubr.bf16.mxu0 %v775
  %4542 = vmatmul.mubr.bf16.gmra.mxu0 %v774
  %v4543 = vpop.f32.mrf.mxu0
  %v4544 = vadd.f32 %v4491, %v4543
  %v4545 = vpop.f32.mrf.mxu0
  %v4546 = vadd.f32 %v4493, %v4545
  %v4547 = vpop.f32.mrf.mxu0
  %v4548 = vadd.f32 %v4495, %v4547
  %v4549 = vpop.f32.mrf.mxu0
  %v4550 = vadd.f32 %v4497, %v4549
  %4551 = vmatprep.mubr.bf16.mxu0 %v793
  %4552 = vmatmul.mubr.bf16.gmra.mxu0 %v792
  %v4553 = vpop.f32.mrf.mxu0
  %v4554 = vadd.f32 %v4501, %v4553
  %v4555 = vpop.f32.mrf.mxu0
  %v4556 = vadd.f32 %v4503, %v4555
  %v4557 = vpop.f32.mrf.mxu0
  %v4558 = vadd.f32 %v4505, %v4557
  %v4559 = vpop.f32.mrf.mxu0
  %v4560 = vadd.f32 %v4507, %v4559
  %4561 = vdwg.mxu0
  %4562 = vmatprep.subr.bf16.mxu0 %v3041
  %4563 = vmatpush1.bf16.msra.mxu0 %v3040
  %4564 = vmatprep.subr.bf16.mxu0 %v3037
  %4565 = vmatpush1.bf16.msra.mxu0 %v3036
  %4566 = vmatprep.subr.bf16.mxu0 %v3033
  %4567 = vmatpush1.bf16.msra.mxu0 %v3032
  %4568 = vmatprep.subr.bf16.mxu0 %v3029
  %4569 = vmatpush1.bf16.msra.mxu0 %v3028
  %4570 = vmatprep.subr.bf16.mxu0 %v3025
  %4571 = vmatpush1.bf16.msra.mxu0 %v3024
  %4572 = vmatprep.subr.bf16.mxu0 %v3021
  %4573 = vmatpush1.bf16.msra.mxu0 %v3020
  %4574 = vmatprep.subr.bf16.mxu0 %v3017
  %4575 = vmatpush1.bf16.msra.mxu0 %v3016
  %4576 = vmatprep.subr.bf16.mxu0 %v3013
  %4577 = vmatpush1.bf16.msra.mxu0 %v3012
  %4578 = vmatprep.subr.bf16.mxu0 %v3073
  %4579 = vmatpush2.bf16.msra.mxu0 %v3072
  %4580 = vmatprep.subr.bf16.mxu0 %v3069
  %4581 = vmatpush2.bf16.msra.mxu0 %v3068
  %4582 = vmatprep.subr.bf16.mxu0 %v3065
  %4583 = vmatpush2.bf16.msra.mxu0 %v3064
  %4584 = vmatprep.subr.bf16.mxu0 %v3061
  %4585 = vmatpush2.bf16.msra.mxu0 %v3060
  %4586 = vmatprep.subr.bf16.mxu0 %v3057
  %4587 = vmatpush2.bf16.msra.mxu0 %v3056
  %4588 = vmatprep.subr.bf16.mxu0 %v3053
  %4589 = vmatpush2.bf16.msra.mxu0 %v3052
  %4590 = vmatprep.subr.bf16.mxu0 %v3049
  %4591 = vmatpush2.bf16.msra.mxu0 %v3048
  %4592 = vmatprep.subr.bf16.mxu0 %v3045
  %4593 = vmatpush2.bf16.msra.mxu0 %v3044
  %4594 = vmatprep.mubr.bf16.mxu0 %v777
  %4595 = vmatmul.mubr.bf16.gmra.mxu0 %v776
  %v4596 = vpop.f32.mrf.mxu0
  %v4597 = vadd.f32 %v4544, %v4596
  %v4598 = vpop.f32.mrf.mxu0
  %v4599 = vadd.f32 %v4546, %v4598
  %v4600 = vpop.f32.mrf.mxu0
  %v4601 = vadd.f32 %v4548, %v4600
  %v4602 = vpop.f32.mrf.mxu0
  %v4603 = vadd.f32 %v4550, %v4602
  %4604 = vmatprep.mubr.bf16.mxu0 %v795
  %4605 = vmatmul.mubr.bf16.gmra.mxu0 %v794
  %v4606 = vpop.f32.mrf.mxu0
  %v4607 = vadd.f32 %v4554, %v4606
  %v4608 = vpop.f32.mrf.mxu0
  %v4609 = vadd.f32 %v4556, %v4608
  %v4610 = vpop.f32.mrf.mxu0
  %v4611 = vadd.f32 %v4558, %v4610
  %v4612 = vpop.f32.mrf.mxu0
  %v4613 = vadd.f32 %v4560, %v4612
  %4614 = vdwg.mxu0
  %4615 = vmatprep.subr.bf16.mxu0 %v3105
  %4616 = vmatpush1.bf16.msra.mxu0 %v3104
  %4617 = vmatprep.subr.bf16.mxu0 %v3101
  %4618 = vmatpush1.bf16.msra.mxu0 %v3100
  %4619 = vmatprep.subr.bf16.mxu0 %v3097
  %4620 = vmatpush1.bf16.msra.mxu0 %v3096
  %4621 = vmatprep.subr.bf16.mxu0 %v3093
  %4622 = vmatpush1.bf16.msra.mxu0 %v3092
  %4623 = vmatprep.subr.bf16.mxu0 %v3089
  %4624 = vmatpush1.bf16.msra.mxu0 %v3088
  %4625 = vmatprep.subr.bf16.mxu0 %v3085
  %4626 = vmatpush1.bf16.msra.mxu0 %v3084
  %4627 = vmatprep.subr.bf16.mxu0 %v3081
  %4628 = vmatpush1.bf16.msra.mxu0 %v3080
  %4629 = vmatprep.subr.bf16.mxu0 %v3077
  %4630 = vmatpush1.bf16.msra.mxu0 %v3076
  %4631 = vmatprep.subr.bf16.mxu0 %v3137
  %4632 = vmatpush2.bf16.msra.mxu0 %v3136
  %4633 = vmatprep.subr.bf16.mxu0 %v3133
  %4634 = vmatpush2.bf16.msra.mxu0 %v3132
  %4635 = vmatprep.subr.bf16.mxu0 %v3129
  %4636 = vmatpush2.bf16.msra.mxu0 %v3128
  %4637 = vmatprep.subr.bf16.mxu0 %v3125
  %4638 = vmatpush2.bf16.msra.mxu0 %v3124
  %4639 = vmatprep.subr.bf16.mxu0 %v3121
  %4640 = vmatpush2.bf16.msra.mxu0 %v3120
  %4641 = vmatprep.subr.bf16.mxu0 %v3117
  %4642 = vmatpush2.bf16.msra.mxu0 %v3116
  %4643 = vmatprep.subr.bf16.mxu0 %v3113
  %4644 = vmatpush2.bf16.msra.mxu0 %v3112
  %4645 = vmatprep.subr.bf16.mxu0 %v3109
  %4646 = vmatpush2.bf16.msra.mxu0 %v3108
  %4647 = vmatprep.mubr.bf16.mxu0 %v779
  %4648 = vmatmul.mubr.bf16.gmra.mxu0 %v778
  %v4649 = vpop.f32.mrf.mxu0
  %v4650 = vadd.f32 %v4597, %v4649
  %v4651 = vpop.f32.mrf.mxu0
  %v4652 = vadd.f32 %v4599, %v4651
  %v4653 = vpop.f32.mrf.mxu0
  %v4654 = vadd.f32 %v4601, %v4653
  %v4655 = vpop.f32.mrf.mxu0
  %v4656 = vadd.f32 %v4603, %v4655
  %4657 = vmatprep.mubr.bf16.mxu0 %v797
  %4658 = vmatmul.mubr.bf16.gmra.mxu0 %v796
  %v4659 = vpop.f32.mrf.mxu0
  %v4660 = vadd.f32 %v4607, %v4659
  %v4661 = vpop.f32.mrf.mxu0
  %v4662 = vadd.f32 %v4609, %v4661
  %v4663 = vpop.f32.mrf.mxu0
  %v4664 = vadd.f32 %v4611, %v4663
  %v4665 = vpop.f32.mrf.mxu0
  %v4666 = vadd.f32 %v4613, %v4665
  %4667 = vdwg.mxu0
  %v4668 = vadd.f32 %v4173, %v4177
  %v4669 = vadd.f32 %v4668, %v4183
  %v4670 = vadd.f32 %v4669, %v4187
  %v4671 = vrot.slane %v4670, 4
  %v4672 = vadd.f32 %v4670, %v4671
  %v4673 = vrot.slane %v4672, 2
  %v4674 = vadd.f32 %v4672, %v4673
  %v4675 = vrot.slane %v4674, 1
  %v4676 = vadd.f32 %v4674, %v4675
  %v4677 = vadd.f32 %v4175, %v4179
  %v4678 = vadd.f32 %v4677, %v4185
  %v4679 = vadd.f32 %v4678, %v4189
  %v4680 = vrot.slane %v4679, 4
  %v4681 = vadd.f32 %v4679, %v4680
  %v4682 = vrot.slane %v4681, 2
  %v4683 = vadd.f32 %v4681, %v4682
  %v4684 = vrot.slane %v4683, 1
  %v4685 = vadd.f32 %v4683, %v4684
  %v4686 = vadd.f32 %v4650, %v4654
  %v4687 = vadd.f32 %v4686, %v4660
  %v4688 = vadd.f32 %v4687, %v4664
  %v4689 = vrot.slane %v4688, 4
  %v4690 = vadd.f32 %v4688, %v4689
  %v4691 = vrot.slane %v4690, 2
  %v4692 = vadd.f32 %v4690, %v4691
  %v4693 = vrot.slane %v4692, 1
  %v4694 = vadd.f32 %v4692, %v4693
  %v4695 = vadd.f32 %v4652, %v4656
  %v4696 = vadd.f32 %v4695, %v4662
  %v4697 = vadd.f32 %v4696, %v4666
  %v4698 = vrot.slane %v4697, 4
  %v4699 = vadd.f32 %v4697, %v4698
  %v4700 = vrot.slane %v4699, 2
  %v4701 = vadd.f32 %v4699, %v4700
  %v4702 = vrot.slane %v4701, 1
  %v4703 = vadd.f32 %v4701, %v4702
  %v4704 = vrcp.pop 32.0
  %v4705 = vmul.f32 %v4676, %v4704
  %v4706 = vmul.f32 %v4685, %v4704
  %v4707 = vmul.f32 %v4694, %v4704
  %v4708 = vmul.f32 %v4703, %v4704
  %v4709 = vsub.f32 %v4173, %v4705
  %v4710 = vsub.f32 %v4175, %v4706
  %v4711 = vsub.f32 %v4650, %v4707
  %v4712 = vsub.f32 %v4652, %v4708
  %v4713 = vsub.f32 %v4177, %v4705
  %v4714 = vsub.f32 %v4179, %v4706
  %v4715 = vsub.f32 %v4654, %v4707
  %v4716 = vsub.f32 %v4656, %v4708
  %v4717 = vsub.f32 %v4183, %v4705
  %v4718 = vsub.f32 %v4185, %v4706
  %v4719 = vsub.f32 %v4660, %v4707
  %v4720 = vsub.f32 %v4662, %v4708
  %v4721 = vsub.f32 %v4187, %v4705
  %v4722 = vsub.f32 %v4189, %v4706
  %v4723 = vsub.f32 %v4664, %v4707
  %v4724 = vsub.f32 %v4666, %v4708
  %v4725 = vmul.f32 %v4709, %v4709
  %v4726 = vmul.f32 %v4710, %v4710
  %v4727 = vmul.f32 %v4711, %v4711
  %v4728 = vmul.f32 %v4712, %v4712
  %v4729 = vmul.f32 %v4713, %v4713
  %v4730 = vmul.f32 %v4714, %v4714
  %v4731 = vmul.f32 %v4715, %v4715
  %v4732 = vmul.f32 %v4716, %v4716
  %v4733 = vmul.f32 %v4717, %v4717
  %v4734 = vmul.f32 %v4718, %v4718
  %v4735 = vmul.f32 %v4719, %v4719
  %v4736 = vmul.f32 %v4720, %v4720
  %v4737 = vmul.f32 %v4721, %v4721
  %v4738 = vmul.f32 %v4722, %v4722
  %v4739 = vmul.f32 %v4723, %v4723
  %v4740 = vmul.f32 %v4724, %v4724
  %v4741 = vadd.f32 %v4725, %v4729
  %v4742 = vadd.f32 %v4741, %v4733
  %v4743 = vadd.f32 %v4742, %v4737
  %v4744 = vrot.slane %v4743, 4
  %v4745 = vadd.f32 %v4743, %v4744
  %v4746 = vrot.slane %v4745, 2
  %v4747 = vadd.f32 %v4745, %v4746
  %v4748 = vrot.slane %v4747, 1
  %v4749 = vadd.f32 %v4747, %v4748
  %v4750 = vadd.f32 %v4726, %v4730
  %v4751 = vadd.f32 %v4750, %v4734
  %v4752 = vadd.f32 %v4751, %v4738
  %v4753 = vrot.slane %v4752, 4
  %v4754 = vadd.f32 %v4752, %v4753
  %v4755 = vrot.slane %v4754, 2
  %v4756 = vadd.f32 %v4754, %v4755
  %v4757 = vrot.slane %v4756, 1
  %v4758 = vadd.f32 %v4756, %v4757
  %v4759 = vadd.f32 %v4727, %v4731
  %v4760 = vadd.f32 %v4759, %v4735
  %v4761 = vadd.f32 %v4760, %v4739
  %v4762 = vrot.slane %v4761, 4
  %v4763 = vadd.f32 %v4761, %v4762
  %v4764 = vrot.slane %v4763, 2
  %v4765 = vadd.f32 %v4763, %v4764
  %v4766 = vrot.slane %v4765, 1
  %v4767 = vadd.f32 %v4765, %v4766
  %v4768 = vadd.f32 %v4728, %v4732
  %v4769 = vadd.f32 %v4768, %v4736
  %v4770 = vadd.f32 %v4769, %v4740
  %v4771 = vrot.slane %v4770, 4
  %v4772 = vadd.f32 %v4770, %v4771
  %v4773 = vrot.slane %v4772, 2
  %v4774 = vadd.f32 %v4772, %v4773
  %v4775 = vrot.slane %v4774, 1
  %v4776 = vadd.f32 %v4774, %v4775
  %v4777 = vmul.f32 %v4749, %v4704
  %v4778 = vmul.f32 %v4758, %v4704
  %v4779 = vmul.f32 %v4767, %v4704
  %v4780 = vmul.f32 %v4776, %v4704
  %v4781 = vadd.f32 %v4777, 1e-05
  %v4782 = vadd.f32 %v4778, 1e-05
  %v4783 = vadd.f32 %v4779, 1e-05
  %v4784 = vadd.f32 %v4780, 1e-05
  %v4785 = vrsqrt.pop %v4781
  %v4786 = vrsqrt.pop %v4782
  %v4787 = vrsqrt.pop %v4783
  %v4788 = vrsqrt.pop %v4784
  %v4789 = vmul.f32 %v4709, %v4785
  %v4790 = vmul.f32 %v4710, %v4786
  %v4791 = vmul.f32 %v4711, %v4787
  %v4792 = vmul.f32 %v4712, %v4788
  %v4793 = vmul.f32 %v4713, %v4785
  %v4794 = vmul.f32 %v4714, %v4786
  %v4795 = vmul.f32 %v4715, %v4787
  %v4796 = vmul.f32 %v4716, %v4788
  %v4797 = vmul.f32 %v4717, %v4785
  %v4798 = vmul.f32 %v4718, %v4786
  %v4799 = vmul.f32 %v4719, %v4787
  %v4800 = vmul.f32 %v4720, %v4788
  %v4801 = vmul.f32 %v4721, %v4785
  %v4802 = vmul.f32 %v4722, %v4786
  %v4803 = vmul.f32 %v4723, %v4787
  %v4804 = vmul.f32 %v4724, %v4788
  %v4805 = vld [vmem:[%s3] sm:$0xf]
  %v4807 = vlaneseq
  %v4808 = vshrl.u32 %v4807, 7
  %v4809 = vsub.s32 0, %v4808
  %v4810 = vrot.slane %v4805, %v4809
  %v4811 = vlaneseq
  %v4812 = vshrl.u32 %v4811, 7
  %v4813 = vsub.s32 1, %v4812
  %v4814 = vrot.slane %v4805, %v4813
  %v4815 = vlaneseq
  %v4816 = vshrl.u32 %v4815, 7
  %v4817 = vsub.s32 2, %v4816
  %v4818 = vrot.slane %v4805, %v4817
  %v4819 = vlaneseq
  %v4820 = vshrl.u32 %v4819, 7
  %v4821 = vsub.s32 3, %v4820
  %v4822 = vrot.slane %v4805, %v4821
  %v4827 = vmul.f32 %v4789, %v4810
  %v4828 = vmul.f32 %v4790, %v4814
  %v4829 = vmul.f32 %v4791, %v4818
  %v4830 = vmul.f32 %v4792, %v4822
  %v4831 = vmul.f32 %v4793, %v4810
  %v4832 = vmul.f32 %v4794, %v4814
  %v4833 = vmul.f32 %v4795, %v4818
  %v4834 = vmul.f32 %v4796, %v4822
  %v4835 = vmul.f32 %v4797, %v4810
  %v4836 = vmul.f32 %v4798, %v4814
  %v4837 = vmul.f32 %v4799, %v4818
  %v4838 = vmul.f32 %v4800, %v4822
  %v4839 = vmul.f32 %v4801, %v4810
  %v4840 = vmul.f32 %v4802, %v4814
  %v4841 = vmul.f32 %v4803, %v4818
  %v4842 = vmul.f32 %v4804, %v4822
  %v4843 = vld [vmem:[%s4] sm:$0xf]
  %v4845 = vlaneseq
  %v4846 = vshrl.u32 %v4845, 7
  %v4847 = vsub.s32 0, %v4846
  %v4848 = vrot.slane %v4843, %v4847
  %v4849 = vlaneseq
  %v4850 = vshrl.u32 %v4849, 7
  %v4851 = vsub.s32 1, %v4850
  %v4852 = vrot.slane %v4843, %v4851
  %v4853 = vlaneseq
  %v4854 = vshrl.u32 %v4853, 7
  %v4855 = vsub.s32 2, %v4854
  %v4856 = vrot.slane %v4843, %v4855
  %v4857 = vlaneseq
  %v4858 = vshrl.u32 %v4857, 7
  %v4859 = vsub.s32 3, %v4858
  %v4860 = vrot.slane %v4843, %v4859
  %v4865 = vadd.f32 %v4827, %v4848
  %v4866 = vadd.f32 %v4828, %v4852
  %v4867 = vadd.f32 %v4829, %v4856
  %v4868 = vadd.f32 %v4830, %v4860
  %v4869 = vadd.f32 %v4831, %v4848
  %v4870 = vadd.f32 %v4832, %v4852
  %v4871 = vadd.f32 %v4833, %v4856
  %v4872 = vadd.f32 %v4834, %v4860
  %v4873 = vadd.f32 %v4835, %v4848
  %v4874 = vadd.f32 %v4836, %v4852
  %v4875 = vadd.f32 %v4837, %v4856
  %v4876 = vadd.f32 %v4838, %v4860
  %v4877 = vadd.f32 %v4839, %v4848
  %v4878 = vadd.f32 %v4840, %v4852
  %v4879 = vadd.f32 %v4841, %v4856
  %v4880 = vadd.f32 %v4842, %v4860
  %vm4881 = vcmp.ge.f32.partialorder %v4865, 0.0
  %vm4882 = vcmp.ge.f32.partialorder %v4866, 0.0
  %vm4883 = vcmp.ge.f32.partialorder %v4867, 0.0
  %vm4884 = vcmp.ge.f32.partialorder %v4868, 0.0
  %vm4885 = vcmp.ge.f32.partialorder %v4869, 0.0
  %vm4886 = vcmp.ge.f32.partialorder %v4870, 0.0
  %vm4887 = vcmp.ge.f32.partialorder %v4871, 0.0
  %vm4888 = vcmp.ge.f32.partialorder %v4872, 0.0
  %vm4889 = vcmp.ge.f32.partialorder %v4873, 0.0
  %vm4890 = vcmp.ge.f32.partialorder %v4874, 0.0
  %vm4891 = vcmp.ge.f32.partialorder %v4875, 0.0
  %vm4892 = vcmp.ge.f32.partialorder %v4876, 0.0
  %vm4893 = vcmp.ge.f32.partialorder %v4877, 0.0
  %vm4894 = vcmp.ge.f32.partialorder %v4878, 0.0
  %vm4895 = vcmp.ge.f32.partialorder %v4879, 0.0
  %vm4896 = vcmp.ge.f32.partialorder %v4880, 0.0
  %v4897 = vmul.f32 %v4865, 0.01
  %v4898 = vmul.f32 %v4866, 0.01
  %v4899 = vmul.f32 %v4867, 0.01
  %v4900 = vmul.f32 %v4868, 0.01
  %v4901 = vmul.f32 %v4869, 0.01
  %v4902 = vmul.f32 %v4870, 0.01
  %v4903 = vmul.f32 %v4871, 0.01
  %v4904 = vmul.f32 %v4872, 0.01
  %v4905 = vmul.f32 %v4873, 0.01
  %v4906 = vmul.f32 %v4874, 0.01
  %v4907 = vmul.f32 %v4875, 0.01
  %v4908 = vmul.f32 %v4876, 0.01
  %v4909 = vmul.f32 %v4877, 0.01
  %v4910 = vmul.f32 %v4878, 0.01
  %v4911 = vmul.f32 %v4879, 0.01
  %v4912 = vmul.f32 %v4880, 0.01
  %v4913 = vsel %vm4881, %v4865, %v4897
  %v4914 = vsel %vm4882, %v4866, %v4898
  %v4915 = vsel %vm4883, %v4867, %v4899
  %v4916 = vsel %vm4884, %v4868, %v4900
  %v4917 = vsel %vm4885, %v4869, %v4901
  %v4918 = vsel %vm4886, %v4870, %v4902
  %v4919 = vsel %vm4887, %v4871, %v4903
  %v4920 = vsel %vm4888, %v4872, %v4904
  %v4921 = vsel %vm4889, %v4873, %v4905
  %v4922 = vsel %vm4890, %v4874, %v4906
  %v4923 = vsel %vm4891, %v4875, %v4907
  %v4924 = vsel %vm4892, %v4876, %v4908
  %v4925 = vsel %vm4893, %v4877, %v4909
  %v4926 = vsel %vm4894, %v4878, %v4910
  %v4927 = vsel %vm4895, %v4879, %v4911
  %v4928 = vsel %vm4896, %v4880, %v4912
  %4929 = vst [vmem:[%s5] sm:$0xff] %v4913
  %4930 = vst [vmem:[%s5 + $0x8] sm:$0xff] %v4914
  %4931 = vst [vmem:[%s5 + $0x10] sm:$0xff] %v4915
  %4932 = vst [vmem:[%s5 + $0x18] sm:$0xff] %v4916
  %4933 = vst [vmem:[%s5 + $0x20] sm:$0xff] %v4917
  %4934 = vst [vmem:[%s5 + $0x28] sm:$0xff] %v4918
  %4935 = vst [vmem:[%s5 + $0x30] sm:$0xff] %v4919
  %4936 = vst [vmem:[%s5 + $0x38] sm:$0xff] %v4920
  %4937 = vst [vmem:[%s5 + $0x40] sm:$0xff] %v4921
  %4938 = vst [vmem:[%s5 + $0x48] sm:$0xff] %v4922
  %4939 = vst [vmem:[%s5 + $0x50] sm:$0xff] %v4923
  %4940 = vst [vmem:[%s5 + $0x58] sm:$0xff] %v4924
  %4941 = vst [vmem:[%s5 + $0x60] sm:$0xff] %v4925
  %4942 = vst [vmem:[%s5 + $0x68] sm:$0xff] %v4926
  %4943 = vst [vmem:[%s5 + $0x70] sm:$0xff] %v4927
  %4944 = vst [vmem:[%s5 + $0x78] sm:$0xff] %v4928
  // Predicated region
  $region22: #{target_encode_generator_forward.5} parent=0 // pred_check
    _
  $region23: #{target_encode_generator_forward.5} parent=0 // pred_check_branch
    %4946 = sbr.rel (0) target = $region25
  $region24: #{target_encode_generator_forward.5} parent=0 // pred_region
    _
  $region25: #{target_encode_generator_forward.5} parent=0 // pred_fallthru
    _
  // Predicated region
  $region26: #{target_encode_generator_forward.5} parent=0 // pred_check
    _
  $region27: #{target_encode_generator_forward.5} parent=0 // pred_check_branch
    %4948 = sbr.rel (0) target = $region29
  $region28: #{target_encode_generator_forward.5} parent=0 // pred_region
    _
  $region29: #{target_encode_generator_forward.5} parent=0 // pred_fallthru
    _

</llo_original>
